<compile_context>
chip_gen: v5e
topology: v5e:2x2
jax: 0.10.0
libtpu: 0.0.40
codegen_flags: <defaults>
</compile_context>

<pallas_src>
import functools

import jax
import jax.numpy as jnp
from jax.experimental import pallas as pl
from jax.experimental.pallas import tpu as pltpu


# ----------------------------- Pallas kernels ------------------------------ #

def _conv3x3_relu_kernel(x_ref, w_ref, b_ref, o_ref):
    """Fused 3x3 conv (single dot over im2col columns) + bias + ReLU.

    x_ref: (1, 9*Cin, N)  bf16   im2col columns, spatial on lanes (N % 128 == 0)
    w_ref: (Cout, 9*Cin)  bf16   tap-major weight
    b_ref: (Cout, 1)      f32
    o_ref: (1, Cout, N)   bf16   lane-dense output
    """
    acc = jnp.dot(w_ref[...], x_ref[0], preferred_element_type=jnp.float32)
    acc = jnp.maximum(acc + b_ref[...], 0.0)          # f32 epilogue (v5e-safe)
    o_ref[0] = acc.astype(o_ref.dtype)


def _conv3x3_relu_pool_kernel(x_ref, w_ref, b_ref, o_ref):
    """3x3 conv + bias + ReLU + fused 2x2/stride-2 max-pool.

    Columns are pre-permuted so pool-window position p = (h%2)*2 + (w%2) occupies
    the contiguous lane-aligned column group [p*M, (p+1)*M) with M = Ho*Wo.  The
    pool therefore reduces to an elementwise max over 4 static slices.

    x_ref: (1, 9*Cin, 4*M) bf16
    w_ref: (Cout, 9*Cin)   bf16
    b_ref: (Cout, 1)       f32
    o_ref: (1, Cout, M)    bf16
    """
    m = o_ref.shape[2]
    acc = jnp.dot(w_ref[...], x_ref[0], preferred_element_type=jnp.float32)
    acc = jnp.maximum(acc + b_ref[...], 0.0)
    pooled = jnp.maximum(jnp.maximum(acc[:, 0 * m:1 * m], acc[:, 1 * m:2 * m]),
                         jnp.maximum(acc[:, 2 * m:3 * m], acc[:, 3 * m:4 * m]))
    o_ref[0] = pooled.astype(o_ref.dtype)


def _linear_kernel(x_ref, w_ref, b_ref, o_ref):
    """x_ref: (B, F) bf16; w_ref: (F, Opad) bf16; b_ref: (1, Opad) f32 -> (B, Opad) f32."""
    acc = jnp.dot(x_ref[...], w_ref[...], preferred_element_type=jnp.float32)
    o_ref[...] = (acc + b_ref[...]).astype(o_ref.dtype)


# ------------------------------- wrappers ---------------------------------- #

def _im2col(x, *, pool_order):
    """x: (B, C, H, W) -> (B, 9*C, N) im2col for a 3x3 / pad=1 conv (XLA glue).

    Row k*C + c holds tap (ky, kx) = (k//3, k%3) of channel c.  Columns are
    row-major (h, w) when pool_order=False; when pool_order=True they are
    grouped by 2x2-pool position (p, ho, wo) so the kernel can fuse the pool.
    """
    B, C, H, W = x.shape
    xp = jnp.pad(x, ((0, 0), (0, 0), (1, 1), (1, 1)))
    taps = []
    for ky in range(3):
        for kx in range(3):
            t = xp[:, :, ky:ky + H, kx:kx + W]                      # (B, C, H, W)
            if pool_order:
                Ho, Wo = H // 2, W // 2
                t = t.reshape(B, C, Ho, 2, Wo, 2)
                t = jnp.transpose(t, (0, 1, 3, 5, 2, 4))            # (B, C, 2, 2, Ho, Wo)
                t = t.reshape(B, C, 4 * Ho * Wo)
            else:
                t = t.reshape(B, C, H * W)
            taps.append(t)
    return jnp.concatenate(taps, axis=1)                            # (B, 9C, N)


def conv3x3_relu(x, w2d, b, *, pool):
    """x: (B, Cin, H, W) bf16; w2d: (Cout, 9*Cin) bf16; b: (Cout, 1) f32.

    Returns (B, Cout, H, W) (pool=False) or (B, Cout, H//2, W//2) (pool=True), bf16.
    """
    B, Cin, H, W = x.shape
    Cout = w2d.shape[0]
    if pool:
        assert H % 2 == 0 and W % 2 == 0, "MaxPool2d(2,2) fusion needs even H and W"
        Ho, Wo = H // 2, W // 2
        kernel = _conv3x3_relu_pool_kernel
    else:
        Ho, Wo = H, W
        kernel = _conv3x3_relu_kernel
    n_out = Ho * Wo

    xcol = _im2col(x, pool_order=pool)                              # (B, 9*Cin, N_in)
    n_in = xcol.shape[2]

    out = pl.pallas_call(
        kernel,
        out_shape=jax.ShapeDtypeStruct((B, Cout, n_out), jnp.bfloat16),
        grid=(B,),
        in_specs=[
            pl.BlockSpec((1, 9 * Cin, n_in), lambda i: (i, 0, 0)),
            pl.BlockSpec((Cout, 9 * Cin), lambda i: (0, 0)),
            pl.BlockSpec((Cout, 1), lambda i: (0, 0)),
        ],
        out_specs=pl.BlockSpec((1, Cout, n_out), lambda i: (i, 0, 0)),
        compiler_params=pltpu.CompilerParams(
            dimension_semantics=("parallel",)),
    )(xcol, w2d, b)
    return out.reshape(B, Cout, Ho, Wo)


def linear(x, w_pad, b_pad):
    """x: (B, F) bf16; w_pad: (F, Opad) bf16; b_pad: (1, Opad) f32 -> (B, Opad) f32."""
    B, F = x.shape
    Opad = w_pad.shape[1]
    return pl.pallas_call(
        _linear_kernel,
        out_shape=jax.ShapeDtypeStruct((B, Opad), jnp.float32),
        grid=(1,),
        in_specs=[
            pl.BlockSpec((B, F), lambda i: (0, 0)),
            pl.BlockSpec((F, Opad), lambda i: (0, 0)),
            pl.BlockSpec((1, Opad), lambda i: (0, 0)),
        ],
        out_specs=pl.BlockSpec((B, Opad), lambda i: (0, 0)),
    )(x, w_pad, b_pad)


def tiny_vgg_forward(x_nchw, kp, n_out):
    """Exact TinyVGG.forward semantics (bf16 matmul operands, f32 accumulation)."""
    x = x_nchw.astype(jnp.bfloat16)
    # conv_block_1: Conv+ReLU, Conv+ReLU+MaxPool(2)
    x = conv3x3_relu(x, kp["w1"], kp["b1"], pool=False)
    x = conv3x3_relu(x, kp["w2"], kp["b2"], pool=True)
    # conv_block_2
    x = conv3x3_relu(x, kp["w3"], kp["b3"], pool=False)
    x = conv3x3_relu(x, kp["w4"], kp["b4"], pool=True)
    # classifier: activations are channels-major (B, C, Ho, Wo), so this reshape
    # IS torch's NCHW nn.Flatten order -- no transpose needed on the hot path.
    B = x.shape[0]
    flat = x.reshape(B, -1)
    out = linear(flat, kp["wl"], kp["bl"])
    return out[:, :n_out]


# --------------------------- parameters (synthetic) -------------------------- #

def init_params(key, input_shape, hidden_units, output_shape):
    """Deterministic synthetic parameters in PyTorch layouts:
    conv weight (Cout, Cin, 3, 3), conv bias (Cout,), linear weight (O, F), bias (O,)."""
    ks = jax.random.split(key, 10)

    def conv_w(k, cin, cout):
        return 0.05 * jax.random.normal(k, (cout, cin, 3, 3), jnp.float32)

    def vec(k, n):
        return 0.01 * jax.random.normal(k, (n,), jnp.float32)

    feat = hidden_units * 16 * 16
    return dict(
        w1=conv_w(ks[0], input_shape, hidden_units), b1=vec(ks[1], hidden_units),
        w2=conv_w(ks[2], hidden_units, hidden_units), b2=vec(ks[3], hidden_units),
        w3=conv_w(ks[4], hidden_units, hidden_units), b3=vec(ks[5], hidden_units),
        w4=conv_w(ks[6], hidden_units, hidden_units), b4=vec(ks[7], hidden_units),
        wl=0.02 * jax.random.normal(ks[8], (output_shape, feat), jnp.float32),
        bl=vec(ks[9], output_shape),
    )


def prepare_params(p, lane_pad=128):
    """One-time conversion from PyTorch layouts to kernel layouts:
    tap-major bf16 conv weights (Cout, 9*Cin), f32 (Cout, 1) biases,
    lane-padded bf16 linear weight (F, Opad) and f32 bias (1, Opad)."""
    def conv_w(w):  # (Cout, Cin, 3, 3) -> (Cout, 9*Cin), rows ordered (ky, kx, ci)
        co, ci = w.shape[0], w.shape[1]
        return jnp.transpose(w, (0, 2, 3, 1)).reshape(co, 9 * ci).astype(jnp.bfloat16)

    def conv_b(b):
        return b.astype(jnp.float32).reshape(-1, 1)

    o, f = p["wl"].shape
    opad = max(lane_pad, ((o + lane_pad - 1) // lane_pad) * lane_pad)
    wl = jnp.zeros((f, opad), jnp.bfloat16).at[:, :o].set(p["wl"].T.astype(jnp.bfloat16))
    bl = jnp.zeros((1, opad), jnp.float32).at[:, :o].set(p["bl"].astype(jnp.float32))
    return dict(
        w1=conv_w(p["w1"]), b1=conv_b(p["b1"]),
        w2=conv_w(p["w2"]), b2=conv_b(p["b2"]),
        w3=conv_w(p["w3"]), b3=conv_b(p["b3"]),
        w4=conv_w(p["w4"]), b4=conv_b(p["b4"]),
        wl=wl, bl=bl,
    )


# ---------------------------------- main ------------------------------------ #

if __name__ == "__main__":
    key = jax.random.PRNGKey(0)
    kx, kp = jax.random.split(key)

    # classifier expects hidden_units*16*16 features => input spatial must be 64x64
    input_shape, hidden_units, output_shape = 3, 8, 3
    x = jax.random.normal(kx, (2, input_shape, 64, 64), jnp.float32)   # NCHW, like torch

    params = init_params(kp, input_shape, hidden_units, output_shape)
    kparams = prepare_params(params)

    fwd = jax.jit(functools.partial(tiny_vgg_forward, n_out=output_shape))
    out = jax.block_until_ready(fwd(x, kparams))

    assert out.shape == (2, output_shape) and out.dtype == jnp.float32
    print("KERNEL_OK")
</pallas_src>

<mosaic_0001>
module attributes {stable_mosaic.version = 11 : i64} {
  func.func @_conv3x3_relu_kernel(%arg0: i32, %arg1: memref<1x27x4096xbf16, #tpu.memory_space<vmem>>, %arg2: memref<8x27xbf16, #tpu.memory_space<vmem>>, %arg3: memref<8x1xf32, #tpu.memory_space<vmem>>, %arg4: memref<1x8x4096xbf16, #tpu.memory_space<vmem>>) attributes {dimension_semantics = [#tpu.dimension_semantics<parallel>], iteration_bounds = array<i64: 2>, scalar_prefetch = 0 : i64, scratch_operands = 0 : i64, tpu.core_type = #tpu.core_type<tc>, window_params = [{transform_indices = @transform_0, window_bounds = array<i64: 1, 27, 4096>}, {pipeline_mode = #tpu.pipeline_mode<synchronous>, transform_indices = @transform_1, window_bounds = array<i64: 8, 27>}, {pipeline_mode = #tpu.pipeline_mode<synchronous>, transform_indices = @transform_2, window_bounds = array<i64: 8, 1>}, {transform_indices = @transform_3, window_bounds = array<i64: 1, 8, 4096>}]} {
    %c0 = arith.constant 0 : index
    %c0_0 = arith.constant 0 : index
    %0 = vector.load %arg2[%c0, %c0_0] : memref<8x27xbf16, #tpu.memory_space<vmem>>, vector<8x27xbf16>
    %c0_1 = arith.constant 0 : index
    %c0_2 = arith.constant 0 : index
    %c0_3 = arith.constant 0 : index
    %1 = vector.load %arg1[%c0_1, %c0_2, %c0_3] : memref<1x27x4096xbf16, #tpu.memory_space<vmem>>, vector<1x27x4096xbf16>
    %2 = vector.shape_cast %1 : vector<1x27x4096xbf16> to vector<27x4096xbf16>
    %cst = arith.constant dense<0.000000e+00> : vector<8x4096xf32>
    %3 = tpu.matmul %0, %2, %cst {dimension_numbers = #tpu.dot_dimension_numbers<[1], [0], [0], [1], [0, 0, 1, 1], [], []>} : vector<8x27xbf16>, vector<27x4096xbf16>, vector<8x4096xf32> -> vector<8x4096xf32>
    %c0_4 = arith.constant 0 : index
    %c0_5 = arith.constant 0 : index
    %4 = vector.load %arg3[%c0_4, %c0_5] : memref<8x1xf32, #tpu.memory_space<vmem>>, vector<8x1xf32>
    %5 = vector.broadcast %4 : vector<8x1xf32> to vector<8x4096xf32>
    %6 = arith.addf %3, %5 : vector<8x4096xf32>
    %cst_6 = arith.constant 0.000000e+00 : f32
    %7 = vector.broadcast %cst_6 : f32 to vector<8x4096xf32>
    %8 = arith.maximumf %6, %7 : vector<8x4096xf32>
    %9 = arith.truncf %8 : vector<8x4096xf32> to vector<8x4096xbf16>
    %c0_7 = arith.constant 0 : index
    %c0_8 = arith.constant 0 : index
    %c0_9 = arith.constant 0 : index
    %10 = vector.load %arg4[%c0_7, %c0_8, %c0_9] : memref<1x8x4096xbf16, #tpu.memory_space<vmem>>, vector<1x8x4096xbf16>
    %11 = vector.shape_cast %10 : vector<1x8x4096xbf16> to vector<8x4096xbf16>
    %12 = vector.shape_cast %9 : vector<8x4096xbf16> to vector<1x8x4096xbf16>
    tpu.vector_store %arg4[%c0_7, %c0_8, %c0_9], %12 {strides = array<i32>} : memref<1x8x4096xbf16, #tpu.memory_space<vmem>>, vector<1x8x4096xbf16>,
    return
  }
  func.func @transform_0(%arg0: i32) -> (i32, i32, i32) {
    %c0_i32 = arith.constant 0 : i32
    %c0_i32_0 = arith.constant 0 : i32
    %c0_i32_1 = arith.constant 0 : i32
    return %arg0, %c0_i32, %c0_i32_0 : i32, i32, i32
  }
  func.func @transform_1(%arg0: i32) -> (i32, i32) {
    %c0_i32 = arith.constant 0 : i32
    %c0_i32_0 = arith.constant 0 : i32
    %c0_i32_1 = arith.constant 0 : i32
    return %c0_i32, %c0_i32_0 : i32, i32
  }
  func.func @transform_2(%arg0: i32) -> (i32, i32) {
    %c0_i32 = arith.constant 0 : i32
    %c0_i32_0 = arith.constant 0 : i32
    %c0_i32_1 = arith.constant 0 : i32
    return %c0_i32, %c0_i32_0 : i32, i32
  }
  func.func @transform_3(%arg0: i32) -> (i32, i32, i32) {
    %c0_i32 = arith.constant 0 : i32
    %c0_i32_0 = arith.constant 0 : i32
    %c0_i32_1 = arith.constant 0 : i32
    return %arg0, %c0_i32, %c0_i32_0 : i32, i32, i32
  }
}

module attributes {stable_mosaic.version = 11 : i64} {
  func.func @_conv3x3_relu_pool_kernel(%arg0: i32, %arg1: memref<1x72x4096xbf16, #tpu.memory_space<vmem>>, %arg2: memref<8x72xbf16, #tpu.memory_space<vmem>>, %arg3: memref<8x1xf32, #tpu.memory_space<vmem>>, %arg4: memref<1x8x1024xbf16, #tpu.memory_space<vmem>>) attributes {dimension_semantics = [#tpu.dimension_semantics<parallel>], iteration_bounds = array<i64: 2>, scalar_prefetch = 0 : i64, scratch_operands = 0 : i64, tpu.core_type = #tpu.core_type<tc>, window_params = [{transform_indices = @transform_0, window_bounds = array<i64: 1, 72, 4096>}, {pipeline_mode = #tpu.pipeline_mode<synchronous>, transform_indices = @transform_1, window_bounds = array<i64: 8, 72>}, {pipeline_mode = #tpu.pipeline_mode<synchronous>, transform_indices = @transform_2, window_bounds = array<i64: 8, 1>}, {transform_indices = @transform_3, window_bounds = array<i64: 1, 8, 1024>}]} {
    %c0 = arith.constant 0 : index
    %c0_0 = arith.constant 0 : index
    %0 = vector.load %arg2[%c0, %c0_0] : memref<8x72xbf16, #tpu.memory_space<vmem>>, vector<8x72xbf16>
    %c0_1 = arith.constant 0 : index
    %c0_2 = arith.constant 0 : index
    %c0_3 = arith.constant 0 : index
    %1 = vector.load %arg1[%c0_1, %c0_2, %c0_3] : memref<1x72x4096xbf16, #tpu.memory_space<vmem>>, vector<1x72x4096xbf16>
    %2 = vector.shape_cast %1 : vector<1x72x4096xbf16> to vector<72x4096xbf16>
    %cst = arith.constant dense<0.000000e+00> : vector<8x4096xf32>
    %3 = tpu.matmul %0, %2, %cst {dimension_numbers = #tpu.dot_dimension_numbers<[1], [0], [0], [1], [0, 0, 1, 1], [], []>} : vector<8x72xbf16>, vector<72x4096xbf16>, vector<8x4096xf32> -> vector<8x4096xf32>
    %c0_4 = arith.constant 0 : index
    %c0_5 = arith.constant 0 : index
    %4 = vector.load %arg3[%c0_4, %c0_5] : memref<8x1xf32, #tpu.memory_space<vmem>>, vector<8x1xf32>
    %5 = vector.broadcast %4 : vector<8x1xf32> to vector<8x4096xf32>
    %6 = arith.addf %3, %5 : vector<8x4096xf32>
    %cst_6 = arith.constant 0.000000e+00 : f32
    %7 = vector.broadcast %cst_6 : f32 to vector<8x4096xf32>
    %8 = arith.maximumf %6, %7 : vector<8x4096xf32>
    %9 = vector.extract_strided_slice %8 {offsets = [0, 0], sizes = [8, 1024], strides = [1, 1]} : vector<8x4096xf32> to vector<8x1024xf32>
    %10 = vector.extract_strided_slice %8 {offsets = [0, 1024], sizes = [8, 1024], strides = [1, 1]} : vector<8x4096xf32> to vector<8x1024xf32>
    %11 = arith.maximumf %9, %10 : vector<8x1024xf32>
    %12 = vector.extract_strided_slice %8 {offsets = [0, 2048], sizes = [8, 1024], strides = [1, 1]} : vector<8x4096xf32> to vector<8x1024xf32>
    %13 = vector.extract_strided_slice %8 {offsets = [0, 3072], sizes = [8, 1024], strides = [1, 1]} : vector<8x4096xf32> to vector<8x1024xf32>
    %14 = arith.maximumf %12, %13 : vector<8x1024xf32>
    %15 = arith.maximumf %11, %14 : vector<8x1024xf32>
    %16 = arith.truncf %15 : vector<8x1024xf32> to vector<8x1024xbf16>
    %c0_7 = arith.constant 0 : index
    %c0_8 = arith.constant 0 : index
    %c0_9 = arith.constant 0 : index
    %17 = vector.load %arg4[%c0_7, %c0_8, %c0_9] : memref<1x8x1024xbf16, #tpu.memory_space<vmem>>, vector<1x8x1024xbf16>
    %18 = vector.shape_cast %17 : vector<1x8x1024xbf16> to vector<8x1024xbf16>
    %19 = vector.shape_cast %16 : vector<8x1024xbf16> to vector<1x8x1024xbf16>
    tpu.vector_store %arg4[%c0_7, %c0_8, %c0_9], %19 {strides = array<i32>} : memref<1x8x1024xbf16, #tpu.memory_space<vmem>>, vector<1x8x1024xbf16>,
    return
  }
  func.func @transform_0(%arg0: i32) -> (i32, i32, i32) {
    %c0_i32 = arith.constant 0 : i32
    %c0_i32_0 = arith.constant 0 : i32
    %c0_i32_1 = arith.constant 0 : i32
    return %arg0, %c0_i32, %c0_i32_0 : i32, i32, i32
  }
  func.func @transform_1(%arg0: i32) -> (i32, i32) {
    %c0_i32 = arith.constant 0 : i32
    %c0_i32_0 = arith.constant 0 : i32
    %c0_i32_1 = arith.constant 0 : i32
    return %c0_i32, %c0_i32_0 : i32, i32
  }
  func.func @transform_2(%arg0: i32) -> (i32, i32) {
    %c0_i32 = arith.constant 0 : i32
    %c0_i32_0 = arith.constant 0 : i32
    %c0_i32_1 = arith.constant 0 : i32
    return %c0_i32, %c0_i32_0 : i32, i32
  }
  func.func @transform_3(%arg0: i32) -> (i32, i32, i32) {
    %c0_i32 = arith.constant 0 : i32
    %c0_i32_0 = arith.constant 0 : i32
    %c0_i32_1 = arith.constant 0 : i32
    return %arg0, %c0_i32, %c0_i32_0 : i32, i32, i32
  }
}

module attributes {stable_mosaic.version = 11 : i64} {
  func.func @_conv3x3_relu_kernel(%arg0: i32, %arg1: memref<1x72x1024xbf16, #tpu.memory_space<vmem>>, %arg2: memref<8x72xbf16, #tpu.memory_space<vmem>>, %arg3: memref<8x1xf32, #tpu.memory_space<vmem>>, %arg4: memref<1x8x1024xbf16, #tpu.memory_space<vmem>>) attributes {dimension_semantics = [#tpu.dimension_semantics<parallel>], iteration_bounds = array<i64: 2>, scalar_prefetch = 0 : i64, scratch_operands = 0 : i64, tpu.core_type = #tpu.core_type<tc>, window_params = [{transform_indices = @transform_0, window_bounds = array<i64: 1, 72, 1024>}, {pipeline_mode = #tpu.pipeline_mode<synchronous>, transform_indices = @transform_1, window_bounds = array<i64: 8, 72>}, {pipeline_mode = #tpu.pipeline_mode<synchronous>, transform_indices = @transform_2, window_bounds = array<i64: 8, 1>}, {transform_indices = @transform_3, window_bounds = array<i64: 1, 8, 1024>}]} {
    %c0 = arith.constant 0 : index
    %c0_0 = arith.constant 0 : index
    %0 = vector.load %arg2[%c0, %c0_0] : memref<8x72xbf16, #tpu.memory_space<vmem>>, vector<8x72xbf16>
    %c0_1 = arith.constant 0 : index
    %c0_2 = arith.constant 0 : index
    %c0_3 = arith.constant 0 : index
    %1 = vector.load %arg1[%c0_1, %c0_2, %c0_3] : memref<1x72x1024xbf16, #tpu.memory_space<vmem>>, vector<1x72x1024xbf16>
    %2 = vector.shape_cast %1 : vector<1x72x1024xbf16> to vector<72x1024xbf16>
    %cst = arith.constant dense<0.000000e+00> : vector<8x1024xf32>
    %3 = tpu.matmul %0, %2, %cst {dimension_numbers = #tpu.dot_dimension_numbers<[1], [0], [0], [1], [0, 0, 1, 1], [], []>} : vector<8x72xbf16>, vector<72x1024xbf16>, vector<8x1024xf32> -> vector<8x1024xf32>
    %c0_4 = arith.constant 0 : index
    %c0_5 = arith.constant 0 : index
    %4 = vector.load %arg3[%c0_4, %c0_5] : memref<8x1xf32, #tpu.memory_space<vmem>>, vector<8x1xf32>
    %5 = vector.broadcast %4 : vector<8x1xf32> to vector<8x1024xf32>
    %6 = arith.addf %3, %5 : vector<8x1024xf32>
    %cst_6 = arith.constant 0.000000e+00 : f32
    %7 = vector.broadcast %cst_6 : f32 to vector<8x1024xf32>
    %8 = arith.maximumf %6, %7 : vector<8x1024xf32>
    %9 = arith.truncf %8 : vector<8x1024xf32> to vector<8x1024xbf16>
    %c0_7 = arith.constant 0 : index
    %c0_8 = arith.constant 0 : index
    %c0_9 = arith.constant 0 : index
    %10 = vector.load %arg4[%c0_7, %c0_8, %c0_9] : memref<1x8x1024xbf16, #tpu.memory_space<vmem>>, vector<1x8x1024xbf16>
    %11 = vector.shape_cast %10 : vector<1x8x1024xbf16> to vector<8x1024xbf16>
    %12 = vector.shape_cast %9 : vector<8x1024xbf16> to vector<1x8x1024xbf16>
    tpu.vector_store %arg4[%c0_7, %c0_8, %c0_9], %12 {strides = array<i32>} : memref<1x8x1024xbf16, #tpu.memory_space<vmem>>, vector<1x8x1024xbf16>,
    return
  }
  func.func @transform_0(%arg0: i32) -> (i32, i32, i32) {
    %c0_i32 = arith.constant 0 : i32
    %c0_i32_0 = arith.constant 0 : i32
    %c0_i32_1 = arith.constant 0 : i32
    return %arg0, %c0_i32, %c0_i32_0 : i32, i32, i32
  }
  func.func @transform_1(%arg0: i32) -> (i32, i32) {
    %c0_i32 = arith.constant 0 : i32
    %c0_i32_0 = arith.constant 0 : i32
    %c0_i32_1 = arith.constant 0 : i32
    return %c0_i32, %c0_i32_0 : i32, i32
  }
  func.func @transform_2(%arg0: i32) -> (i32, i32) {
    %c0_i32 = arith.constant 0 : i32
    %c0_i32_0 = arith.constant 0 : i32
    %c0_i32_1 = arith.constant 0 : i32
    return %c0_i32, %c0_i32_0 : i32, i32
  }
  func.func @transform_3(%arg0: i32) -> (i32, i32, i32) {
    %c0_i32 = arith.constant 0 : i32
    %c0_i32_0 = arith.constant 0 : i32
    %c0_i32_1 = arith.constant 0 : i32
    return %arg0, %c0_i32, %c0_i32_0 : i32, i32, i32
  }
}

module attributes {stable_mosaic.version = 11 : i64} {
  func.func @_conv3x3_relu_pool_kernel(%arg0: i32, %arg1: memref<1x72x1024xbf16, #tpu.memory_space<vmem>>, %arg2: memref<8x72xbf16, #tpu.memory_space<vmem>>, %arg3: memref<8x1xf32, #tpu.memory_space<vmem>>, %arg4: memref<1x8x256xbf16, #tpu.memory_space<vmem>>) attributes {dimension_semantics = [#tpu.dimension_semantics<parallel>], iteration_bounds = array<i64: 2>, scalar_prefetch = 0 : i64, scratch_operands = 0 : i64, tpu.core_type = #tpu.core_type<tc>, window_params = [{transform_indices = @transform_0, window_bounds = array<i64: 1, 72, 1024>}, {pipeline_mode = #tpu.pipeline_mode<synchronous>, transform_indices = @transform_1, window_bounds = array<i64: 8, 72>}, {pipeline_mode = #tpu.pipeline_mode<synchronous>, transform_indices = @transform_2, window_bounds = array<i64: 8, 1>}, {transform_indices = @transform_3, window_bounds = array<i64: 1, 8, 256>}]} {
    %c0 = arith.constant 0 : index
    %c0_0 = arith.constant 0 : index
    %0 = vector.load %arg2[%c0, %c0_0] : memref<8x72xbf16, #tpu.memory_space<vmem>>, vector<8x72xbf16>
    %c0_1 = arith.constant 0 : index
    %c0_2 = arith.constant 0 : index
    %c0_3 = arith.constant 0 : index
    %1 = vector.load %arg1[%c0_1, %c0_2, %c0_3] : memref<1x72x1024xbf16, #tpu.memory_space<vmem>>, vector<1x72x1024xbf16>
    %2 = vector.shape_cast %1 : vector<1x72x1024xbf16> to vector<72x1024xbf16>
    %cst = arith.constant dense<0.000000e+00> : vector<8x1024xf32>
    %3 = tpu.matmul %0, %2, %cst {dimension_numbers = #tpu.dot_dimension_numbers<[1], [0], [0], [1], [0, 0, 1, 1], [], []>} : vector<8x72xbf16>, vector<72x1024xbf16>, vector<8x1024xf32> -> vector<8x1024xf32>
    %c0_4 = arith.constant 0 : index
    %c0_5 = arith.constant 0 : index
    %4 = vector.load %arg3[%c0_4, %c0_5] : memref<8x1xf32, #tpu.memory_space<vmem>>, vector<8x1xf32>
    %5 = vector.broadcast %4 : vector<8x1xf32> to vector<8x1024xf32>
    %6 = arith.addf %3, %5 : vector<8x1024xf32>
    %cst_6 = arith.constant 0.000000e+00 : f32
    %7 = vector.broadcast %cst_6 : f32 to vector<8x1024xf32>
    %8 = arith.maximumf %6, %7 : vector<8x1024xf32>
    %9 = vector.extract_strided_slice %8 {offsets = [0, 0], sizes = [8, 256], strides = [1, 1]} : vector<8x1024xf32> to vector<8x256xf32>
    %10 = vector.extract_strided_slice %8 {offsets = [0, 256], sizes = [8, 256], strides = [1, 1]} : vector<8x1024xf32> to vector<8x256xf32>
    %11 = arith.maximumf %9, %10 : vector<8x256xf32>
    %12 = vector.extract_strided_slice %8 {offsets = [0, 512], sizes = [8, 256], strides = [1, 1]} : vector<8x1024xf32> to vector<8x256xf32>
    %13 = vector.extract_strided_slice %8 {offsets = [0, 768], sizes = [8, 256], strides = [1, 1]} : vector<8x1024xf32> to vector<8x256xf32>
    %14 = arith.maximumf %12, %13 : vector<8x256xf32>
    %15 = arith.maximumf %11, %14 : vector<8x256xf32>
    %16 = arith.truncf %15 : vector<8x256xf32> to vector<8x256xbf16>
    %c0_7 = arith.constant 0 : index
    %c0_8 = arith.constant 0 : index
    %c0_9 = arith.constant 0 : index
    %17 = vector.load %arg4[%c0_7, %c0_8, %c0_9] : memref<1x8x256xbf16, #tpu.memory_space<vmem>>, vector<1x8x256xbf16>
    %18 = vector.shape_cast %17 : vector<1x8x256xbf16> to vector<8x256xbf16>
    %19 = vector.shape_cast %16 : vector<8x256xbf16> to vector<1x8x256xbf16>
    tpu.vector_store %arg4[%c0_7, %c0_8, %c0_9], %19 {strides = array<i32>} : memref<1x8x256xbf16, #tpu.memory_space<vmem>>, vector<1x8x256xbf16>,
    return
  }
  func.func @transform_0(%arg0: i32) -> (i32, i32, i32) {
    %c0_i32 = arith.constant 0 : i32
    %c0_i32_0 = arith.constant 0 : i32
    %c0_i32_1 = arith.constant 0 : i32
    return %arg0, %c0_i32, %c0_i32_0 : i32, i32, i32
  }
  func.func @transform_1(%arg0: i32) -> (i32, i32) {
    %c0_i32 = arith.constant 0 : i32
    %c0_i32_0 = arith.constant 0 : i32
    %c0_i32_1 = arith.constant 0 : i32
    return %c0_i32, %c0_i32_0 : i32, i32
  }
  func.func @transform_2(%arg0: i32) -> (i32, i32) {
    %c0_i32 = arith.constant 0 : i32
    %c0_i32_0 = arith.constant 0 : i32
    %c0_i32_1 = arith.constant 0 : i32
    return %c0_i32, %c0_i32_0 : i32, i32
  }
  func.func @transform_3(%arg0: i32) -> (i32, i32, i32) {
    %c0_i32 = arith.constant 0 : i32
    %c0_i32_0 = arith.constant 0 : i32
    %c0_i32_1 = arith.constant 0 : i32
    return %arg0, %c0_i32, %c0_i32_0 : i32, i32, i32
  }
}

module attributes {stable_mosaic.version = 11 : i64} {
  func.func @_linear_kernel(%arg0: i32, %arg1: memref<2x2048xbf16, #tpu.memory_space<vmem>>, %arg2: memref<2048x128xbf16, #tpu.memory_space<vmem>>, %arg3: memref<1x128xf32, #tpu.memory_space<vmem>>, %arg4: memref<2x128xf32, #tpu.memory_space<vmem>>) attributes {dimension_semantics = [#tpu.dimension_semantics<arbitrary>], iteration_bounds = array<i64: 1>, scalar_prefetch = 0 : i64, scratch_operands = 0 : i64, tpu.core_type = #tpu.core_type<tc>, window_params = [{pipeline_mode = #tpu.pipeline_mode<synchronous>, transform_indices = @transform_0, window_bounds = array<i64: 2, 2048>}, {pipeline_mode = #tpu.pipeline_mode<synchronous>, transform_indices = @transform_1, window_bounds = array<i64: 2048, 128>}, {pipeline_mode = #tpu.pipeline_mode<synchronous>, transform_indices = @transform_2, window_bounds = array<i64: 1, 128>}, {pipeline_mode = #tpu.pipeline_mode<synchronous>, transform_indices = @transform_3, window_bounds = array<i64: 2, 128>}]} {
    %c0 = arith.constant 0 : index
    %c0_0 = arith.constant 0 : index
    %0 = vector.load %arg1[%c0, %c0_0] : memref<2x2048xbf16, #tpu.memory_space<vmem>>, vector<2x2048xbf16>
    %c0_1 = arith.constant 0 : index
    %c0_2 = arith.constant 0 : index
    %1 = vector.load %arg2[%c0_1, %c0_2] : memref<2048x128xbf16, #tpu.memory_space<vmem>>, vector<2048x128xbf16>
    %cst = arith.constant dense<0.000000e+00> : vector<2x128xf32>
    %2 = tpu.matmul %0, %1, %cst {dimension_numbers = #tpu.dot_dimension_numbers<[1], [0], [0], [1], [0, 0, 1, 1], [], []>} : vector<2x2048xbf16>, vector<2048x128xbf16>, vector<2x128xf32> -> vector<2x128xf32>
    %c0_3 = arith.constant 0 : index
    %c0_4 = arith.constant 0 : index
    %3 = vector.load %arg3[%c0_3, %c0_4] : memref<1x128xf32, #tpu.memory_space<vmem>>, vector<1x128xf32>
    %4 = vector.broadcast %3 : vector<1x128xf32> to vector<2x128xf32>
    %5 = arith.addf %2, %4 : vector<2x128xf32>
    %c0_5 = arith.constant 0 : index
    %c0_6 = arith.constant 0 : index
    %6 = vector.load %arg4[%c0_5, %c0_6] : memref<2x128xf32, #tpu.memory_space<vmem>>, vector<2x128xf32>
    tpu.vector_store %arg4[%c0_5, %c0_6], %5 {strides = array<i32>} : memref<2x128xf32, #tpu.memory_space<vmem>>, vector<2x128xf32>,
    return
  }
  func.func @transform_0(%arg0: i32) -> (i32, i32) {
    %c0_i32 = arith.constant 0 : i32
    %c0_i32_0 = arith.constant 0 : i32
    %c0_i32_1 = arith.constant 0 : i32
    return %c0_i32, %c0_i32_0 : i32, i32
  }
  func.func @transform_1(%arg0: i32) -> (i32, i32) {
    %c0_i32 = arith.constant 0 : i32
    %c0_i32_0 = arith.constant 0 : i32
    %c0_i32_1 = arith.constant 0 : i32
    return %c0_i32, %c0_i32_0 : i32, i32
  }
  func.func @transform_2(%arg0: i32) -> (i32, i32) {
    %c0_i32 = arith.constant 0 : i32
    %c0_i32_0 = arith.constant 0 : i32
    %c0_i32_1 = arith.constant 0 : i32
    return %c0_i32, %c0_i32_0 : i32, i32
  }
  func.func @transform_3(%arg0: i32) -> (i32, i32) {
    %c0_i32 = arith.constant 0 : i32
    %c0_i32_0 = arith.constant 0 : i32
    %c0_i32_1 = arith.constant 0 : i32
    return %c0_i32, %c0_i32_0 : i32, i32
  }
}

</mosaic_0001>

<llo_original>
// kernel: tiny_vgg_forward.5
$region0: #{tiny_vgg_forward.5}
  #allocation0 [shape = 'u32[]', space=smem, size = 0x4, offset = 0x4, fixed_abs, tag = 'smem constant byte address 0x4 - core index']
  #allocation1 [shape = 'u32[72,128]{1,0:T(1,128)}', space=vmem, size = 0x9000, scoped, tag = 'internal scratch']
  %s0 = inlined_call_operand.vmem [shape: bf16[2,27,4096], index: 0, kind: input, shape index: {}]
  %s1 = inlined_call_operand.vmem [shape: bf16[8,27], index: 1, kind: input, shape index: {}]
  %s2 = inlined_call_operand.vmem [shape: f32[8,1], index: 2, kind: input, shape index: {}]
  %s3 = inlined_call_operand.vmem [shape: bf16[2,8,4096], index: 3, kind: output, shape index: {}]
  %s4 = sld [smem:[#allocation0]]
  $region45: #{tiny_vgg_forward.5} parent=0
    _
  %s6 = ssub.s32 1, %s4
  %s7 = scalar_select 0, %s6, %s4
  loop: start=0, step=1, limit=4
  $region2: #{tiny_vgg_forward.5} parent=0 // loop_pre_header
    _
  $region3: #{tiny_vgg_forward.5} parent=0 // loop_header
    %s9 = sphi 0, %s13
    %p10 = scmp.ge.s32.totalorder %s9, 4
    %s19 = sphi 0, %s21
    %s22 = sphi 0, %s19
    %s23 = sphi 0, %s22
    %s39 = sphi 0, %s23
    %s43 = sphi 0, %s43
    %s45 = sphi 0, %s43
    %s46 = sphi 0, %s45
    %s60 = sphi 0, %s46
    %s64 = sphi 0, %s64
    %s66 = sphi 0, %s64
    %s67 = sphi 0, %s66
    %s81 = sphi 0, %s67
    %s87 = sphi 0, %s89
    %s90 = sphi 0, %s87
    %s91 = sphi 0, %s90
    %s107 = sphi 0, %s91
  $region4: #{tiny_vgg_forward.5} parent=0 // loop_header_branch
    %12 = sbr.rel (%p10) target = $region8
  $region5: #{tiny_vgg_forward.5} parent=0 // loop_body
    %s14 = ssub.s32 %s9, 1
    %s15 = ssub.s32 %s9, 2
    %s16 = sadd.s32 %s9, 1
    %s17 = ssub.s32 %s9, %s16
    %p18 = scmp.eq.s32.totalorder %s17, 0
    %s20 = sadd.s32 %s19, 1
    %s21 = scalar_select %p18, %s19, %s20
    %p24 = pneg %p18
    %p25 = scmp.eq.s32.totalorder %s9, 1
    %p26 = por %p24, %p25
    %p27 = scmp.ne.s32.totalorder %s19, %s22
    %p28 = scmp.eq.s32.totalorder %s9, 0
    %p29 = por %p27, %p28
    %p30 = scmp.ne.s32.totalorder %s19, %s22
    %p31 = scmp.eq.s32.totalorder %s14, 1
    %p32 = por %p30, %p31
    %p33 = scmp.ne.s32.totalorder %s22, %s23
    %p34 = scmp.eq.s32.totalorder %s14, 0
    %p35 = por %p33, %p34
    %p36 = scmp.ne.s32.totalorder %s22, %s23
    %p37 = scmp.eq.s32.totalorder %s15, 1
    %p38 = por %p36, %p37
    %p40 = scmp.ne.s32.totalorder %s23, %s39
    %p41 = scmp.eq.s32.totalorder %s15, 0
    %p42 = por %p40, %p41
    %s44 = sadd.s32 %s43, 1
    %p47 = scmp.eq.s32.totalorder %s9, 1
    %p48 = scmp.ne.s32.totalorder %s43, %s45
    %p49 = scmp.eq.s32.totalorder %s9, 0
    %p50 = por %p48, %p49
    %p51 = scmp.ne.s32.totalorder %s43, %s45
    %p52 = scmp.eq.s32.totalorder %s14, 1
    %p53 = por %p51, %p52
    %p54 = scmp.ne.s32.totalorder %s45, %s46
    %p55 = scmp.eq.s32.totalorder %s14, 0
    %p56 = por %p54, %p55
    %p57 = scmp.ne.s32.totalorder %s45, %s46
    %p58 = scmp.eq.s32.totalorder %s15, 1
    %p59 = por %p57, %p58
    %p61 = scmp.ne.s32.totalorder %s46, %s60
    %p62 = scmp.eq.s32.totalorder %s15, 0
    %p63 = por %p61, %p62
    %s65 = sadd.s32 %s64, 1
    %p68 = scmp.eq.s32.totalorder %s9, 1
    %p69 = scmp.ne.s32.totalorder %s64, %s66
    %p70 = scmp.eq.s32.totalorder %s9, 0
    %p71 = por %p69, %p70
    %p72 = scmp.ne.s32.totalorder %s64, %s66
    %p73 = scmp.eq.s32.totalorder %s14, 1
    %p74 = por %p72, %p73
    %p75 = scmp.ne.s32.totalorder %s66, %s67
    %p76 = scmp.eq.s32.totalorder %s14, 0
    %p77 = por %p75, %p76
    %p78 = scmp.ne.s32.totalorder %s66, %s67
    %p79 = scmp.eq.s32.totalorder %s15, 1
    %p80 = por %p78, %p79
    %p82 = scmp.ne.s32.totalorder %s67, %s81
    %p83 = scmp.eq.s32.totalorder %s15, 0
    %p84 = por %p82, %p83
    %s85 = ssub.s32 %s9, %s16
    %p86 = scmp.eq.s32.totalorder %s85, 0
    %s88 = sadd.s32 %s87, 1
    %s89 = scalar_select %p86, %s87, %s88
    %p92 = pneg %p86
    %p93 = scmp.eq.s32.totalorder %s9, 1
    %p94 = por %p92, %p93
    %p95 = scmp.ne.s32.totalorder %s87, %s90
    %p96 = scmp.eq.s32.totalorder %s9, 0
    %p97 = por %p95, %p96
    %p98 = scmp.ne.s32.totalorder %s87, %s90
    %p99 = scmp.eq.s32.totalorder %s14, 1
    %p100 = por %p98, %p99
    %p101 = scmp.ne.s32.totalorder %s90, %s91
    %p102 = scmp.eq.s32.totalorder %s14, 0
    %p103 = por %p101, %p102
    %p104 = scmp.ne.s32.totalorder %s90, %s91
    %p105 = scmp.eq.s32.totalorder %s15, 1
    %p106 = por %p104, %p105
    %p108 = scmp.ne.s32.totalorder %s91, %s107
    %p109 = scmp.eq.s32.totalorder %s15, 0
    %p110 = por %p108, %p109
    %p111 = scmp.le.s32.totalorder 1, %s9
    %p112 = scmp.lt.s32.totalorder %s9, 3
    %p113 = pnand %p111, %p112
    %p114 = pneg %p113
    // Predicated region
    $region9: #{tiny_vgg_forward.5} parent=5 // pred_check
      _
    $region10: #{tiny_vgg_forward.5} parent=5 // pred_check_branch
      %116 = sbr.rel (%p113) target = $region12
    $region11: #{tiny_vgg_forward.5} parent=5 // pred_region
      %s117 = ssub.s32 %s9, 1
      // Predicated region
      $region13: #{tiny_vgg_forward.5} parent=11 // pred_check
        %p118 = pneg %p56
      $region14: #{tiny_vgg_forward.5} parent=11 // pred_check_branch
        %120 = sbr.rel (%p118) target = $region16
      $region15: #{tiny_vgg_forward.5} parent=11 // pred_region
        _
      $region16: #{tiny_vgg_forward.5} parent=11 // pred_fallthru
        _
      // Predicated region
      $region17: #{tiny_vgg_forward.5} parent=11 // pred_check
        %p121 = pneg %p77
      $region18: #{tiny_vgg_forward.5} parent=11 // pred_check_branch
        %123 = sbr.rel (%p121) target = $region20
      $region19: #{tiny_vgg_forward.5} parent=11 // pred_region
        _
      $region20: #{tiny_vgg_forward.5} parent=11 // pred_fallthru
        _
    $region12: #{tiny_vgg_forward.5} parent=5 // pred_fallthru
      _
    %p124 = scmp.lt.s32.totalorder %s9, 2
    // Predicated region
    $region21: #{tiny_vgg_forward.5} parent=5 // pred_check
      %p125 = pneg %p124
    $region22: #{tiny_vgg_forward.5} parent=5 // pred_check_branch
      %127 = sbr.rel (%p125) target = $region24
    $region23: #{tiny_vgg_forward.5} parent=5 // pred_region
      // Predicated region
      $region25: #{tiny_vgg_forward.5} parent=23 // pred_check
        %p128 = pneg %p29
      $region26: #{tiny_vgg_forward.5} parent=23 // pred_check_branch
        %130 = sbr.rel (%p128) target = $region28
      $region27: #{tiny_vgg_forward.5} parent=23 // pred_region
        %p131 = scmp.lt.s32.totalorder %s9, 1
        %s132 = scalar_select %p131, %s9, 1
        %s133 = smul.addr %s132, 128
        %s134 = smul.addr %s133, 4
        %s135 = scalar_lea.vmem %s0, %s134
      $region28: #{tiny_vgg_forward.5} parent=23 // pred_fallthru
        _
    $region24: #{tiny_vgg_forward.5} parent=5 // pred_fallthru
      _
    %p136 = scmp.le.s32.totalorder 1, %s9
    %p137 = scmp.lt.s32.totalorder %s9, 3
    %p138 = pnand %p136, %p137
    %p139 = pneg %p138
    // Predicated region
    $region29: #{tiny_vgg_forward.5} parent=5 // pred_check
      _
    $region30: #{tiny_vgg_forward.5} parent=5 // pred_check_branch
      %141 = sbr.rel (%p138) target = $region32
    $region31: #{tiny_vgg_forward.5} parent=5 // pred_region
      %s142 = ssub.s32 %s9, 1
      %p143 = scmp.lt.s32.totalorder %s14, 1
      %s144 = scalar_select %p143, %s14, 1
      %s145 = smul.addr %s144, 128
      %s146 = smul.addr %s145, 4
      %s147 = scalar_lea.vmem %s0, %s146
      %p148 = pneg %p35
      %p149 = pneg %p32
      %p150 = pneg %p56
      %p151 = pneg %p53
      %p152 = pneg %p77
      %p153 = pneg %p74
      %p154 = pneg %p103
      %p155 = pneg %p100
      %p156 = scmp.lt.s32.totalorder %s14, 1
      %s157 = scalar_select %p156, %s14, 1
      %s158 = smul.addr %s157, 32
      %s159 = smul.addr %s158, 4
      %s160 = scalar_lea.vmem %s3, %s159
      %p161 = scmp.lt.s32.totalorder %s14, 1
      %s162 = scalar_select %p161, %s14, 1
      %s163 = smul.addr %s162, 128
      %s164 = smul.addr %s163, 4
      %s165 = scalar_lea.vmem %s0, %s164
      %p166 = scmp.lt.s32.totalorder %s14, 1
      %s167 = scalar_select %p166, %s14, 1
      %s168 = smul.addr %s167, 32
      %s169 = smul.addr %s168, 4
      %s170 = scalar_lea.vmem %s3, %s169
      %v172 = vld [vmem:[%s1] sm:$0xf]
      %v173 = vld [vmem:[%s165] sm:$0xff]
      %v174 = vld [vmem:[%s165 + $0x8] sm:$0xff]
      %v175 = vld [vmem:[%s165 + $0x10] sm:$0xff]
      %v176 = vld [vmem:[%s165 + $0x18] sm:$0xff]
      %v177 = vld [vmem:[%s165 + $0x20] sm:$0xff]
      %v178 = vld [vmem:[%s165 + $0x28] sm:$0xff]
      %v179 = vld [vmem:[%s165 + $0x30] sm:$0xff]
      %v180 = vld [vmem:[%s165 + $0x38] sm:$0xff]
      %v181 = vld [vmem:[%s165 + $0x40] sm:$0xff]
      %v182 = vld [vmem:[%s165 + $0x48] sm:$0xff]
      %v183 = vld [vmem:[%s165 + $0x50] sm:$0xff]
      %v184 = vld [vmem:[%s165 + $0x58] sm:$0xff]
      %v185 = vld [vmem:[%s165 + $0x60] sm:$0xff]
      %v186 = vld [vmem:[%s165 + $0x68] sm:$0xff]
      %v187 = vld [vmem:[%s165 + $0x70] sm:$0xff]
      %v188 = vld [vmem:[%s165 + $0x78] sm:$0xff]
      %v189 = vld [vmem:[%s165 + $0x80] sm:$0xff]
      %v190 = vld [vmem:[%s165 + $0x88] sm:$0xff]
      %v191 = vld [vmem:[%s165 + $0x90] sm:$0xff]
      %v192 = vld [vmem:[%s165 + $0x98] sm:$0xff]
      %v193 = vld [vmem:[%s165 + $0xa0] sm:$0xff]
      %v194 = vld [vmem:[%s165 + $0xa8] sm:$0xff]
      %v195 = vld [vmem:[%s165 + $0xb0] sm:$0xff]
      %v196 = vld [vmem:[%s165 + $0xb8] sm:$0xff]
      %v197 = vld [vmem:[%s165 + $0xc0] sm:$0xff]
      %v198 = vld [vmem:[%s165 + $0xc8] sm:$0xff]
      %v199 = vld [vmem:[%s165 + $0xd0] sm:$0xff]
      %v200 = vld [vmem:[%s165 + $0xd8] sm:$0xff]
      %v201 = vld [vmem:[%s165 + $0xe0] sm:$0xff]
      %v202 = vld [vmem:[%s165 + $0xe8] sm:$0xff]
      %v203 = vld [vmem:[%s165 + $0xf0] sm:$0xff]
      %v204 = vld [vmem:[%s165 + $0xf8] sm:$0xff]
      %v205 = vld [vmem:[%s165 + $0x100] sm:$0xff]
      %v206 = vld [vmem:[%s165 + $0x108] sm:$0xff]
      %v207 = vld [vmem:[%s165 + $0x110] sm:$0xff]
      %v208 = vld [vmem:[%s165 + $0x118] sm:$0xff]
      %v209 = vld [vmem:[%s165 + $0x120] sm:$0xff]
      %v210 = vld [vmem:[%s165 + $0x128] sm:$0xff]
      %v211 = vld [vmem:[%s165 + $0x130] sm:$0xff]
      %v212 = vld [vmem:[%s165 + $0x138] sm:$0xff]
      %v213 = vld [vmem:[%s165 + $0x140] sm:$0xff]
      %v214 = vld [vmem:[%s165 + $0x148] sm:$0xff]
      %v215 = vld [vmem:[%s165 + $0x150] sm:$0xff]
      %v216 = vld [vmem:[%s165 + $0x158] sm:$0xff]
      %v217 = vld [vmem:[%s165 + $0x160] sm:$0xff]
      %v218 = vld [vmem:[%s165 + $0x168] sm:$0xff]
      %v219 = vld [vmem:[%s165 + $0x170] sm:$0xff]
      %v220 = vld [vmem:[%s165 + $0x178] sm:$0xff]
      %v221 = vld [vmem:[%s165 + $0x180] sm:$0x33]
      %v222 = vld [vmem:[%s165 + $0x188] sm:$0x33]
      %v223 = vld [vmem:[%s165 + $0x190] sm:$0x33]
      %v224 = vld [vmem:[%s165 + $0x198] sm:$0x33]
      %v225 = vld [vmem:[%s165 + $0x1a0] sm:$0x33]
      %v226 = vld [vmem:[%s165 + $0x1a8] sm:$0x33]
      %v227 = vld [vmem:[%s165 + $0x1b0] sm:$0x33]
      %v228 = vld [vmem:[%s165 + $0x1b8] sm:$0x33]
      %v229 = vld [vmem:[%s165 + $0x1c0] sm:$0x33]
      %v230 = vld [vmem:[%s165 + $0x1c8] sm:$0x33]
      %v231 = vld [vmem:[%s165 + $0x1d0] sm:$0x33]
      %v232 = vld [vmem:[%s165 + $0x1d8] sm:$0x33]
      %v233 = vld [vmem:[%s165 + $0x1e0] sm:$0x33]
      %v234 = vld [vmem:[%s165 + $0x1e8] sm:$0x33]
      %v235 = vld [vmem:[%s165 + $0x1f0] sm:$0x33]
      %v236 = vld [vmem:[%s165 + $0x1f8] sm:$0x33]
      %v237 = vld [vmem:[%s2] sm:$0xff]
      %239 = vset.pattern.permute.xlu0 0
      %240 = vperm.xlu0 %239, %v237
      %v241 = vpop.permute.xlu0 %240
      %v307 = vunpack.c.l.b16 %v173
      %v308 = vunpack.c.h.b16 %v173
      %v309 = vunpack.c.l.b16 %v174
      %v310 = vunpack.c.h.b16 %v174
      %v311 = vunpack.c.l.b16 %v175
      %v312 = vunpack.c.h.b16 %v175
      %v313 = vunpack.c.l.b16 %v176
      %v314 = vunpack.c.h.b16 %v176
      %v315 = vunpack.c.l.b16 %v177
      %v316 = vunpack.c.h.b16 %v177
      %v317 = vunpack.c.l.b16 %v178
      %v318 = vunpack.c.h.b16 %v178
      %v319 = vunpack.c.l.b16 %v179
      %v320 = vunpack.c.h.b16 %v179
      %v321 = vunpack.c.l.b16 %v180
      %v322 = vunpack.c.h.b16 %v180
      %v323 = vunpack.c.l.b16 %v181
      %v324 = vunpack.c.h.b16 %v181
      %v325 = vunpack.c.l.b16 %v182
      %v326 = vunpack.c.h.b16 %v182
      %v327 = vunpack.c.l.b16 %v183
      %v328 = vunpack.c.h.b16 %v183
      %v329 = vunpack.c.l.b16 %v184
      %v330 = vunpack.c.h.b16 %v184
      %v331 = vunpack.c.l.b16 %v185
      %v332 = vunpack.c.h.b16 %v185
      %v333 = vunpack.c.l.b16 %v186
      %v334 = vunpack.c.h.b16 %v186
      %v335 = vunpack.c.l.b16 %v187
      %v336 = vunpack.c.h.b16 %v187
      %v337 = vunpack.c.l.b16 %v188
      %v338 = vunpack.c.h.b16 %v188
      %v339 = vunpack.c.l.b16 %v189
      %v340 = vunpack.c.h.b16 %v189
      %v341 = vunpack.c.l.b16 %v190
      %v342 = vunpack.c.h.b16 %v190
      %v343 = vunpack.c.l.b16 %v191
      %v344 = vunpack.c.h.b16 %v191
      %v345 = vunpack.c.l.b16 %v192
      %v346 = vunpack.c.h.b16 %v192
      %v347 = vunpack.c.l.b16 %v193
      %v348 = vunpack.c.h.b16 %v193
      %v349 = vunpack.c.l.b16 %v194
      %v350 = vunpack.c.h.b16 %v194
      %v351 = vunpack.c.l.b16 %v195
      %v352 = vunpack.c.h.b16 %v195
      %v353 = vunpack.c.l.b16 %v196
      %v354 = vunpack.c.h.b16 %v196
      %v355 = vunpack.c.l.b16 %v197
      %v356 = vunpack.c.h.b16 %v197
      %v357 = vunpack.c.l.b16 %v198
      %v358 = vunpack.c.h.b16 %v198
      %v359 = vunpack.c.l.b16 %v199
      %v360 = vunpack.c.h.b16 %v199
      %v361 = vunpack.c.l.b16 %v200
      %v362 = vunpack.c.h.b16 %v200
      %v363 = vunpack.c.l.b16 %v201
      %v364 = vunpack.c.h.b16 %v201
      %v365 = vunpack.c.l.b16 %v202
      %v366 = vunpack.c.h.b16 %v202
      %v367 = vunpack.c.l.b16 %v203
      %v368 = vunpack.c.h.b16 %v203
      %v369 = vunpack.c.l.b16 %v204
      %v370 = vunpack.c.h.b16 %v204
      %v371 = vunpack.c.l.b16 %v205
      %v372 = vunpack.c.h.b16 %v205
      %v373 = vunpack.c.l.b16 %v206
      %v374 = vunpack.c.h.b16 %v206
      %v375 = vunpack.c.l.b16 %v207
      %v376 = vunpack.c.h.b16 %v207
      %v377 = vunpack.c.l.b16 %v208
      %v378 = vunpack.c.h.b16 %v208
      %v379 = vunpack.c.l.b16 %v209
      %v380 = vunpack.c.h.b16 %v209
      %v381 = vunpack.c.l.b16 %v210
      %v382 = vunpack.c.h.b16 %v210
      %v383 = vunpack.c.l.b16 %v211
      %v384 = vunpack.c.h.b16 %v211
      %v385 = vunpack.c.l.b16 %v212
      %v386 = vunpack.c.h.b16 %v212
      %v387 = vunpack.c.l.b16 %v213
      %v388 = vunpack.c.h.b16 %v213
      %v389 = vunpack.c.l.b16 %v214
      %v390 = vunpack.c.h.b16 %v214
      %v391 = vunpack.c.l.b16 %v215
      %v392 = vunpack.c.h.b16 %v215
      %v393 = vunpack.c.l.b16 %v216
      %v394 = vunpack.c.h.b16 %v216
      %v395 = vunpack.c.l.b16 %v217
      %v396 = vunpack.c.h.b16 %v217
      %v397 = vunpack.c.l.b16 %v218
      %v398 = vunpack.c.h.b16 %v218
      %v399 = vunpack.c.l.b16 %v219
      %v400 = vunpack.c.h.b16 %v219
      %v401 = vunpack.c.l.b16 %v220
      %v402 = vunpack.c.h.b16 %v220
      %v403 = vunpack.c.l.b16 %v221
      %v404 = vunpack.c.h.b16 %v221
      %v405 = vunpack.c.l.b16 %v222
      %v406 = vunpack.c.h.b16 %v222
      %v407 = vunpack.c.l.b16 %v223
      %v408 = vunpack.c.h.b16 %v223
      %v409 = vunpack.c.l.b16 %v224
      %v410 = vunpack.c.h.b16 %v224
      %v411 = vunpack.c.l.b16 %v225
      %v412 = vunpack.c.h.b16 %v225
      %v413 = vunpack.c.l.b16 %v226
      %v414 = vunpack.c.h.b16 %v226
      %v415 = vunpack.c.l.b16 %v227
      %v416 = vunpack.c.h.b16 %v227
      %v417 = vunpack.c.l.b16 %v228
      %v418 = vunpack.c.h.b16 %v228
      %v419 = vunpack.c.l.b16 %v229
      %v420 = vunpack.c.h.b16 %v229
      %v421 = vunpack.c.l.b16 %v230
      %v422 = vunpack.c.h.b16 %v230
      %v423 = vunpack.c.l.b16 %v231
      %v424 = vunpack.c.h.b16 %v231
      %v425 = vunpack.c.l.b16 %v232
      %v426 = vunpack.c.h.b16 %v232
      %v427 = vunpack.c.l.b16 %v233
      %v428 = vunpack.c.h.b16 %v233
      %v429 = vunpack.c.l.b16 %v234
      %v430 = vunpack.c.h.b16 %v234
      %v431 = vunpack.c.l.b16 %v235
      %v432 = vunpack.c.h.b16 %v235
      %v433 = vunpack.c.l.b16 %v236
      %v434 = vunpack.c.h.b16 %v236
      %v435 = vpack.c.b16 %v339, %v307
      %v436 = vpack.c.b16 %v340, %v308
      %v437 = vpack.c.b16 %v341, %v309
      %v438 = vpack.c.b16 %v342, %v310
      %v439 = vpack.c.b16 %v343, %v311
      %v440 = vpack.c.b16 %v344, %v312
      %v441 = vpack.c.b16 %v345, %v313
      %v442 = vpack.c.b16 %v346, %v314
      %v443 = vpack.c.b16 %v347, %v315
      %v444 = vpack.c.b16 %v348, %v316
      %v445 = vpack.c.b16 %v349, %v317
      %v446 = vpack.c.b16 %v350, %v318
      %v447 = vpack.c.b16 %v351, %v319
      %v448 = vpack.c.b16 %v352, %v320
      %v449 = vpack.c.b16 %v353, %v321
      %v450 = vpack.c.b16 %v354, %v322
      %v451 = vpack.c.b16 %v355, %v323
      %v452 = vpack.c.b16 %v356, %v324
      %v453 = vpack.c.b16 %v357, %v325
      %v454 = vpack.c.b16 %v358, %v326
      %v455 = vpack.c.b16 %v359, %v327
      %v456 = vpack.c.b16 %v360, %v328
      %v457 = vpack.c.b16 %v361, %v329
      %v458 = vpack.c.b16 %v362, %v330
      %v459 = vpack.c.b16 %v363, %v331
      %v460 = vpack.c.b16 %v364, %v332
      %v461 = vpack.c.b16 %v365, %v333
      %v462 = vpack.c.b16 %v366, %v334
      %v463 = vpack.c.b16 %v367, %v335
      %v464 = vpack.c.b16 %v368, %v336
      %v465 = vpack.c.b16 %v369, %v337
      %v466 = vpack.c.b16 %v370, %v338
      %v467 = vpack.c.b16 %v403, %v371
      %v468 = vpack.c.b16 %v404, %v372
      %v469 = vpack.c.b16 %v405, %v373
      %v470 = vpack.c.b16 %v406, %v374
      %v471 = vpack.c.b16 %v407, %v375
      %v472 = vpack.c.b16 %v408, %v376
      %v473 = vpack.c.b16 %v409, %v377
      %v474 = vpack.c.b16 %v410, %v378
      %v475 = vpack.c.b16 %v411, %v379
      %v476 = vpack.c.b16 %v412, %v380
      %v477 = vpack.c.b16 %v413, %v381
      %v478 = vpack.c.b16 %v414, %v382
      %v479 = vpack.c.b16 %v415, %v383
      %v480 = vpack.c.b16 %v416, %v384
      %v481 = vpack.c.b16 %v417, %v385
      %v482 = vpack.c.b16 %v418, %v386
      %v483 = vpack.c.b16 %v419, %v387
      %v484 = vpack.c.b16 %v420, %v388
      %v485 = vpack.c.b16 %v421, %v389
      %v486 = vpack.c.b16 %v422, %v390
      %v487 = vpack.c.b16 %v423, %v391
      %v488 = vpack.c.b16 %v424, %v392
      %v489 = vpack.c.b16 %v425, %v393
      %v490 = vpack.c.b16 %v426, %v394
      %v491 = vpack.c.b16 %v427, %v395
      %v492 = vpack.c.b16 %v428, %v396
      %v493 = vpack.c.b16 %v429, %v397
      %v494 = vpack.c.b16 %v430, %v398
      %v495 = vpack.c.b16 %v431, %v399
      %v496 = vpack.c.b16 %v432, %v400
      %v497 = vpack.c.b16 %v433, %v401
      %v498 = vpack.c.b16 %v434, %v402
      %vm531 = vcmask 220160
      %v533 = vsel %vm531, %v172, 0
      %vm535 = vcmask 1044480
      %vm536 = vcmask 1045504
      %v537 = vsel %vm535, 4294967295, 65535
      %v538 = vsel %vm536, %v537, 0
      %v540 = vand.u32 %v467, %v538
      %v543 = vand.u32 %v468, %v538
      %v546 = vand.u32 %v469, %v538
      %v549 = vand.u32 %v470, %v538
      %v552 = vand.u32 %v471, %v538
      %v555 = vand.u32 %v472, %v538
      %v558 = vand.u32 %v473, %v538
      %v561 = vand.u32 %v474, %v538
      %v564 = vand.u32 %v475, %v538
      %v567 = vand.u32 %v476, %v538
      %v570 = vand.u32 %v477, %v538
      %v573 = vand.u32 %v478, %v538
      %v576 = vand.u32 %v479, %v538
      %v579 = vand.u32 %v480, %v538
      %v582 = vand.u32 %v481, %v538
      %v585 = vand.u32 %v482, %v538
      %v588 = vand.u32 %v483, %v538
      %v591 = vand.u32 %v484, %v538
      %v594 = vand.u32 %v485, %v538
      %v597 = vand.u32 %v486, %v538
      %v600 = vand.u32 %v487, %v538
      %v603 = vand.u32 %v488, %v538
      %v606 = vand.u32 %v489, %v538
      %v609 = vand.u32 %v490, %v538
      %v612 = vand.u32 %v491, %v538
      %v615 = vand.u32 %v492, %v538
      %v618 = vand.u32 %v493, %v538
      %v621 = vand.u32 %v494, %v538
      %v624 = vand.u32 %v495, %v538
      %v627 = vand.u32 %v496, %v538
      %v630 = vand.u32 %v497, %v538
      %v633 = vand.u32 %v498, %v538
      %635 = vmatpush.bf16.msra.mxu0 0
      %636 = vmatpush.bf16.msra.mxu0 0
      %637 = vmatpush.bf16.msra.mxu0 0
      %638 = vmatpush.bf16.msra.mxu0 0
      %639 = vmatpush.bf16.msra.mxu0 0
      %640 = vmatpush.bf16.msra.mxu0 0
      %641 = vmatpush.bf16.msra.mxu0 %v540
      %642 = vmatpush.bf16.msra.mxu0 %v435
      %643 = vmatmul.bf16.gmra.mxu0 %v533
      %v644 = vpop.f32.mrf.mxu0
      %v645 = vadd.f32 %v241, %v644
      %v646 = vpop.f32.mrf.mxu0
      %647 = vdwg.mxu0
      %648 = vmatpush.bf16.msra.mxu0 0
      %649 = vmatpush.bf16.msra.mxu0 0
      %650 = vmatpush.bf16.msra.mxu0 0
      %651 = vmatpush.bf16.msra.mxu0 0
      %652 = vmatpush.bf16.msra.mxu0 0
      %653 = vmatpush.bf16.msra.mxu0 0
      %654 = vmatpush.bf16.msra.mxu0 %v543
      %655 = vmatpush.bf16.msra.mxu0 %v436
      %656 = vmatmul.bf16.gmra.mxu0 %v533
      %v657 = vpop.f32.mrf.mxu0
      %v658 = vadd.f32 %v241, %v657
      %v659 = vpop.f32.mrf.mxu0
      %660 = vdwg.mxu0
      %661 = vmatpush.bf16.msra.mxu0 0
      %662 = vmatpush.bf16.msra.mxu0 0
      %663 = vmatpush.bf16.msra.mxu0 0
      %664 = vmatpush.bf16.msra.mxu0 0
      %665 = vmatpush.bf16.msra.mxu0 0
      %666 = vmatpush.bf16.msra.mxu0 0
      %667 = vmatpush.bf16.msra.mxu0 %v546
      %668 = vmatpush.bf16.msra.mxu0 %v437
      %669 = vmatmul.bf16.gmra.mxu0 %v533
      %v670 = vpop.f32.mrf.mxu0
      %v671 = vadd.f32 %v241, %v670
      %v672 = vpop.f32.mrf.mxu0
      %673 = vdwg.mxu0
      %674 = vmatpush.bf16.msra.mxu0 0
      %675 = vmatpush.bf16.msra.mxu0 0
      %676 = vmatpush.bf16.msra.mxu0 0
      %677 = vmatpush.bf16.msra.mxu0 0
      %678 = vmatpush.bf16.msra.mxu0 0
      %679 = vmatpush.bf16.msra.mxu0 0
      %680 = vmatpush.bf16.msra.mxu0 %v549
      %681 = vmatpush.bf16.msra.mxu0 %v438
      %682 = vmatmul.bf16.gmra.mxu0 %v533
      %v683 = vpop.f32.mrf.mxu0
      %v684 = vadd.f32 %v241, %v683
      %v685 = vpop.f32.mrf.mxu0
      %686 = vdwg.mxu0
      %687 = vmatpush.bf16.msra.mxu0 0
      %688 = vmatpush.bf16.msra.mxu0 0
      %689 = vmatpush.bf16.msra.mxu0 0
      %690 = vmatpush.bf16.msra.mxu0 0
      %691 = vmatpush.bf16.msra.mxu0 0
      %692 = vmatpush.bf16.msra.mxu0 0
      %693 = vmatpush.bf16.msra.mxu0 %v552
      %694 = vmatpush.bf16.msra.mxu0 %v439
      %695 = vmatmul.bf16.gmra.mxu0 %v533
      %v696 = vpop.f32.mrf.mxu0
      %v697 = vadd.f32 %v241, %v696
      %v698 = vpop.f32.mrf.mxu0
      %699 = vdwg.mxu0
      %700 = vmatpush.bf16.msra.mxu0 0
      %701 = vmatpush.bf16.msra.mxu0 0
      %702 = vmatpush.bf16.msra.mxu0 0
      %703 = vmatpush.bf16.msra.mxu0 0
      %704 = vmatpush.bf16.msra.mxu0 0
      %705 = vmatpush.bf16.msra.mxu0 0
      %706 = vmatpush.bf16.msra.mxu0 %v555
      %707 = vmatpush.bf16.msra.mxu0 %v440
      %708 = vmatmul.bf16.gmra.mxu0 %v533
      %v709 = vpop.f32.mrf.mxu0
      %v710 = vadd.f32 %v241, %v709
      %v711 = vpop.f32.mrf.mxu0
      %712 = vdwg.mxu0
      %713 = vmatpush.bf16.msra.mxu0 0
      %714 = vmatpush.bf16.msra.mxu0 0
      %715 = vmatpush.bf16.msra.mxu0 0
      %716 = vmatpush.bf16.msra.mxu0 0
      %717 = vmatpush.bf16.msra.mxu0 0
      %718 = vmatpush.bf16.msra.mxu0 0
      %719 = vmatpush.bf16.msra.mxu0 %v558
      %720 = vmatpush.bf16.msra.mxu0 %v441
      %721 = vmatmul.bf16.gmra.mxu0 %v533
      %v722 = vpop.f32.mrf.mxu0
      %v723 = vadd.f32 %v241, %v722
      %v724 = vpop.f32.mrf.mxu0
      %725 = vdwg.mxu0
      %726 = vmatpush.bf16.msra.mxu0 0
      %727 = vmatpush.bf16.msra.mxu0 0
      %728 = vmatpush.bf16.msra.mxu0 0
      %729 = vmatpush.bf16.msra.mxu0 0
      %730 = vmatpush.bf16.msra.mxu0 0
      %731 = vmatpush.bf16.msra.mxu0 0
      %732 = vmatpush.bf16.msra.mxu0 %v561
      %733 = vmatpush.bf16.msra.mxu0 %v442
      %734 = vmatmul.bf16.gmra.mxu0 %v533
      %v735 = vpop.f32.mrf.mxu0
      %v736 = vadd.f32 %v241, %v735
      %v737 = vpop.f32.mrf.mxu0
      %738 = vdwg.mxu0
      %739 = vmatpush.bf16.msra.mxu0 0
      %740 = vmatpush.bf16.msra.mxu0 0
      %741 = vmatpush.bf16.msra.mxu0 0
      %742 = vmatpush.bf16.msra.mxu0 0
      %743 = vmatpush.bf16.msra.mxu0 0
      %744 = vmatpush.bf16.msra.mxu0 0
      %745 = vmatpush.bf16.msra.mxu0 %v564
      %746 = vmatpush.bf16.msra.mxu0 %v443
      %747 = vmatmul.bf16.gmra.mxu0 %v533
      %v748 = vpop.f32.mrf.mxu0
      %v749 = vadd.f32 %v241, %v748
      %v750 = vpop.f32.mrf.mxu0
      %751 = vdwg.mxu0
      %752 = vmatpush.bf16.msra.mxu0 0
      %753 = vmatpush.bf16.msra.mxu0 0
      %754 = vmatpush.bf16.msra.mxu0 0
      %755 = vmatpush.bf16.msra.mxu0 0
      %756 = vmatpush.bf16.msra.mxu0 0
      %757 = vmatpush.bf16.msra.mxu0 0
      %758 = vmatpush.bf16.msra.mxu0 %v567
      %759 = vmatpush.bf16.msra.mxu0 %v444
      %760 = vmatmul.bf16.gmra.mxu0 %v533
      %v761 = vpop.f32.mrf.mxu0
      %v762 = vadd.f32 %v241, %v761
      %v763 = vpop.f32.mrf.mxu0
      %764 = vdwg.mxu0
      %765 = vmatpush.bf16.msra.mxu0 0
      %766 = vmatpush.bf16.msra.mxu0 0
      %767 = vmatpush.bf16.msra.mxu0 0
      %768 = vmatpush.bf16.msra.mxu0 0
      %769 = vmatpush.bf16.msra.mxu0 0
      %770 = vmatpush.bf16.msra.mxu0 0
      %771 = vmatpush.bf16.msra.mxu0 %v570
      %772 = vmatpush.bf16.msra.mxu0 %v445
      %773 = vmatmul.bf16.gmra.mxu0 %v533
      %v774 = vpop.f32.mrf.mxu0
      %v775 = vadd.f32 %v241, %v774
      %v776 = vpop.f32.mrf.mxu0
      %777 = vdwg.mxu0
      %778 = vmatpush.bf16.msra.mxu0 0
      %779 = vmatpush.bf16.msra.mxu0 0
      %780 = vmatpush.bf16.msra.mxu0 0
      %781 = vmatpush.bf16.msra.mxu0 0
      %782 = vmatpush.bf16.msra.mxu0 0
      %783 = vmatpush.bf16.msra.mxu0 0
      %784 = vmatpush.bf16.msra.mxu0 %v573
      %785 = vmatpush.bf16.msra.mxu0 %v446
      %786 = vmatmul.bf16.gmra.mxu0 %v533
      %v787 = vpop.f32.mrf.mxu0
      %v788 = vadd.f32 %v241, %v787
      %v789 = vpop.f32.mrf.mxu0
      %790 = vdwg.mxu0
      %791 = vmatpush.bf16.msra.mxu0 0
      %792 = vmatpush.bf16.msra.mxu0 0
      %793 = vmatpush.bf16.msra.mxu0 0
      %794 = vmatpush.bf16.msra.mxu0 0
      %795 = vmatpush.bf16.msra.mxu0 0
      %796 = vmatpush.bf16.msra.mxu0 0
      %797 = vmatpush.bf16.msra.mxu0 %v576
      %798 = vmatpush.bf16.msra.mxu0 %v447
      %799 = vmatmul.bf16.gmra.mxu0 %v533
      %v800 = vpop.f32.mrf.mxu0
      %v801 = vadd.f32 %v241, %v800
      %v802 = vpop.f32.mrf.mxu0
      %803 = vdwg.mxu0
      %804 = vmatpush.bf16.msra.mxu0 0
      %805 = vmatpush.bf16.msra.mxu0 0
      %806 = vmatpush.bf16.msra.mxu0 0
      %807 = vmatpush.bf16.msra.mxu0 0
      %808 = vmatpush.bf16.msra.mxu0 0
      %809 = vmatpush.bf16.msra.mxu0 0
      %810 = vmatpush.bf16.msra.mxu0 %v579
      %811 = vmatpush.bf16.msra.mxu0 %v448
      %812 = vmatmul.bf16.gmra.mxu0 %v533
      %v813 = vpop.f32.mrf.mxu0
      %v814 = vadd.f32 %v241, %v813
      %v815 = vpop.f32.mrf.mxu0
      %816 = vdwg.mxu0
      %817 = vmatpush.bf16.msra.mxu0 0
      %818 = vmatpush.bf16.msra.mxu0 0
      %819 = vmatpush.bf16.msra.mxu0 0
      %820 = vmatpush.bf16.msra.mxu0 0
      %821 = vmatpush.bf16.msra.mxu0 0
      %822 = vmatpush.bf16.msra.mxu0 0
      %823 = vmatpush.bf16.msra.mxu0 %v582
      %824 = vmatpush.bf16.msra.mxu0 %v449
      %825 = vmatmul.bf16.gmra.mxu0 %v533
      %v826 = vpop.f32.mrf.mxu0
      %v827 = vadd.f32 %v241, %v826
      %v828 = vpop.f32.mrf.mxu0
      %829 = vdwg.mxu0
      %830 = vmatpush.bf16.msra.mxu0 0
      %831 = vmatpush.bf16.msra.mxu0 0
      %832 = vmatpush.bf16.msra.mxu0 0
      %833 = vmatpush.bf16.msra.mxu0 0
      %834 = vmatpush.bf16.msra.mxu0 0
      %835 = vmatpush.bf16.msra.mxu0 0
      %836 = vmatpush.bf16.msra.mxu0 %v585
      %837 = vmatpush.bf16.msra.mxu0 %v450
      %838 = vmatmul.bf16.gmra.mxu0 %v533
      %v839 = vpop.f32.mrf.mxu0
      %v840 = vadd.f32 %v241, %v839
      %v841 = vpop.f32.mrf.mxu0
      %842 = vdwg.mxu0
      %843 = vmatpush.bf16.msra.mxu0 0
      %844 = vmatpush.bf16.msra.mxu0 0
      %845 = vmatpush.bf16.msra.mxu0 0
      %846 = vmatpush.bf16.msra.mxu0 0
      %847 = vmatpush.bf16.msra.mxu0 0
      %848 = vmatpush.bf16.msra.mxu0 0
      %849 = vmatpush.bf16.msra.mxu0 %v588
      %850 = vmatpush.bf16.msra.mxu0 %v451
      %851 = vmatmul.bf16.gmra.mxu0 %v533
      %v852 = vpop.f32.mrf.mxu0
      %v853 = vadd.f32 %v241, %v852
      %v854 = vpop.f32.mrf.mxu0
      %855 = vdwg.mxu0
      %856 = vmatpush.bf16.msra.mxu0 0
      %857 = vmatpush.bf16.msra.mxu0 0
      %858 = vmatpush.bf16.msra.mxu0 0
      %859 = vmatpush.bf16.msra.mxu0 0
      %860 = vmatpush.bf16.msra.mxu0 0
      %861 = vmatpush.bf16.msra.mxu0 0
      %862 = vmatpush.bf16.msra.mxu0 %v591
      %863 = vmatpush.bf16.msra.mxu0 %v452
      %864 = vmatmul.bf16.gmra.mxu0 %v533
      %v865 = vpop.f32.mrf.mxu0
      %v866 = vadd.f32 %v241, %v865
      %v867 = vpop.f32.mrf.mxu0
      %868 = vdwg.mxu0
      %869 = vmatpush.bf16.msra.mxu0 0
      %870 = vmatpush.bf16.msra.mxu0 0
      %871 = vmatpush.bf16.msra.mxu0 0
      %872 = vmatpush.bf16.msra.mxu0 0
      %873 = vmatpush.bf16.msra.mxu0 0
      %874 = vmatpush.bf16.msra.mxu0 0
      %875 = vmatpush.bf16.msra.mxu0 %v594
      %876 = vmatpush.bf16.msra.mxu0 %v453
      %877 = vmatmul.bf16.gmra.mxu0 %v533
      %v878 = vpop.f32.mrf.mxu0
      %v879 = vadd.f32 %v241, %v878
      %v880 = vpop.f32.mrf.mxu0
      %881 = vdwg.mxu0
      %882 = vmatpush.bf16.msra.mxu0 0
      %883 = vmatpush.bf16.msra.mxu0 0
      %884 = vmatpush.bf16.msra.mxu0 0
      %885 = vmatpush.bf16.msra.mxu0 0
      %886 = vmatpush.bf16.msra.mxu0 0
      %887 = vmatpush.bf16.msra.mxu0 0
      %888 = vmatpush.bf16.msra.mxu0 %v597
      %889 = vmatpush.bf16.msra.mxu0 %v454
      %890 = vmatmul.bf16.gmra.mxu0 %v533
      %v891 = vpop.f32.mrf.mxu0
      %v892 = vadd.f32 %v241, %v891
      %v893 = vpop.f32.mrf.mxu0
      %894 = vdwg.mxu0
      %895 = vmatpush.bf16.msra.mxu0 0
      %896 = vmatpush.bf16.msra.mxu0 0
      %897 = vmatpush.bf16.msra.mxu0 0
      %898 = vmatpush.bf16.msra.mxu0 0
      %899 = vmatpush.bf16.msra.mxu0 0
      %900 = vmatpush.bf16.msra.mxu0 0
      %901 = vmatpush.bf16.msra.mxu0 %v600
      %902 = vmatpush.bf16.msra.mxu0 %v455
      %903 = vmatmul.bf16.gmra.mxu0 %v533
      %v904 = vpop.f32.mrf.mxu0
      %v905 = vadd.f32 %v241, %v904
      %v906 = vpop.f32.mrf.mxu0
      %907 = vdwg.mxu0
      %908 = vmatpush.bf16.msra.mxu0 0
      %909 = vmatpush.bf16.msra.mxu0 0
      %910 = vmatpush.bf16.msra.mxu0 0
      %911 = vmatpush.bf16.msra.mxu0 0
      %912 = vmatpush.bf16.msra.mxu0 0
      %913 = vmatpush.bf16.msra.mxu0 0
      %914 = vmatpush.bf16.msra.mxu0 %v603
      %915 = vmatpush.bf16.msra.mxu0 %v456
      %916 = vmatmul.bf16.gmra.mxu0 %v533
      %v917 = vpop.f32.mrf.mxu0
      %v918 = vadd.f32 %v241, %v917
      %v919 = vpop.f32.mrf.mxu0
      %920 = vdwg.mxu0
      %921 = vmatpush.bf16.msra.mxu0 0
      %922 = vmatpush.bf16.msra.mxu0 0
      %923 = vmatpush.bf16.msra.mxu0 0
      %924 = vmatpush.bf16.msra.mxu0 0
      %925 = vmatpush.bf16.msra.mxu0 0
      %926 = vmatpush.bf16.msra.mxu0 0
      %927 = vmatpush.bf16.msra.mxu0 %v606
      %928 = vmatpush.bf16.msra.mxu0 %v457
      %929 = vmatmul.bf16.gmra.mxu0 %v533
      %v930 = vpop.f32.mrf.mxu0
      %v931 = vadd.f32 %v241, %v930
      %v932 = vpop.f32.mrf.mxu0
      %933 = vdwg.mxu0
      %934 = vmatpush.bf16.msra.mxu0 0
      %935 = vmatpush.bf16.msra.mxu0 0
      %936 = vmatpush.bf16.msra.mxu0 0
      %937 = vmatpush.bf16.msra.mxu0 0
      %938 = vmatpush.bf16.msra.mxu0 0
      %939 = vmatpush.bf16.msra.mxu0 0
      %940 = vmatpush.bf16.msra.mxu0 %v609
      %941 = vmatpush.bf16.msra.mxu0 %v458
      %942 = vmatmul.bf16.gmra.mxu0 %v533
      %v943 = vpop.f32.mrf.mxu0
      %v944 = vadd.f32 %v241, %v943
      %v945 = vpop.f32.mrf.mxu0
      %946 = vdwg.mxu0
      %947 = vmatpush.bf16.msra.mxu0 0
      %948 = vmatpush.bf16.msra.mxu0 0
      %949 = vmatpush.bf16.msra.mxu0 0
      %950 = vmatpush.bf16.msra.mxu0 0
      %951 = vmatpush.bf16.msra.mxu0 0
      %952 = vmatpush.bf16.msra.mxu0 0
      %953 = vmatpush.bf16.msra.mxu0 %v612
      %954 = vmatpush.bf16.msra.mxu0 %v459
      %955 = vmatmul.bf16.gmra.mxu0 %v533
      %v956 = vpop.f32.mrf.mxu0
      %v957 = vadd.f32 %v241, %v956
      %v958 = vpop.f32.mrf.mxu0
      %959 = vdwg.mxu0
      %960 = vmatpush.bf16.msra.mxu0 0
      %961 = vmatpush.bf16.msra.mxu0 0
      %962 = vmatpush.bf16.msra.mxu0 0
      %963 = vmatpush.bf16.msra.mxu0 0
      %964 = vmatpush.bf16.msra.mxu0 0
      %965 = vmatpush.bf16.msra.mxu0 0
      %966 = vmatpush.bf16.msra.mxu0 %v615
      %967 = vmatpush.bf16.msra.mxu0 %v460
      %968 = vmatmul.bf16.gmra.mxu0 %v533
      %v969 = vpop.f32.mrf.mxu0
      %v970 = vadd.f32 %v241, %v969
      %v971 = vpop.f32.mrf.mxu0
      %972 = vdwg.mxu0
      %973 = vmatpush.bf16.msra.mxu0 0
      %974 = vmatpush.bf16.msra.mxu0 0
      %975 = vmatpush.bf16.msra.mxu0 0
      %976 = vmatpush.bf16.msra.mxu0 0
      %977 = vmatpush.bf16.msra.mxu0 0
      %978 = vmatpush.bf16.msra.mxu0 0
      %979 = vmatpush.bf16.msra.mxu0 %v618
      %980 = vmatpush.bf16.msra.mxu0 %v461
      %981 = vmatmul.bf16.gmra.mxu0 %v533
      %v982 = vpop.f32.mrf.mxu0
      %v983 = vadd.f32 %v241, %v982
      %v984 = vpop.f32.mrf.mxu0
      %985 = vdwg.mxu0
      %986 = vmatpush.bf16.msra.mxu0 0
      %987 = vmatpush.bf16.msra.mxu0 0
      %988 = vmatpush.bf16.msra.mxu0 0
      %989 = vmatpush.bf16.msra.mxu0 0
      %990 = vmatpush.bf16.msra.mxu0 0
      %991 = vmatpush.bf16.msra.mxu0 0
      %992 = vmatpush.bf16.msra.mxu0 %v621
      %993 = vmatpush.bf16.msra.mxu0 %v462
      %994 = vmatmul.bf16.gmra.mxu0 %v533
      %v995 = vpop.f32.mrf.mxu0
      %v996 = vadd.f32 %v241, %v995
      %v997 = vpop.f32.mrf.mxu0
      %998 = vdwg.mxu0
      %999 = vmatpush.bf16.msra.mxu0 0
      %1000 = vmatpush.bf16.msra.mxu0 0
      %1001 = vmatpush.bf16.msra.mxu0 0
      %1002 = vmatpush.bf16.msra.mxu0 0
      %1003 = vmatpush.bf16.msra.mxu0 0
      %1004 = vmatpush.bf16.msra.mxu0 0
      %1005 = vmatpush.bf16.msra.mxu0 %v624
      %1006 = vmatpush.bf16.msra.mxu0 %v463
      %1007 = vmatmul.bf16.gmra.mxu0 %v533
      %v1008 = vpop.f32.mrf.mxu0
      %v1009 = vadd.f32 %v241, %v1008
      %v1010 = vpop.f32.mrf.mxu0
      %1011 = vdwg.mxu0
      %1012 = vmatpush.bf16.msra.mxu0 0
      %1013 = vmatpush.bf16.msra.mxu0 0
      %1014 = vmatpush.bf16.msra.mxu0 0
      %1015 = vmatpush.bf16.msra.mxu0 0
      %1016 = vmatpush.bf16.msra.mxu0 0
      %1017 = vmatpush.bf16.msra.mxu0 0
      %1018 = vmatpush.bf16.msra.mxu0 %v627
      %1019 = vmatpush.bf16.msra.mxu0 %v464
      %1020 = vmatmul.bf16.gmra.mxu0 %v533
      %v1021 = vpop.f32.mrf.mxu0
      %v1022 = vadd.f32 %v241, %v1021
      %v1023 = vpop.f32.mrf.mxu0
      %1024 = vdwg.mxu0
      %1025 = vmatpush.bf16.msra.mxu0 0
      %1026 = vmatpush.bf16.msra.mxu0 0
      %1027 = vmatpush.bf16.msra.mxu0 0
      %1028 = vmatpush.bf16.msra.mxu0 0
      %1029 = vmatpush.bf16.msra.mxu0 0
      %1030 = vmatpush.bf16.msra.mxu0 0
      %1031 = vmatpush.bf16.msra.mxu0 %v630
      %1032 = vmatpush.bf16.msra.mxu0 %v465
      %1033 = vmatmul.bf16.gmra.mxu0 %v533
      %v1034 = vpop.f32.mrf.mxu0
      %v1035 = vadd.f32 %v241, %v1034
      %v1036 = vpop.f32.mrf.mxu0
      %1037 = vdwg.mxu0
      %1038 = vmatpush.bf16.msra.mxu0 0
      %1039 = vmatpush.bf16.msra.mxu0 0
      %1040 = vmatpush.bf16.msra.mxu0 0
      %1041 = vmatpush.bf16.msra.mxu0 0
      %1042 = vmatpush.bf16.msra.mxu0 0
      %1043 = vmatpush.bf16.msra.mxu0 0
      %1044 = vmatpush.bf16.msra.mxu0 %v633
      %1045 = vmatpush.bf16.msra.mxu0 %v466
      %1046 = vmatmul.bf16.gmra.mxu0 %v533
      %v1047 = vpop.f32.mrf.mxu0
      %v1048 = vadd.f32 %v241, %v1047
      %v1049 = vpop.f32.mrf.mxu0
      %1050 = vdwg.mxu0
      %v1051 = vmax.f32 %v645, 0.0
      %v1052 = vmax.f32 %v658, 0.0
      %v1053 = vmax.f32 %v671, 0.0
      %v1054 = vmax.f32 %v684, 0.0
      %v1055 = vmax.f32 %v697, 0.0
      %v1056 = vmax.f32 %v710, 0.0
      %v1057 = vmax.f32 %v723, 0.0
      %v1058 = vmax.f32 %v736, 0.0
      %v1059 = vmax.f32 %v749, 0.0
      %v1060 = vmax.f32 %v762, 0.0
      %v1061 = vmax.f32 %v775, 0.0
      %v1062 = vmax.f32 %v788, 0.0
      %v1063 = vmax.f32 %v801, 0.0
      %v1064 = vmax.f32 %v814, 0.0
      %v1065 = vmax.f32 %v827, 0.0
      %v1066 = vmax.f32 %v840, 0.0
      %v1067 = vmax.f32 %v853, 0.0
      %v1068 = vmax.f32 %v866, 0.0
      %v1069 = vmax.f32 %v879, 0.0
      %v1070 = vmax.f32 %v892, 0.0
      %v1071 = vmax.f32 %v905, 0.0
      %v1072 = vmax.f32 %v918, 0.0
      %v1073 = vmax.f32 %v931, 0.0
      %v1074 = vmax.f32 %v944, 0.0
      %v1075 = vmax.f32 %v957, 0.0
      %v1076 = vmax.f32 %v970, 0.0
      %v1077 = vmax.f32 %v983, 0.0
      %v1078 = vmax.f32 %v996, 0.0
      %v1079 = vmax.f32 %v1009, 0.0
      %v1080 = vmax.f32 %v1022, 0.0
      %v1081 = vmax.f32 %v1035, 0.0
      %v1082 = vmax.f32 %v1048, 0.0
      %v1083 = vpack.c.bf16 %v1052, %v1051
      %v1084 = vpack.c.bf16 %v1054, %v1053
      %v1085 = vpack.c.bf16 %v1056, %v1055
      %v1086 = vpack.c.bf16 %v1058, %v1057
      %v1087 = vpack.c.bf16 %v1060, %v1059
      %v1088 = vpack.c.bf16 %v1062, %v1061
      %v1089 = vpack.c.bf16 %v1064, %v1063
      %v1090 = vpack.c.bf16 %v1066, %v1065
      %v1091 = vpack.c.bf16 %v1068, %v1067
      %v1092 = vpack.c.bf16 %v1070, %v1069
      %v1093 = vpack.c.bf16 %v1072, %v1071
      %v1094 = vpack.c.bf16 %v1074, %v1073
      %v1095 = vpack.c.bf16 %v1076, %v1075
      %v1096 = vpack.c.bf16 %v1078, %v1077
      %v1097 = vpack.c.bf16 %v1080, %v1079
      %v1098 = vpack.c.bf16 %v1082, %v1081
      %1099 = vst [vmem:[%s170] sm:$0xff] %v1083
      %1100 = vst [vmem:[%s170 + $0x8] sm:$0xff] %v1084
      %1101 = vst [vmem:[%s170 + $0x10] sm:$0xff] %v1085
      %1102 = vst [vmem:[%s170 + $0x18] sm:$0xff] %v1086
      %1103 = vst [vmem:[%s170 + $0x20] sm:$0xff] %v1087
      %1104 = vst [vmem:[%s170 + $0x28] sm:$0xff] %v1088
      %1105 = vst [vmem:[%s170 + $0x30] sm:$0xff] %v1089
      %1106 = vst [vmem:[%s170 + $0x38] sm:$0xff] %v1090
      %1107 = vst [vmem:[%s170 + $0x40] sm:$0xff] %v1091
      %1108 = vst [vmem:[%s170 + $0x48] sm:$0xff] %v1092
      %1109 = vst [vmem:[%s170 + $0x50] sm:$0xff] %v1093
      %1110 = vst [vmem:[%s170 + $0x58] sm:$0xff] %v1094
      %1111 = vst [vmem:[%s170 + $0x60] sm:$0xff] %v1095
      %1112 = vst [vmem:[%s170 + $0x68] sm:$0xff] %v1096
      %1113 = vst [vmem:[%s170 + $0x70] sm:$0xff] %v1097
      %1114 = vst [vmem:[%s170 + $0x78] sm:$0xff] %v1098
      %p1115 = scmp.lt.s32.totalorder %s14, 1
      %s1116 = scalar_select %p1115, %s14, 1
      %s1117 = smul.addr %s1116, 32
      %s1118 = smul.addr %s1117, 4
      %s1119 = scalar_lea.vmem %s3, %s1118
      // Predicated region
      $region33: #{tiny_vgg_forward.5} parent=31 // pred_check
        %p1120 = pneg %p100
      $region34: #{tiny_vgg_forward.5} parent=31 // pred_check_branch
        %1122 = sbr.rel (%p1120) target = $region36
      $region35: #{tiny_vgg_forward.5} parent=31 // pred_region
        _
      $region36: #{tiny_vgg_forward.5} parent=31 // pred_fallthru
        _
    $region32: #{tiny_vgg_forward.5} parent=5 // pred_fallthru
      _
    %p1123 = scmp.le.s32.totalorder 2, %s9
    // Predicated region
    $region37: #{tiny_vgg_forward.5} parent=5 // pred_check
      %p1124 = pneg %p1123
    $region38: #{tiny_vgg_forward.5} parent=5 // pred_check_branch
      %1126 = sbr.rel (%p1124) target = $region40
    $region39: #{tiny_vgg_forward.5} parent=5 // pred_region
      %s1127 = ssub.s32 %s9, 2
      // Predicated region
      $region41: #{tiny_vgg_forward.5} parent=39 // pred_check
        %p1128 = pneg %p106
      $region42: #{tiny_vgg_forward.5} parent=39 // pred_check_branch
        %1130 = sbr.rel (%p1128) target = $region44
      $region43: #{tiny_vgg_forward.5} parent=39 // pred_region
        %p1131 = scmp.lt.s32.totalorder %s15, 1
        %s1132 = scalar_select %p1131, %s15, 1
        %s1133 = smul.addr %s1132, 32
        %s1134 = smul.addr %s1133, 4
        %s1135 = scalar_lea.vmem %s3, %s1134
      $region44: #{tiny_vgg_forward.5} parent=39 // pred_fallthru
        _
    $region40: #{tiny_vgg_forward.5} parent=5 // pred_fallthru
      _
  $region6: #{tiny_vgg_forward.5} parent=0 // loop_footer
    %s13 = sadd.s32 1, %s9
  $region7: #{tiny_vgg_forward.5} parent=0 // loop_footer_branch
    %8 = sbr.rel target = $region3
  $region8: #{tiny_vgg_forward.5} parent=0 // loop_exit
    _

// kernel: tiny_vgg_forward.6
$region0: #{tiny_vgg_forward.6}
  #allocation0 [shape = 'u32[]', space=smem, size = 0x4, offset = 0x4, fixed_abs, tag = 'smem constant byte address 0x4 - core index']
  #allocation1 [shape = 'u32[72,128]{1,0:T(1,128)}', space=vmem, size = 0x9000, scoped, tag = 'internal scratch']
  %s0 = inlined_call_operand.vmem [shape: bf16[2,72,4096], index: 0, kind: input, shape index: {}]
  %s1 = inlined_call_operand.vmem [shape: bf16[8,72], index: 1, kind: input, shape index: {}]
  %s2 = inlined_call_operand.vmem [shape: f32[8,1], index: 2, kind: input, shape index: {}]
  %s3 = inlined_call_operand.vmem [shape: bf16[2,8,1024], index: 3, kind: output, shape index: {}]
  %s4 = sld [smem:[#allocation0]]
  $region45: #{tiny_vgg_forward.6} parent=0
    _
  %s6 = ssub.s32 1, %s4
  %s7 = scalar_select 0, %s6, %s4
  loop: start=0, step=1, limit=4
  $region2: #{tiny_vgg_forward.6} parent=0 // loop_pre_header
    _
  $region3: #{tiny_vgg_forward.6} parent=0 // loop_header
    %s9 = sphi 0, %s13
    %p10 = scmp.ge.s32.totalorder %s9, 4
    %s19 = sphi 0, %s21
    %s22 = sphi 0, %s19
    %s23 = sphi 0, %s22
    %s39 = sphi 0, %s23
    %s43 = sphi 0, %s43
    %s45 = sphi 0, %s43
    %s46 = sphi 0, %s45
    %s60 = sphi 0, %s46
    %s64 = sphi 0, %s64
    %s66 = sphi 0, %s64
    %s67 = sphi 0, %s66
    %s81 = sphi 0, %s67
    %s87 = sphi 0, %s89
    %s90 = sphi 0, %s87
    %s91 = sphi 0, %s90
    %s107 = sphi 0, %s91
  $region4: #{tiny_vgg_forward.6} parent=0 // loop_header_branch
    %12 = sbr.rel (%p10) target = $region8
  $region5: #{tiny_vgg_forward.6} parent=0 // loop_body
    %s14 = ssub.s32 %s9, 1
    %s15 = ssub.s32 %s9, 2
    %s16 = sadd.s32 %s9, 1
    %s17 = ssub.s32 %s9, %s16
    %p18 = scmp.eq.s32.totalorder %s17, 0
    %s20 = sadd.s32 %s19, 1
    %s21 = scalar_select %p18, %s19, %s20
    %p24 = pneg %p18
    %p25 = scmp.eq.s32.totalorder %s9, 1
    %p26 = por %p24, %p25
    %p27 = scmp.ne.s32.totalorder %s19, %s22
    %p28 = scmp.eq.s32.totalorder %s9, 0
    %p29 = por %p27, %p28
    %p30 = scmp.ne.s32.totalorder %s19, %s22
    %p31 = scmp.eq.s32.totalorder %s14, 1
    %p32 = por %p30, %p31
    %p33 = scmp.ne.s32.totalorder %s22, %s23
    %p34 = scmp.eq.s32.totalorder %s14, 0
    %p35 = por %p33, %p34
    %p36 = scmp.ne.s32.totalorder %s22, %s23
    %p37 = scmp.eq.s32.totalorder %s15, 1
    %p38 = por %p36, %p37
    %p40 = scmp.ne.s32.totalorder %s23, %s39
    %p41 = scmp.eq.s32.totalorder %s15, 0
    %p42 = por %p40, %p41
    %s44 = sadd.s32 %s43, 1
    %p47 = scmp.eq.s32.totalorder %s9, 1
    %p48 = scmp.ne.s32.totalorder %s43, %s45
    %p49 = scmp.eq.s32.totalorder %s9, 0
    %p50 = por %p48, %p49
    %p51 = scmp.ne.s32.totalorder %s43, %s45
    %p52 = scmp.eq.s32.totalorder %s14, 1
    %p53 = por %p51, %p52
    %p54 = scmp.ne.s32.totalorder %s45, %s46
    %p55 = scmp.eq.s32.totalorder %s14, 0
    %p56 = por %p54, %p55
    %p57 = scmp.ne.s32.totalorder %s45, %s46
    %p58 = scmp.eq.s32.totalorder %s15, 1
    %p59 = por %p57, %p58
    %p61 = scmp.ne.s32.totalorder %s46, %s60
    %p62 = scmp.eq.s32.totalorder %s15, 0
    %p63 = por %p61, %p62
    %s65 = sadd.s32 %s64, 1
    %p68 = scmp.eq.s32.totalorder %s9, 1
    %p69 = scmp.ne.s32.totalorder %s64, %s66
    %p70 = scmp.eq.s32.totalorder %s9, 0
    %p71 = por %p69, %p70
    %p72 = scmp.ne.s32.totalorder %s64, %s66
    %p73 = scmp.eq.s32.totalorder %s14, 1
    %p74 = por %p72, %p73
    %p75 = scmp.ne.s32.totalorder %s66, %s67
    %p76 = scmp.eq.s32.totalorder %s14, 0
    %p77 = por %p75, %p76
    %p78 = scmp.ne.s32.totalorder %s66, %s67
    %p79 = scmp.eq.s32.totalorder %s15, 1
    %p80 = por %p78, %p79
    %p82 = scmp.ne.s32.totalorder %s67, %s81
    %p83 = scmp.eq.s32.totalorder %s15, 0
    %p84 = por %p82, %p83
    %s85 = ssub.s32 %s9, %s16
    %p86 = scmp.eq.s32.totalorder %s85, 0
    %s88 = sadd.s32 %s87, 1
    %s89 = scalar_select %p86, %s87, %s88
    %p92 = pneg %p86
    %p93 = scmp.eq.s32.totalorder %s9, 1
    %p94 = por %p92, %p93
    %p95 = scmp.ne.s32.totalorder %s87, %s90
    %p96 = scmp.eq.s32.totalorder %s9, 0
    %p97 = por %p95, %p96
    %p98 = scmp.ne.s32.totalorder %s87, %s90
    %p99 = scmp.eq.s32.totalorder %s14, 1
    %p100 = por %p98, %p99
    %p101 = scmp.ne.s32.totalorder %s90, %s91
    %p102 = scmp.eq.s32.totalorder %s14, 0
    %p103 = por %p101, %p102
    %p104 = scmp.ne.s32.totalorder %s90, %s91
    %p105 = scmp.eq.s32.totalorder %s15, 1
    %p106 = por %p104, %p105
    %p108 = scmp.ne.s32.totalorder %s91, %s107
    %p109 = scmp.eq.s32.totalorder %s15, 0
    %p110 = por %p108, %p109
    %p111 = scmp.le.s32.totalorder 1, %s9
    %p112 = scmp.lt.s32.totalorder %s9, 3
    %p113 = pnand %p111, %p112
    %p114 = pneg %p113
    // Predicated region
    $region9: #{tiny_vgg_forward.6} parent=5 // pred_check
      _
    $region10: #{tiny_vgg_forward.6} parent=5 // pred_check_branch
      %116 = sbr.rel (%p113) target = $region12
    $region11: #{tiny_vgg_forward.6} parent=5 // pred_region
      %s117 = ssub.s32 %s9, 1
      // Predicated region
      $region13: #{tiny_vgg_forward.6} parent=11 // pred_check
        %p118 = pneg %p56
      $region14: #{tiny_vgg_forward.6} parent=11 // pred_check_branch
        %120 = sbr.rel (%p118) target = $region16
      $region15: #{tiny_vgg_forward.6} parent=11 // pred_region
        _
      $region16: #{tiny_vgg_forward.6} parent=11 // pred_fallthru
        _
      // Predicated region
      $region17: #{tiny_vgg_forward.6} parent=11 // pred_check
        %p121 = pneg %p77
      $region18: #{tiny_vgg_forward.6} parent=11 // pred_check_branch
        %123 = sbr.rel (%p121) target = $region20
      $region19: #{tiny_vgg_forward.6} parent=11 // pred_region
        _
      $region20: #{tiny_vgg_forward.6} parent=11 // pred_fallthru
        _
    $region12: #{tiny_vgg_forward.6} parent=5 // pred_fallthru
      _
    %p124 = scmp.lt.s32.totalorder %s9, 2
    // Predicated region
    $region21: #{tiny_vgg_forward.6} parent=5 // pred_check
      %p125 = pneg %p124
    $region22: #{tiny_vgg_forward.6} parent=5 // pred_check_branch
      %127 = sbr.rel (%p125) target = $region24
    $region23: #{tiny_vgg_forward.6} parent=5 // pred_region
      // Predicated region
      $region25: #{tiny_vgg_forward.6} parent=23 // pred_check
        %p128 = pneg %p29
      $region26: #{tiny_vgg_forward.6} parent=23 // pred_check_branch
        %130 = sbr.rel (%p128) target = $region28
      $region27: #{tiny_vgg_forward.6} parent=23 // pred_region
        %p131 = scmp.lt.s32.totalorder %s9, 1
        %s132 = scalar_select %p131, %s9, 1
        %s133 = smul.addr %s132, 288
        %s134 = smul.addr %s133, 4
        %s135 = scalar_lea.vmem %s0, %s134
      $region28: #{tiny_vgg_forward.6} parent=23 // pred_fallthru
        _
    $region24: #{tiny_vgg_forward.6} parent=5 // pred_fallthru
      _
    %p136 = scmp.le.s32.totalorder 1, %s9
    %p137 = scmp.lt.s32.totalorder %s9, 3
    %p138 = pnand %p136, %p137
    %p139 = pneg %p138
    // Predicated region
    $region29: #{tiny_vgg_forward.6} parent=5 // pred_check
      _
    $region30: #{tiny_vgg_forward.6} parent=5 // pred_check_branch
      %141 = sbr.rel (%p138) target = $region32
    $region31: #{tiny_vgg_forward.6} parent=5 // pred_region
      %s142 = ssub.s32 %s9, 1
      %p143 = scmp.lt.s32.totalorder %s14, 1
      %s144 = scalar_select %p143, %s14, 1
      %s145 = smul.addr %s144, 288
      %s146 = smul.addr %s145, 4
      %s147 = scalar_lea.vmem %s0, %s146
      %p148 = pneg %p35
      %p149 = pneg %p32
      %p150 = pneg %p56
      %p151 = pneg %p53
      %p152 = pneg %p77
      %p153 = pneg %p74
      %p154 = pneg %p103
      %p155 = pneg %p100
      %p156 = scmp.lt.s32.totalorder %s14, 1
      %s157 = scalar_select %p156, %s14, 1
      %s158 = smul.addr %s157, 8
      %s159 = smul.addr %s158, 4
      %s160 = scalar_lea.vmem %s3, %s159
      %p161 = scmp.lt.s32.totalorder %s14, 1
      %s162 = scalar_select %p161, %s14, 1
      %s163 = smul.addr %s162, 288
      %s164 = smul.addr %s163, 4
      %s165 = scalar_lea.vmem %s0, %s164
      %p166 = scmp.lt.s32.totalorder %s14, 1
      %s167 = scalar_select %p166, %s14, 1
      %s168 = smul.addr %s167, 8
      %s169 = smul.addr %s168, 4
      %s170 = scalar_lea.vmem %s3, %s169
      %v172 = vld [vmem:[%s1] sm:$0xf]
      %v173 = vld [vmem:[%s165] sm:$0xff]
      %v174 = vld [vmem:[%s165 + $0x8] sm:$0xff]
      %v175 = vld [vmem:[%s165 + $0x10] sm:$0xff]
      %v176 = vld [vmem:[%s165 + $0x18] sm:$0xff]
      %v177 = vld [vmem:[%s165 + $0x20] sm:$0xff]
      %v178 = vld [vmem:[%s165 + $0x28] sm:$0xff]
      %v179 = vld [vmem:[%s165 + $0x30] sm:$0xff]
      %v180 = vld [vmem:[%s165 + $0x38] sm:$0xff]
      %v181 = vld [vmem:[%s165 + $0x40] sm:$0xff]
      %v182 = vld [vmem:[%s165 + $0x48] sm:$0xff]
      %v183 = vld [vmem:[%s165 + $0x50] sm:$0xff]
      %v184 = vld [vmem:[%s165 + $0x58] sm:$0xff]
      %v185 = vld [vmem:[%s165 + $0x60] sm:$0xff]
      %v186 = vld [vmem:[%s165 + $0x68] sm:$0xff]
      %v187 = vld [vmem:[%s165 + $0x70] sm:$0xff]
      %v188 = vld [vmem:[%s165 + $0x78] sm:$0xff]
      %v189 = vld [vmem:[%s165 + $0x80] sm:$0xff]
      %v190 = vld [vmem:[%s165 + $0x88] sm:$0xff]
      %v191 = vld [vmem:[%s165 + $0x90] sm:$0xff]
      %v192 = vld [vmem:[%s165 + $0x98] sm:$0xff]
      %v193 = vld [vmem:[%s165 + $0xa0] sm:$0xff]
      %v194 = vld [vmem:[%s165 + $0xa8] sm:$0xff]
      %v195 = vld [vmem:[%s165 + $0xb0] sm:$0xff]
      %v196 = vld [vmem:[%s165 + $0xb8] sm:$0xff]
      %v197 = vld [vmem:[%s165 + $0xc0] sm:$0xff]
      %v198 = vld [vmem:[%s165 + $0xc8] sm:$0xff]
      %v199 = vld [vmem:[%s165 + $0xd0] sm:$0xff]
      %v200 = vld [vmem:[%s165 + $0xd8] sm:$0xff]
      %v201 = vld [vmem:[%s165 + $0xe0] sm:$0xff]
      %v202 = vld [vmem:[%s165 + $0xe8] sm:$0xff]
      %v203 = vld [vmem:[%s165 + $0xf0] sm:$0xff]
      %v204 = vld [vmem:[%s165 + $0xf8] sm:$0xff]
      %v205 = vld [vmem:[%s165 + $0x100] sm:$0xff]
      %v206 = vld [vmem:[%s165 + $0x108] sm:$0xff]
      %v207 = vld [vmem:[%s165 + $0x110] sm:$0xff]
      %v208 = vld [vmem:[%s165 + $0x118] sm:$0xff]
      %v209 = vld [vmem:[%s165 + $0x120] sm:$0xff]
      %v210 = vld [vmem:[%s165 + $0x128] sm:$0xff]
      %v211 = vld [vmem:[%s165 + $0x130] sm:$0xff]
      %v212 = vld [vmem:[%s165 + $0x138] sm:$0xff]
      %v213 = vld [vmem:[%s165 + $0x140] sm:$0xff]
      %v214 = vld [vmem:[%s165 + $0x148] sm:$0xff]
      %v215 = vld [vmem:[%s165 + $0x150] sm:$0xff]
      %v216 = vld [vmem:[%s165 + $0x158] sm:$0xff]
      %v217 = vld [vmem:[%s165 + $0x160] sm:$0xff]
      %v218 = vld [vmem:[%s165 + $0x168] sm:$0xff]
      %v219 = vld [vmem:[%s165 + $0x170] sm:$0xff]
      %v220 = vld [vmem:[%s165 + $0x178] sm:$0xff]
      %v221 = vld [vmem:[%s165 + $0x180] sm:$0xff]
      %v222 = vld [vmem:[%s165 + $0x188] sm:$0xff]
      %v223 = vld [vmem:[%s165 + $0x190] sm:$0xff]
      %v224 = vld [vmem:[%s165 + $0x198] sm:$0xff]
      %v225 = vld [vmem:[%s165 + $0x1a0] sm:$0xff]
      %v226 = vld [vmem:[%s165 + $0x1a8] sm:$0xff]
      %v227 = vld [vmem:[%s165 + $0x1b0] sm:$0xff]
      %v228 = vld [vmem:[%s165 + $0x1b8] sm:$0xff]
      %v229 = vld [vmem:[%s165 + $0x1c0] sm:$0xff]
      %v230 = vld [vmem:[%s165 + $0x1c8] sm:$0xff]
      %v231 = vld [vmem:[%s165 + $0x1d0] sm:$0xff]
      %v232 = vld [vmem:[%s165 + $0x1d8] sm:$0xff]
      %v233 = vld [vmem:[%s165 + $0x1e0] sm:$0xff]
      %v234 = vld [vmem:[%s165 + $0x1e8] sm:$0xff]
      %v235 = vld [vmem:[%s165 + $0x1f0] sm:$0xff]
      %v236 = vld [vmem:[%s165 + $0x1f8] sm:$0xff]
      %v237 = vld [vmem:[%s165 + $0x200] sm:$0xff]
      %v238 = vld [vmem:[%s165 + $0x208] sm:$0xff]
      %v239 = vld [vmem:[%s165 + $0x210] sm:$0xff]
      %v240 = vld [vmem:[%s165 + $0x218] sm:$0xff]
      %v241 = vld [vmem:[%s165 + $0x220] sm:$0xff]
      %v242 = vld [vmem:[%s165 + $0x228] sm:$0xff]
      %v243 = vld [vmem:[%s165 + $0x230] sm:$0xff]
      %v244 = vld [vmem:[%s165 + $0x238] sm:$0xff]
      %v245 = vld [vmem:[%s165 + $0x240] sm:$0xff]
      %v246 = vld [vmem:[%s165 + $0x248] sm:$0xff]
      %v247 = vld [vmem:[%s165 + $0x250] sm:$0xff]
      %v248 = vld [vmem:[%s165 + $0x258] sm:$0xff]
      %v249 = vld [vmem:[%s165 + $0x260] sm:$0xff]
      %v250 = vld [vmem:[%s165 + $0x268] sm:$0xff]
      %v251 = vld [vmem:[%s165 + $0x270] sm:$0xff]
      %v252 = vld [vmem:[%s165 + $0x278] sm:$0xff]
      %v253 = vld [vmem:[%s165 + $0x280] sm:$0xff]
      %v254 = vld [vmem:[%s165 + $0x288] sm:$0xff]
      %v255 = vld [vmem:[%s165 + $0x290] sm:$0xff]
      %v256 = vld [vmem:[%s165 + $0x298] sm:$0xff]
      %v257 = vld [vmem:[%s165 + $0x2a0] sm:$0xff]
      %v258 = vld [vmem:[%s165 + $0x2a8] sm:$0xff]
      %v259 = vld [vmem:[%s165 + $0x2b0] sm:$0xff]
      %v260 = vld [vmem:[%s165 + $0x2b8] sm:$0xff]
      %v261 = vld [vmem:[%s165 + $0x2c0] sm:$0xff]
      %v262 = vld [vmem:[%s165 + $0x2c8] sm:$0xff]
      %v263 = vld [vmem:[%s165 + $0x2d0] sm:$0xff]
      %v264 = vld [vmem:[%s165 + $0x2d8] sm:$0xff]
      %v265 = vld [vmem:[%s165 + $0x2e0] sm:$0xff]
      %v266 = vld [vmem:[%s165 + $0x2e8] sm:$0xff]
      %v267 = vld [vmem:[%s165 + $0x2f0] sm:$0xff]
      %v268 = vld [vmem:[%s165 + $0x2f8] sm:$0xff]
      %v269 = vld [vmem:[%s165 + $0x300] sm:$0xff]
      %v270 = vld [vmem:[%s165 + $0x308] sm:$0xff]
      %v271 = vld [vmem:[%s165 + $0x310] sm:$0xff]
      %v272 = vld [vmem:[%s165 + $0x318] sm:$0xff]
      %v273 = vld [vmem:[%s165 + $0x320] sm:$0xff]
      %v274 = vld [vmem:[%s165 + $0x328] sm:$0xff]
      %v275 = vld [vmem:[%s165 + $0x330] sm:$0xff]
      %v276 = vld [vmem:[%s165 + $0x338] sm:$0xff]
      %v277 = vld [vmem:[%s165 + $0x340] sm:$0xff]
      %v278 = vld [vmem:[%s165 + $0x348] sm:$0xff]
      %v279 = vld [vmem:[%s165 + $0x350] sm:$0xff]
      %v280 = vld [vmem:[%s165 + $0x358] sm:$0xff]
      %v281 = vld [vmem:[%s165 + $0x360] sm:$0xff]
      %v282 = vld [vmem:[%s165 + $0x368] sm:$0xff]
      %v283 = vld [vmem:[%s165 + $0x370] sm:$0xff]
      %v284 = vld [vmem:[%s165 + $0x378] sm:$0xff]
      %v285 = vld [vmem:[%s165 + $0x380] sm:$0xff]
      %v286 = vld [vmem:[%s165 + $0x388] sm:$0xff]
      %v287 = vld [vmem:[%s165 + $0x390] sm:$0xff]
      %v288 = vld [vmem:[%s165 + $0x398] sm:$0xff]
      %v289 = vld [vmem:[%s165 + $0x3a0] sm:$0xff]
      %v290 = vld [vmem:[%s165 + $0x3a8] sm:$0xff]
      %v291 = vld [vmem:[%s165 + $0x3b0] sm:$0xff]
      %v292 = vld [vmem:[%s165 + $0x3b8] sm:$0xff]
      %v293 = vld [vmem:[%s165 + $0x3c0] sm:$0xff]
      %v294 = vld [vmem:[%s165 + $0x3c8] sm:$0xff]
      %v295 = vld [vmem:[%s165 + $0x3d0] sm:$0xff]
      %v296 = vld [vmem:[%s165 + $0x3d8] sm:$0xff]
      %v297 = vld [vmem:[%s165 + $0x3e0] sm:$0xff]
      %v298 = vld [vmem:[%s165 + $0x3e8] sm:$0xff]
      %v299 = vld [vmem:[%s165 + $0x3f0] sm:$0xff]
      %v300 = vld [vmem:[%s165 + $0x3f8] sm:$0xff]
      %v301 = vld [vmem:[%s165 + $0x400] sm:$0xff]
      %v302 = vld [vmem:[%s165 + $0x408] sm:$0xff]
      %v303 = vld [vmem:[%s165 + $0x410] sm:$0xff]
      %v304 = vld [vmem:[%s165 + $0x418] sm:$0xff]
      %v305 = vld [vmem:[%s165 + $0x420] sm:$0xff]
      %v306 = vld [vmem:[%s165 + $0x428] sm:$0xff]
      %v307 = vld [vmem:[%s165 + $0x430] sm:$0xff]
      %v308 = vld [vmem:[%s165 + $0x438] sm:$0xff]
      %v309 = vld [vmem:[%s165 + $0x440] sm:$0xff]
      %v310 = vld [vmem:[%s165 + $0x448] sm:$0xff]
      %v311 = vld [vmem:[%s165 + $0x450] sm:$0xff]
      %v312 = vld [vmem:[%s165 + $0x458] sm:$0xff]
      %v313 = vld [vmem:[%s165 + $0x460] sm:$0xff]
      %v314 = vld [vmem:[%s165 + $0x468] sm:$0xff]
      %v315 = vld [vmem:[%s165 + $0x470] sm:$0xff]
      %v316 = vld [vmem:[%s165 + $0x478] sm:$0xff]
      %v317 = vld [vmem:[%s2] sm:$0xff]
      %319 = vset.pattern.permute.xlu0 0
      %320 = vperm.xlu0 %319, %v317
      %v321 = vpop.permute.xlu0 %320
      %v467 = vunpack.c.l.b16 %v173
      %v468 = vunpack.c.h.b16 %v173
      %v469 = vunpack.c.l.b16 %v174
      %v470 = vunpack.c.h.b16 %v174
      %v471 = vunpack.c.l.b16 %v175
      %v472 = vunpack.c.h.b16 %v175
      %v473 = vunpack.c.l.b16 %v176
      %v474 = vunpack.c.h.b16 %v176
      %v475 = vunpack.c.l.b16 %v177
      %v476 = vunpack.c.h.b16 %v177
      %v477 = vunpack.c.l.b16 %v178
      %v478 = vunpack.c.h.b16 %v178
      %v479 = vunpack.c.l.b16 %v179
      %v480 = vunpack.c.h.b16 %v179
      %v481 = vunpack.c.l.b16 %v180
      %v482 = vunpack.c.h.b16 %v180
      %v483 = vunpack.c.l.b16 %v181
      %v484 = vunpack.c.h.b16 %v181
      %v485 = vunpack.c.l.b16 %v182
      %v486 = vunpack.c.h.b16 %v182
      %v487 = vunpack.c.l.b16 %v183
      %v488 = vunpack.c.h.b16 %v183
      %v489 = vunpack.c.l.b16 %v184
      %v490 = vunpack.c.h.b16 %v184
      %v491 = vunpack.c.l.b16 %v185
      %v492 = vunpack.c.h.b16 %v185
      %v493 = vunpack.c.l.b16 %v186
      %v494 = vunpack.c.h.b16 %v186
      %v495 = vunpack.c.l.b16 %v187
      %v496 = vunpack.c.h.b16 %v187
      %v497 = vunpack.c.l.b16 %v188
      %v498 = vunpack.c.h.b16 %v188
      %v499 = vunpack.c.l.b16 %v189
      %v500 = vunpack.c.h.b16 %v189
      %v501 = vunpack.c.l.b16 %v190
      %v502 = vunpack.c.h.b16 %v190
      %v503 = vunpack.c.l.b16 %v191
      %v504 = vunpack.c.h.b16 %v191
      %v505 = vunpack.c.l.b16 %v192
      %v506 = vunpack.c.h.b16 %v192
      %v507 = vunpack.c.l.b16 %v193
      %v508 = vunpack.c.h.b16 %v193
      %v509 = vunpack.c.l.b16 %v194
      %v510 = vunpack.c.h.b16 %v194
      %v511 = vunpack.c.l.b16 %v195
      %v512 = vunpack.c.h.b16 %v195
      %v513 = vunpack.c.l.b16 %v196
      %v514 = vunpack.c.h.b16 %v196
      %v515 = vunpack.c.l.b16 %v197
      %v516 = vunpack.c.h.b16 %v197
      %v517 = vunpack.c.l.b16 %v198
      %v518 = vunpack.c.h.b16 %v198
      %v519 = vunpack.c.l.b16 %v199
      %v520 = vunpack.c.h.b16 %v199
      %v521 = vunpack.c.l.b16 %v200
      %v522 = vunpack.c.h.b16 %v200
      %v523 = vunpack.c.l.b16 %v201
      %v524 = vunpack.c.h.b16 %v201
      %v525 = vunpack.c.l.b16 %v202
      %v526 = vunpack.c.h.b16 %v202
      %v527 = vunpack.c.l.b16 %v203
      %v528 = vunpack.c.h.b16 %v203
      %v529 = vunpack.c.l.b16 %v204
      %v530 = vunpack.c.h.b16 %v204
      %v531 = vunpack.c.l.b16 %v205
      %v532 = vunpack.c.h.b16 %v205
      %v533 = vunpack.c.l.b16 %v206
      %v534 = vunpack.c.h.b16 %v206
      %v535 = vunpack.c.l.b16 %v207
      %v536 = vunpack.c.h.b16 %v207
      %v537 = vunpack.c.l.b16 %v208
      %v538 = vunpack.c.h.b16 %v208
      %v539 = vunpack.c.l.b16 %v209
      %v540 = vunpack.c.h.b16 %v209
      %v541 = vunpack.c.l.b16 %v210
      %v542 = vunpack.c.h.b16 %v210
      %v543 = vunpack.c.l.b16 %v211
      %v544 = vunpack.c.h.b16 %v211
      %v545 = vunpack.c.l.b16 %v212
      %v546 = vunpack.c.h.b16 %v212
      %v547 = vunpack.c.l.b16 %v213
      %v548 = vunpack.c.h.b16 %v213
      %v549 = vunpack.c.l.b16 %v214
      %v550 = vunpack.c.h.b16 %v214
      %v551 = vunpack.c.l.b16 %v215
      %v552 = vunpack.c.h.b16 %v215
      %v553 = vunpack.c.l.b16 %v216
      %v554 = vunpack.c.h.b16 %v216
      %v555 = vunpack.c.l.b16 %v217
      %v556 = vunpack.c.h.b16 %v217
      %v557 = vunpack.c.l.b16 %v218
      %v558 = vunpack.c.h.b16 %v218
      %v559 = vunpack.c.l.b16 %v219
      %v560 = vunpack.c.h.b16 %v219
      %v561 = vunpack.c.l.b16 %v220
      %v562 = vunpack.c.h.b16 %v220
      %v563 = vunpack.c.l.b16 %v221
      %v564 = vunpack.c.h.b16 %v221
      %v565 = vunpack.c.l.b16 %v222
      %v566 = vunpack.c.h.b16 %v222
      %v567 = vunpack.c.l.b16 %v223
      %v568 = vunpack.c.h.b16 %v223
      %v569 = vunpack.c.l.b16 %v224
      %v570 = vunpack.c.h.b16 %v224
      %v571 = vunpack.c.l.b16 %v225
      %v572 = vunpack.c.h.b16 %v225
      %v573 = vunpack.c.l.b16 %v226
      %v574 = vunpack.c.h.b16 %v226
      %v575 = vunpack.c.l.b16 %v227
      %v576 = vunpack.c.h.b16 %v227
      %v577 = vunpack.c.l.b16 %v228
      %v578 = vunpack.c.h.b16 %v228
      %v579 = vunpack.c.l.b16 %v229
      %v580 = vunpack.c.h.b16 %v229
      %v581 = vunpack.c.l.b16 %v230
      %v582 = vunpack.c.h.b16 %v230
      %v583 = vunpack.c.l.b16 %v231
      %v584 = vunpack.c.h.b16 %v231
      %v585 = vunpack.c.l.b16 %v232
      %v586 = vunpack.c.h.b16 %v232
      %v587 = vunpack.c.l.b16 %v233
      %v588 = vunpack.c.h.b16 %v233
      %v589 = vunpack.c.l.b16 %v234
      %v590 = vunpack.c.h.b16 %v234
      %v591 = vunpack.c.l.b16 %v235
      %v592 = vunpack.c.h.b16 %v235
      %v593 = vunpack.c.l.b16 %v236
      %v594 = vunpack.c.h.b16 %v236
      %v595 = vunpack.c.l.b16 %v237
      %v596 = vunpack.c.h.b16 %v237
      %v597 = vunpack.c.l.b16 %v238
      %v598 = vunpack.c.h.b16 %v238
      %v599 = vunpack.c.l.b16 %v239
      %v600 = vunpack.c.h.b16 %v239
      %v601 = vunpack.c.l.b16 %v240
      %v602 = vunpack.c.h.b16 %v240
      %v603 = vunpack.c.l.b16 %v241
      %v604 = vunpack.c.h.b16 %v241
      %v605 = vunpack.c.l.b16 %v242
      %v606 = vunpack.c.h.b16 %v242
      %v607 = vunpack.c.l.b16 %v243
      %v608 = vunpack.c.h.b16 %v243
      %v609 = vunpack.c.l.b16 %v244
      %v610 = vunpack.c.h.b16 %v244
      %v611 = vunpack.c.l.b16 %v245
      %v612 = vunpack.c.h.b16 %v245
      %v613 = vunpack.c.l.b16 %v246
      %v614 = vunpack.c.h.b16 %v246
      %v615 = vunpack.c.l.b16 %v247
      %v616 = vunpack.c.h.b16 %v247
      %v617 = vunpack.c.l.b16 %v248
      %v618 = vunpack.c.h.b16 %v248
      %v619 = vunpack.c.l.b16 %v249
      %v620 = vunpack.c.h.b16 %v249
      %v621 = vunpack.c.l.b16 %v250
      %v622 = vunpack.c.h.b16 %v250
      %v623 = vunpack.c.l.b16 %v251
      %v624 = vunpack.c.h.b16 %v251
      %v625 = vunpack.c.l.b16 %v252
      %v626 = vunpack.c.h.b16 %v252
      %v627 = vunpack.c.l.b16 %v253
      %v628 = vunpack.c.h.b16 %v253
      %v629 = vunpack.c.l.b16 %v254
      %v630 = vunpack.c.h.b16 %v254
      %v631 = vunpack.c.l.b16 %v255
      %v632 = vunpack.c.h.b16 %v255
      %v633 = vunpack.c.l.b16 %v256
      %v634 = vunpack.c.h.b16 %v256
      %v635 = vunpack.c.l.b16 %v257
      %v636 = vunpack.c.h.b16 %v257
      %v637 = vunpack.c.l.b16 %v258
      %v638 = vunpack.c.h.b16 %v258
      %v639 = vunpack.c.l.b16 %v259
      %v640 = vunpack.c.h.b16 %v259
      %v641 = vunpack.c.l.b16 %v260
      %v642 = vunpack.c.h.b16 %v260
      %v643 = vunpack.c.l.b16 %v261
      %v644 = vunpack.c.h.b16 %v261
      %v645 = vunpack.c.l.b16 %v262
      %v646 = vunpack.c.h.b16 %v262
      %v647 = vunpack.c.l.b16 %v263
      %v648 = vunpack.c.h.b16 %v263
      %v649 = vunpack.c.l.b16 %v264
      %v650 = vunpack.c.h.b16 %v264
      %v651 = vunpack.c.l.b16 %v265
      %v652 = vunpack.c.h.b16 %v265
      %v653 = vunpack.c.l.b16 %v266
      %v654 = vunpack.c.h.b16 %v266
      %v655 = vunpack.c.l.b16 %v267
      %v656 = vunpack.c.h.b16 %v267
      %v657 = vunpack.c.l.b16 %v268
      %v658 = vunpack.c.h.b16 %v268
      %v659 = vunpack.c.l.b16 %v269
      %v660 = vunpack.c.h.b16 %v269
      %v661 = vunpack.c.l.b16 %v270
      %v662 = vunpack.c.h.b16 %v270
      %v663 = vunpack.c.l.b16 %v271
      %v664 = vunpack.c.h.b16 %v271
      %v665 = vunpack.c.l.b16 %v272
      %v666 = vunpack.c.h.b16 %v272
      %v667 = vunpack.c.l.b16 %v273
      %v668 = vunpack.c.h.b16 %v273
      %v669 = vunpack.c.l.b16 %v274
      %v670 = vunpack.c.h.b16 %v274
      %v671 = vunpack.c.l.b16 %v275
      %v672 = vunpack.c.h.b16 %v275
      %v673 = vunpack.c.l.b16 %v276
      %v674 = vunpack.c.h.b16 %v276
      %v675 = vunpack.c.l.b16 %v277
      %v676 = vunpack.c.h.b16 %v277
      %v677 = vunpack.c.l.b16 %v278
      %v678 = vunpack.c.h.b16 %v278
      %v679 = vunpack.c.l.b16 %v279
      %v680 = vunpack.c.h.b16 %v279
      %v681 = vunpack.c.l.b16 %v280
      %v682 = vunpack.c.h.b16 %v280
      %v683 = vunpack.c.l.b16 %v281
      %v684 = vunpack.c.h.b16 %v281
      %v685 = vunpack.c.l.b16 %v282
      %v686 = vunpack.c.h.b16 %v282
      %v687 = vunpack.c.l.b16 %v283
      %v688 = vunpack.c.h.b16 %v283
      %v689 = vunpack.c.l.b16 %v284
      %v690 = vunpack.c.h.b16 %v284
      %v691 = vunpack.c.l.b16 %v285
      %v692 = vunpack.c.h.b16 %v285
      %v693 = vunpack.c.l.b16 %v286
      %v694 = vunpack.c.h.b16 %v286
      %v695 = vunpack.c.l.b16 %v287
      %v696 = vunpack.c.h.b16 %v287
      %v697 = vunpack.c.l.b16 %v288
      %v698 = vunpack.c.h.b16 %v288
      %v699 = vunpack.c.l.b16 %v289
      %v700 = vunpack.c.h.b16 %v289
      %v701 = vunpack.c.l.b16 %v290
      %v702 = vunpack.c.h.b16 %v290
      %v703 = vunpack.c.l.b16 %v291
      %v704 = vunpack.c.h.b16 %v291
      %v705 = vunpack.c.l.b16 %v292
      %v706 = vunpack.c.h.b16 %v292
      %v707 = vunpack.c.l.b16 %v293
      %v708 = vunpack.c.h.b16 %v293
      %v709 = vunpack.c.l.b16 %v294
      %v710 = vunpack.c.h.b16 %v294
      %v711 = vunpack.c.l.b16 %v295
      %v712 = vunpack.c.h.b16 %v295
      %v713 = vunpack.c.l.b16 %v296
      %v714 = vunpack.c.h.b16 %v296
      %v715 = vunpack.c.l.b16 %v297
      %v716 = vunpack.c.h.b16 %v297
      %v717 = vunpack.c.l.b16 %v298
      %v718 = vunpack.c.h.b16 %v298
      %v719 = vunpack.c.l.b16 %v299
      %v720 = vunpack.c.h.b16 %v299
      %v721 = vunpack.c.l.b16 %v300
      %v722 = vunpack.c.h.b16 %v300
      %v723 = vunpack.c.l.b16 %v301
      %v724 = vunpack.c.h.b16 %v301
      %v725 = vunpack.c.l.b16 %v302
      %v726 = vunpack.c.h.b16 %v302
      %v727 = vunpack.c.l.b16 %v303
      %v728 = vunpack.c.h.b16 %v303
      %v729 = vunpack.c.l.b16 %v304
      %v730 = vunpack.c.h.b16 %v304
      %v731 = vunpack.c.l.b16 %v305
      %v732 = vunpack.c.h.b16 %v305
      %v733 = vunpack.c.l.b16 %v306
      %v734 = vunpack.c.h.b16 %v306
      %v735 = vunpack.c.l.b16 %v307
      %v736 = vunpack.c.h.b16 %v307
      %v737 = vunpack.c.l.b16 %v308
      %v738 = vunpack.c.h.b16 %v308
      %v739 = vunpack.c.l.b16 %v309
      %v740 = vunpack.c.h.b16 %v309
      %v741 = vunpack.c.l.b16 %v310
      %v742 = vunpack.c.h.b16 %v310
      %v743 = vunpack.c.l.b16 %v311
      %v744 = vunpack.c.h.b16 %v311
      %v745 = vunpack.c.l.b16 %v312
      %v746 = vunpack.c.h.b16 %v312
      %v747 = vunpack.c.l.b16 %v313
      %v748 = vunpack.c.h.b16 %v313
      %v749 = vunpack.c.l.b16 %v314
      %v750 = vunpack.c.h.b16 %v314
      %v751 = vunpack.c.l.b16 %v315
      %v752 = vunpack.c.h.b16 %v315
      %v753 = vunpack.c.l.b16 %v316
      %v754 = vunpack.c.h.b16 %v316
      %v755 = vpack.c.b16 %v499, %v467
      %v756 = vpack.c.b16 %v500, %v468
      %v757 = vpack.c.b16 %v501, %v469
      %v758 = vpack.c.b16 %v502, %v470
      %v759 = vpack.c.b16 %v503, %v471
      %v760 = vpack.c.b16 %v504, %v472
      %v761 = vpack.c.b16 %v505, %v473
      %v762 = vpack.c.b16 %v506, %v474
      %v763 = vpack.c.b16 %v507, %v475
      %v764 = vpack.c.b16 %v508, %v476
      %v765 = vpack.c.b16 %v509, %v477
      %v766 = vpack.c.b16 %v510, %v478
      %v767 = vpack.c.b16 %v511, %v479
      %v768 = vpack.c.b16 %v512, %v480
      %v769 = vpack.c.b16 %v513, %v481
      %v770 = vpack.c.b16 %v514, %v482
      %v771 = vpack.c.b16 %v515, %v483
      %v772 = vpack.c.b16 %v516, %v484
      %v773 = vpack.c.b16 %v517, %v485
      %v774 = vpack.c.b16 %v518, %v486
      %v775 = vpack.c.b16 %v519, %v487
      %v776 = vpack.c.b16 %v520, %v488
      %v777 = vpack.c.b16 %v521, %v489
      %v778 = vpack.c.b16 %v522, %v490
      %v779 = vpack.c.b16 %v523, %v491
      %v780 = vpack.c.b16 %v524, %v492
      %v781 = vpack.c.b16 %v525, %v493
      %v782 = vpack.c.b16 %v526, %v494
      %v783 = vpack.c.b16 %v527, %v495
      %v784 = vpack.c.b16 %v528, %v496
      %v785 = vpack.c.b16 %v529, %v497
      %v786 = vpack.c.b16 %v530, %v498
      %v787 = vpack.c.b16 %v563, %v531
      %v788 = vpack.c.b16 %v564, %v532
      %v789 = vpack.c.b16 %v565, %v533
      %v790 = vpack.c.b16 %v566, %v534
      %v791 = vpack.c.b16 %v567, %v535
      %v792 = vpack.c.b16 %v568, %v536
      %v793 = vpack.c.b16 %v569, %v537
      %v794 = vpack.c.b16 %v570, %v538
      %v795 = vpack.c.b16 %v571, %v539
      %v796 = vpack.c.b16 %v572, %v540
      %v797 = vpack.c.b16 %v573, %v541
      %v798 = vpack.c.b16 %v574, %v542
      %v799 = vpack.c.b16 %v575, %v543
      %v800 = vpack.c.b16 %v576, %v544
      %v801 = vpack.c.b16 %v577, %v545
      %v802 = vpack.c.b16 %v578, %v546
      %v803 = vpack.c.b16 %v579, %v547
      %v804 = vpack.c.b16 %v580, %v548
      %v805 = vpack.c.b16 %v581, %v549
      %v806 = vpack.c.b16 %v582, %v550
      %v807 = vpack.c.b16 %v583, %v551
      %v808 = vpack.c.b16 %v584, %v552
      %v809 = vpack.c.b16 %v585, %v553
      %v810 = vpack.c.b16 %v586, %v554
      %v811 = vpack.c.b16 %v587, %v555
      %v812 = vpack.c.b16 %v588, %v556
      %v813 = vpack.c.b16 %v589, %v557
      %v814 = vpack.c.b16 %v590, %v558
      %v815 = vpack.c.b16 %v591, %v559
      %v816 = vpack.c.b16 %v592, %v560
      %v817 = vpack.c.b16 %v593, %v561
      %v818 = vpack.c.b16 %v594, %v562
      %v819 = vpack.c.b16 %v627, %v595
      %v820 = vpack.c.b16 %v628, %v596
      %v821 = vpack.c.b16 %v629, %v597
      %v822 = vpack.c.b16 %v630, %v598
      %v823 = vpack.c.b16 %v631, %v599
      %v824 = vpack.c.b16 %v632, %v600
      %v825 = vpack.c.b16 %v633, %v601
      %v826 = vpack.c.b16 %v634, %v602
      %v827 = vpack.c.b16 %v635, %v603
      %v828 = vpack.c.b16 %v636, %v604
      %v829 = vpack.c.b16 %v637, %v605
      %v830 = vpack.c.b16 %v638, %v606
      %v831 = vpack.c.b16 %v639, %v607
      %v832 = vpack.c.b16 %v640, %v608
      %v833 = vpack.c.b16 %v641, %v609
      %v834 = vpack.c.b16 %v642, %v610
      %v835 = vpack.c.b16 %v643, %v611
      %v836 = vpack.c.b16 %v644, %v612
      %v837 = vpack.c.b16 %v645, %v613
      %v838 = vpack.c.b16 %v646, %v614
      %v839 = vpack.c.b16 %v647, %v615
      %v840 = vpack.c.b16 %v648, %v616
      %v841 = vpack.c.b16 %v649, %v617
      %v842 = vpack.c.b16 %v650, %v618
      %v843 = vpack.c.b16 %v651, %v619
      %v844 = vpack.c.b16 %v652, %v620
      %v845 = vpack.c.b16 %v653, %v621
      %v846 = vpack.c.b16 %v654, %v622
      %v847 = vpack.c.b16 %v655, %v623
      %v848 = vpack.c.b16 %v656, %v624
      %v849 = vpack.c.b16 %v657, %v625
      %v850 = vpack.c.b16 %v658, %v626
      %v851 = vpack.c.b16 %v691, %v659
      %v852 = vpack.c.b16 %v692, %v660
      %v853 = vpack.c.b16 %v693, %v661
      %v854 = vpack.c.b16 %v694, %v662
      %v855 = vpack.c.b16 %v695, %v663
      %v856 = vpack.c.b16 %v696, %v664
      %v857 = vpack.c.b16 %v697, %v665
      %v858 = vpack.c.b16 %v698, %v666
      %v859 = vpack.c.b16 %v699, %v667
      %v860 = vpack.c.b16 %v700, %v668
      %v861 = vpack.c.b16 %v701, %v669
      %v862 = vpack.c.b16 %v702, %v670
      %v863 = vpack.c.b16 %v703, %v671
      %v864 = vpack.c.b16 %v704, %v672
      %v865 = vpack.c.b16 %v705, %v673
      %v866 = vpack.c.b16 %v706, %v674
      %v867 = vpack.c.b16 %v707, %v675
      %v868 = vpack.c.b16 %v708, %v676
      %v869 = vpack.c.b16 %v709, %v677
      %v870 = vpack.c.b16 %v710, %v678
      %v871 = vpack.c.b16 %v711, %v679
      %v872 = vpack.c.b16 %v712, %v680
      %v873 = vpack.c.b16 %v713, %v681
      %v874 = vpack.c.b16 %v714, %v682
      %v875 = vpack.c.b16 %v715, %v683
      %v876 = vpack.c.b16 %v716, %v684
      %v877 = vpack.c.b16 %v717, %v685
      %v878 = vpack.c.b16 %v718, %v686
      %v879 = vpack.c.b16 %v719, %v687
      %v880 = vpack.c.b16 %v720, %v688
      %v881 = vpack.c.b16 %v721, %v689
      %v882 = vpack.c.b16 %v722, %v690
      %v883 = vpack.c.b16 %v723, %v723
      %v884 = vpack.c.b16 %v724, %v724
      %v885 = vpack.c.b16 %v725, %v725
      %v886 = vpack.c.b16 %v726, %v726
      %v887 = vpack.c.b16 %v727, %v727
      %v888 = vpack.c.b16 %v728, %v728
      %v889 = vpack.c.b16 %v729, %v729
      %v890 = vpack.c.b16 %v730, %v730
      %v891 = vpack.c.b16 %v731, %v731
      %v892 = vpack.c.b16 %v732, %v732
      %v893 = vpack.c.b16 %v733, %v733
      %v894 = vpack.c.b16 %v734, %v734
      %v895 = vpack.c.b16 %v735, %v735
      %v896 = vpack.c.b16 %v736, %v736
      %v897 = vpack.c.b16 %v737, %v737
      %v898 = vpack.c.b16 %v738, %v738
      %v899 = vpack.c.b16 %v739, %v739
      %v900 = vpack.c.b16 %v740, %v740
      %v901 = vpack.c.b16 %v741, %v741
      %v902 = vpack.c.b16 %v742, %v742
      %v903 = vpack.c.b16 %v743, %v743
      %v904 = vpack.c.b16 %v744, %v744
      %v905 = vpack.c.b16 %v745, %v745
      %v906 = vpack.c.b16 %v746, %v746
      %v907 = vpack.c.b16 %v747, %v747
      %v908 = vpack.c.b16 %v748, %v748
      %v909 = vpack.c.b16 %v749, %v749
      %v910 = vpack.c.b16 %v750, %v750
      %v911 = vpack.c.b16 %v751, %v751
      %v912 = vpack.c.b16 %v752, %v752
      %v913 = vpack.c.b16 %v753, %v753
      %v914 = vpack.c.b16 %v754, %v754
      %vm1043 = vcmask 588800
      %v1045 = vsel %vm1043, %v172, 0
      %vm1047 = vcmask 1043456
      %v1049 = vsel %vm1047, %v883, 0
      %v1052 = vsel %vm1047, %v884, 0
      %v1055 = vsel %vm1047, %v885, 0
      %v1058 = vsel %vm1047, %v886, 0
      %v1061 = vsel %vm1047, %v887, 0
      %v1064 = vsel %vm1047, %v888, 0
      %v1067 = vsel %vm1047, %v889, 0
      %v1070 = vsel %vm1047, %v890, 0
      %v1073 = vsel %vm1047, %v891, 0
      %v1076 = vsel %vm1047, %v892, 0
      %v1079 = vsel %vm1047, %v893, 0
      %v1082 = vsel %vm1047, %v894, 0
      %v1085 = vsel %vm1047, %v895, 0
      %v1088 = vsel %vm1047, %v896, 0
      %v1091 = vsel %vm1047, %v897, 0
      %v1094 = vsel %vm1047, %v898, 0
      %v1097 = vsel %vm1047, %v899, 0
      %v1100 = vsel %vm1047, %v900, 0
      %v1103 = vsel %vm1047, %v901, 0
      %v1106 = vsel %vm1047, %v902, 0
      %v1109 = vsel %vm1047, %v903, 0
      %v1112 = vsel %vm1047, %v904, 0
      %v1115 = vsel %vm1047, %v905, 0
      %v1118 = vsel %vm1047, %v906, 0
      %v1121 = vsel %vm1047, %v907, 0
      %v1124 = vsel %vm1047, %v908, 0
      %v1127 = vsel %vm1047, %v909, 0
      %v1130 = vsel %vm1047, %v910, 0
      %v1133 = vsel %vm1047, %v911, 0
      %v1136 = vsel %vm1047, %v912, 0
      %v1139 = vsel %vm1047, %v913, 0
      %v1142 = vsel %vm1047, %v914, 0
      %1144 = vmatpush.bf16.msra.mxu0 0
      %1145 = vmatpush.bf16.msra.mxu0 0
      %1146 = vmatpush.bf16.msra.mxu0 0
      %1147 = vmatpush.bf16.msra.mxu0 %v1049
      %1148 = vmatpush.bf16.msra.mxu0 %v851
      %1149 = vmatpush.bf16.msra.mxu0 %v819
      %1150 = vmatpush.bf16.msra.mxu0 %v787
      %1151 = vmatpush.bf16.msra.mxu0 %v755
      %1152 = vmatmul.bf16.gmra.mxu0 %v1045
      %v1153 = vpop.f32.mrf.mxu0
      %v1154 = vadd.f32 %v321, %v1153
      %v1155 = vpop.f32.mrf.mxu0
      %1156 = vdwg.mxu0
      %1157 = vmatpush.bf16.msra.mxu0 0
      %1158 = vmatpush.bf16.msra.mxu0 0
      %1159 = vmatpush.bf16.msra.mxu0 0
      %1160 = vmatpush.bf16.msra.mxu0 %v1052
      %1161 = vmatpush.bf16.msra.mxu0 %v852
      %1162 = vmatpush.bf16.msra.mxu0 %v820
      %1163 = vmatpush.bf16.msra.mxu0 %v788
      %1164 = vmatpush.bf16.msra.mxu0 %v756
      %1165 = vmatmul.bf16.gmra.mxu0 %v1045
      %v1166 = vpop.f32.mrf.mxu0
      %v1167 = vadd.f32 %v321, %v1166
      %v1168 = vpop.f32.mrf.mxu0
      %1169 = vdwg.mxu0
      %1170 = vmatpush.bf16.msra.mxu0 0
      %1171 = vmatpush.bf16.msra.mxu0 0
      %1172 = vmatpush.bf16.msra.mxu0 0
      %1173 = vmatpush.bf16.msra.mxu0 %v1055
      %1174 = vmatpush.bf16.msra.mxu0 %v853
      %1175 = vmatpush.bf16.msra.mxu0 %v821
      %1176 = vmatpush.bf16.msra.mxu0 %v789
      %1177 = vmatpush.bf16.msra.mxu0 %v757
      %1178 = vmatmul.bf16.gmra.mxu0 %v1045
      %v1179 = vpop.f32.mrf.mxu0
      %v1180 = vadd.f32 %v321, %v1179
      %v1181 = vpop.f32.mrf.mxu0
      %1182 = vdwg.mxu0
      %1183 = vmatpush.bf16.msra.mxu0 0
      %1184 = vmatpush.bf16.msra.mxu0 0
      %1185 = vmatpush.bf16.msra.mxu0 0
      %1186 = vmatpush.bf16.msra.mxu0 %v1058
      %1187 = vmatpush.bf16.msra.mxu0 %v854
      %1188 = vmatpush.bf16.msra.mxu0 %v822
      %1189 = vmatpush.bf16.msra.mxu0 %v790
      %1190 = vmatpush.bf16.msra.mxu0 %v758
      %1191 = vmatmul.bf16.gmra.mxu0 %v1045
      %v1192 = vpop.f32.mrf.mxu0
      %v1193 = vadd.f32 %v321, %v1192
      %v1194 = vpop.f32.mrf.mxu0
      %1195 = vdwg.mxu0
      %1196 = vmatpush.bf16.msra.mxu0 0
      %1197 = vmatpush.bf16.msra.mxu0 0
      %1198 = vmatpush.bf16.msra.mxu0 0
      %1199 = vmatpush.bf16.msra.mxu0 %v1061
      %1200 = vmatpush.bf16.msra.mxu0 %v855
      %1201 = vmatpush.bf16.msra.mxu0 %v823
      %1202 = vmatpush.bf16.msra.mxu0 %v791
      %1203 = vmatpush.bf16.msra.mxu0 %v759
      %1204 = vmatmul.bf16.gmra.mxu0 %v1045
      %v1205 = vpop.f32.mrf.mxu0
      %v1206 = vadd.f32 %v321, %v1205
      %v1207 = vpop.f32.mrf.mxu0
      %1208 = vdwg.mxu0
      %1209 = vmatpush.bf16.msra.mxu0 0
      %1210 = vmatpush.bf16.msra.mxu0 0
      %1211 = vmatpush.bf16.msra.mxu0 0
      %1212 = vmatpush.bf16.msra.mxu0 %v1064
      %1213 = vmatpush.bf16.msra.mxu0 %v856
      %1214 = vmatpush.bf16.msra.mxu0 %v824
      %1215 = vmatpush.bf16.msra.mxu0 %v792
      %1216 = vmatpush.bf16.msra.mxu0 %v760
      %1217 = vmatmul.bf16.gmra.mxu0 %v1045
      %v1218 = vpop.f32.mrf.mxu0
      %v1219 = vadd.f32 %v321, %v1218
      %v1220 = vpop.f32.mrf.mxu0
      %1221 = vdwg.mxu0
      %1222 = vmatpush.bf16.msra.mxu0 0
      %1223 = vmatpush.bf16.msra.mxu0 0
      %1224 = vmatpush.bf16.msra.mxu0 0
      %1225 = vmatpush.bf16.msra.mxu0 %v1067
      %1226 = vmatpush.bf16.msra.mxu0 %v857
      %1227 = vmatpush.bf16.msra.mxu0 %v825
      %1228 = vmatpush.bf16.msra.mxu0 %v793
      %1229 = vmatpush.bf16.msra.mxu0 %v761
      %1230 = vmatmul.bf16.gmra.mxu0 %v1045
      %v1231 = vpop.f32.mrf.mxu0
      %v1232 = vadd.f32 %v321, %v1231
      %v1233 = vpop.f32.mrf.mxu0
      %1234 = vdwg.mxu0
      %1235 = vmatpush.bf16.msra.mxu0 0
      %1236 = vmatpush.bf16.msra.mxu0 0
      %1237 = vmatpush.bf16.msra.mxu0 0
      %1238 = vmatpush.bf16.msra.mxu0 %v1070
      %1239 = vmatpush.bf16.msra.mxu0 %v858
      %1240 = vmatpush.bf16.msra.mxu0 %v826
      %1241 = vmatpush.bf16.msra.mxu0 %v794
      %1242 = vmatpush.bf16.msra.mxu0 %v762
      %1243 = vmatmul.bf16.gmra.mxu0 %v1045
      %v1244 = vpop.f32.mrf.mxu0
      %v1245 = vadd.f32 %v321, %v1244
      %v1246 = vpop.f32.mrf.mxu0
      %1247 = vdwg.mxu0
      %1248 = vmatpush.bf16.msra.mxu0 0
      %1249 = vmatpush.bf16.msra.mxu0 0
      %1250 = vmatpush.bf16.msra.mxu0 0
      %1251 = vmatpush.bf16.msra.mxu0 %v1073
      %1252 = vmatpush.bf16.msra.mxu0 %v859
      %1253 = vmatpush.bf16.msra.mxu0 %v827
      %1254 = vmatpush.bf16.msra.mxu0 %v795
      %1255 = vmatpush.bf16.msra.mxu0 %v763
      %1256 = vmatmul.bf16.gmra.mxu0 %v1045
      %v1257 = vpop.f32.mrf.mxu0
      %v1258 = vadd.f32 %v321, %v1257
      %v1259 = vpop.f32.mrf.mxu0
      %1260 = vdwg.mxu0
      %1261 = vmatpush.bf16.msra.mxu0 0
      %1262 = vmatpush.bf16.msra.mxu0 0
      %1263 = vmatpush.bf16.msra.mxu0 0
      %1264 = vmatpush.bf16.msra.mxu0 %v1076
      %1265 = vmatpush.bf16.msra.mxu0 %v860
      %1266 = vmatpush.bf16.msra.mxu0 %v828
      %1267 = vmatpush.bf16.msra.mxu0 %v796
      %1268 = vmatpush.bf16.msra.mxu0 %v764
      %1269 = vmatmul.bf16.gmra.mxu0 %v1045
      %v1270 = vpop.f32.mrf.mxu0
      %v1271 = vadd.f32 %v321, %v1270
      %v1272 = vpop.f32.mrf.mxu0
      %1273 = vdwg.mxu0
      %1274 = vmatpush.bf16.msra.mxu0 0
      %1275 = vmatpush.bf16.msra.mxu0 0
      %1276 = vmatpush.bf16.msra.mxu0 0
      %1277 = vmatpush.bf16.msra.mxu0 %v1079
      %1278 = vmatpush.bf16.msra.mxu0 %v861
      %1279 = vmatpush.bf16.msra.mxu0 %v829
      %1280 = vmatpush.bf16.msra.mxu0 %v797
      %1281 = vmatpush.bf16.msra.mxu0 %v765
      %1282 = vmatmul.bf16.gmra.mxu0 %v1045
      %v1283 = vpop.f32.mrf.mxu0
      %v1284 = vadd.f32 %v321, %v1283
      %v1285 = vpop.f32.mrf.mxu0
      %1286 = vdwg.mxu0
      %1287 = vmatpush.bf16.msra.mxu0 0
      %1288 = vmatpush.bf16.msra.mxu0 0
      %1289 = vmatpush.bf16.msra.mxu0 0
      %1290 = vmatpush.bf16.msra.mxu0 %v1082
      %1291 = vmatpush.bf16.msra.mxu0 %v862
      %1292 = vmatpush.bf16.msra.mxu0 %v830
      %1293 = vmatpush.bf16.msra.mxu0 %v798
      %1294 = vmatpush.bf16.msra.mxu0 %v766
      %1295 = vmatmul.bf16.gmra.mxu0 %v1045
      %v1296 = vpop.f32.mrf.mxu0
      %v1297 = vadd.f32 %v321, %v1296
      %v1298 = vpop.f32.mrf.mxu0
      %1299 = vdwg.mxu0
      %1300 = vmatpush.bf16.msra.mxu0 0
      %1301 = vmatpush.bf16.msra.mxu0 0
      %1302 = vmatpush.bf16.msra.mxu0 0
      %1303 = vmatpush.bf16.msra.mxu0 %v1085
      %1304 = vmatpush.bf16.msra.mxu0 %v863
      %1305 = vmatpush.bf16.msra.mxu0 %v831
      %1306 = vmatpush.bf16.msra.mxu0 %v799
      %1307 = vmatpush.bf16.msra.mxu0 %v767
      %1308 = vmatmul.bf16.gmra.mxu0 %v1045
      %v1309 = vpop.f32.mrf.mxu0
      %v1310 = vadd.f32 %v321, %v1309
      %v1311 = vpop.f32.mrf.mxu0
      %1312 = vdwg.mxu0
      %1313 = vmatpush.bf16.msra.mxu0 0
      %1314 = vmatpush.bf16.msra.mxu0 0
      %1315 = vmatpush.bf16.msra.mxu0 0
      %1316 = vmatpush.bf16.msra.mxu0 %v1088
      %1317 = vmatpush.bf16.msra.mxu0 %v864
      %1318 = vmatpush.bf16.msra.mxu0 %v832
      %1319 = vmatpush.bf16.msra.mxu0 %v800
      %1320 = vmatpush.bf16.msra.mxu0 %v768
      %1321 = vmatmul.bf16.gmra.mxu0 %v1045
      %v1322 = vpop.f32.mrf.mxu0
      %v1323 = vadd.f32 %v321, %v1322
      %v1324 = vpop.f32.mrf.mxu0
      %1325 = vdwg.mxu0
      %1326 = vmatpush.bf16.msra.mxu0 0
      %1327 = vmatpush.bf16.msra.mxu0 0
      %1328 = vmatpush.bf16.msra.mxu0 0
      %1329 = vmatpush.bf16.msra.mxu0 %v1091
      %1330 = vmatpush.bf16.msra.mxu0 %v865
      %1331 = vmatpush.bf16.msra.mxu0 %v833
      %1332 = vmatpush.bf16.msra.mxu0 %v801
      %1333 = vmatpush.bf16.msra.mxu0 %v769
      %1334 = vmatmul.bf16.gmra.mxu0 %v1045
      %v1335 = vpop.f32.mrf.mxu0
      %v1336 = vadd.f32 %v321, %v1335
      %v1337 = vpop.f32.mrf.mxu0
      %1338 = vdwg.mxu0
      %1339 = vmatpush.bf16.msra.mxu0 0
      %1340 = vmatpush.bf16.msra.mxu0 0
      %1341 = vmatpush.bf16.msra.mxu0 0
      %1342 = vmatpush.bf16.msra.mxu0 %v1094
      %1343 = vmatpush.bf16.msra.mxu0 %v866
      %1344 = vmatpush.bf16.msra.mxu0 %v834
      %1345 = vmatpush.bf16.msra.mxu0 %v802
      %1346 = vmatpush.bf16.msra.mxu0 %v770
      %1347 = vmatmul.bf16.gmra.mxu0 %v1045
      %v1348 = vpop.f32.mrf.mxu0
      %v1349 = vadd.f32 %v321, %v1348
      %v1350 = vpop.f32.mrf.mxu0
      %1351 = vdwg.mxu0
      %1352 = vmatpush.bf16.msra.mxu0 0
      %1353 = vmatpush.bf16.msra.mxu0 0
      %1354 = vmatpush.bf16.msra.mxu0 0
      %1355 = vmatpush.bf16.msra.mxu0 %v1097
      %1356 = vmatpush.bf16.msra.mxu0 %v867
      %1357 = vmatpush.bf16.msra.mxu0 %v835
      %1358 = vmatpush.bf16.msra.mxu0 %v803
      %1359 = vmatpush.bf16.msra.mxu0 %v771
      %1360 = vmatmul.bf16.gmra.mxu0 %v1045
      %v1361 = vpop.f32.mrf.mxu0
      %v1362 = vadd.f32 %v321, %v1361
      %v1363 = vpop.f32.mrf.mxu0
      %1364 = vdwg.mxu0
      %1365 = vmatpush.bf16.msra.mxu0 0
      %1366 = vmatpush.bf16.msra.mxu0 0
      %1367 = vmatpush.bf16.msra.mxu0 0
      %1368 = vmatpush.bf16.msra.mxu0 %v1100
      %1369 = vmatpush.bf16.msra.mxu0 %v868
      %1370 = vmatpush.bf16.msra.mxu0 %v836
      %1371 = vmatpush.bf16.msra.mxu0 %v804
      %1372 = vmatpush.bf16.msra.mxu0 %v772
      %1373 = vmatmul.bf16.gmra.mxu0 %v1045
      %v1374 = vpop.f32.mrf.mxu0
      %v1375 = vadd.f32 %v321, %v1374
      %v1376 = vpop.f32.mrf.mxu0
      %1377 = vdwg.mxu0
      %1378 = vmatpush.bf16.msra.mxu0 0
      %1379 = vmatpush.bf16.msra.mxu0 0
      %1380 = vmatpush.bf16.msra.mxu0 0
      %1381 = vmatpush.bf16.msra.mxu0 %v1103
      %1382 = vmatpush.bf16.msra.mxu0 %v869
      %1383 = vmatpush.bf16.msra.mxu0 %v837
      %1384 = vmatpush.bf16.msra.mxu0 %v805
      %1385 = vmatpush.bf16.msra.mxu0 %v773
      %1386 = vmatmul.bf16.gmra.mxu0 %v1045
      %v1387 = vpop.f32.mrf.mxu0
      %v1388 = vadd.f32 %v321, %v1387
      %v1389 = vpop.f32.mrf.mxu0
      %1390 = vdwg.mxu0
      %1391 = vmatpush.bf16.msra.mxu0 0
      %1392 = vmatpush.bf16.msra.mxu0 0
      %1393 = vmatpush.bf16.msra.mxu0 0
      %1394 = vmatpush.bf16.msra.mxu0 %v1106
      %1395 = vmatpush.bf16.msra.mxu0 %v870
      %1396 = vmatpush.bf16.msra.mxu0 %v838
      %1397 = vmatpush.bf16.msra.mxu0 %v806
      %1398 = vmatpush.bf16.msra.mxu0 %v774
      %1399 = vmatmul.bf16.gmra.mxu0 %v1045
      %v1400 = vpop.f32.mrf.mxu0
      %v1401 = vadd.f32 %v321, %v1400
      %v1402 = vpop.f32.mrf.mxu0
      %1403 = vdwg.mxu0
      %1404 = vmatpush.bf16.msra.mxu0 0
      %1405 = vmatpush.bf16.msra.mxu0 0
      %1406 = vmatpush.bf16.msra.mxu0 0
      %1407 = vmatpush.bf16.msra.mxu0 %v1109
      %1408 = vmatpush.bf16.msra.mxu0 %v871
      %1409 = vmatpush.bf16.msra.mxu0 %v839
      %1410 = vmatpush.bf16.msra.mxu0 %v807
      %1411 = vmatpush.bf16.msra.mxu0 %v775
      %1412 = vmatmul.bf16.gmra.mxu0 %v1045
      %v1413 = vpop.f32.mrf.mxu0
      %v1414 = vadd.f32 %v321, %v1413
      %v1415 = vpop.f32.mrf.mxu0
      %1416 = vdwg.mxu0
      %1417 = vmatpush.bf16.msra.mxu0 0
      %1418 = vmatpush.bf16.msra.mxu0 0
      %1419 = vmatpush.bf16.msra.mxu0 0
      %1420 = vmatpush.bf16.msra.mxu0 %v1112
      %1421 = vmatpush.bf16.msra.mxu0 %v872
      %1422 = vmatpush.bf16.msra.mxu0 %v840
      %1423 = vmatpush.bf16.msra.mxu0 %v808
      %1424 = vmatpush.bf16.msra.mxu0 %v776
      %1425 = vmatmul.bf16.gmra.mxu0 %v1045
      %v1426 = vpop.f32.mrf.mxu0
      %v1427 = vadd.f32 %v321, %v1426
      %v1428 = vpop.f32.mrf.mxu0
      %1429 = vdwg.mxu0
      %1430 = vmatpush.bf16.msra.mxu0 0
      %1431 = vmatpush.bf16.msra.mxu0 0
      %1432 = vmatpush.bf16.msra.mxu0 0
      %1433 = vmatpush.bf16.msra.mxu0 %v1115
      %1434 = vmatpush.bf16.msra.mxu0 %v873
      %1435 = vmatpush.bf16.msra.mxu0 %v841
      %1436 = vmatpush.bf16.msra.mxu0 %v809
      %1437 = vmatpush.bf16.msra.mxu0 %v777
      %1438 = vmatmul.bf16.gmra.mxu0 %v1045
      %v1439 = vpop.f32.mrf.mxu0
      %v1440 = vadd.f32 %v321, %v1439
      %v1441 = vpop.f32.mrf.mxu0
      %1442 = vdwg.mxu0
      %1443 = vmatpush.bf16.msra.mxu0 0
      %1444 = vmatpush.bf16.msra.mxu0 0
      %1445 = vmatpush.bf16.msra.mxu0 0
      %1446 = vmatpush.bf16.msra.mxu0 %v1118
      %1447 = vmatpush.bf16.msra.mxu0 %v874
      %1448 = vmatpush.bf16.msra.mxu0 %v842
      %1449 = vmatpush.bf16.msra.mxu0 %v810
      %1450 = vmatpush.bf16.msra.mxu0 %v778
      %1451 = vmatmul.bf16.gmra.mxu0 %v1045
      %v1452 = vpop.f32.mrf.mxu0
      %v1453 = vadd.f32 %v321, %v1452
      %v1454 = vpop.f32.mrf.mxu0
      %1455 = vdwg.mxu0
      %1456 = vmatpush.bf16.msra.mxu0 0
      %1457 = vmatpush.bf16.msra.mxu0 0
      %1458 = vmatpush.bf16.msra.mxu0 0
      %1459 = vmatpush.bf16.msra.mxu0 %v1121
      %1460 = vmatpush.bf16.msra.mxu0 %v875
      %1461 = vmatpush.bf16.msra.mxu0 %v843
      %1462 = vmatpush.bf16.msra.mxu0 %v811
      %1463 = vmatpush.bf16.msra.mxu0 %v779
      %1464 = vmatmul.bf16.gmra.mxu0 %v1045
      %v1465 = vpop.f32.mrf.mxu0
      %v1466 = vadd.f32 %v321, %v1465
      %v1467 = vpop.f32.mrf.mxu0
      %1468 = vdwg.mxu0
      %1469 = vmatpush.bf16.msra.mxu0 0
      %1470 = vmatpush.bf16.msra.mxu0 0
      %1471 = vmatpush.bf16.msra.mxu0 0
      %1472 = vmatpush.bf16.msra.mxu0 %v1124
      %1473 = vmatpush.bf16.msra.mxu0 %v876
      %1474 = vmatpush.bf16.msra.mxu0 %v844
      %1475 = vmatpush.bf16.msra.mxu0 %v812
      %1476 = vmatpush.bf16.msra.mxu0 %v780
      %1477 = vmatmul.bf16.gmra.mxu0 %v1045
      %v1478 = vpop.f32.mrf.mxu0
      %v1479 = vadd.f32 %v321, %v1478
      %v1480 = vpop.f32.mrf.mxu0
      %1481 = vdwg.mxu0
      %1482 = vmatpush.bf16.msra.mxu0 0
      %1483 = vmatpush.bf16.msra.mxu0 0
      %1484 = vmatpush.bf16.msra.mxu0 0
      %1485 = vmatpush.bf16.msra.mxu0 %v1127
      %1486 = vmatpush.bf16.msra.mxu0 %v877
      %1487 = vmatpush.bf16.msra.mxu0 %v845
      %1488 = vmatpush.bf16.msra.mxu0 %v813
      %1489 = vmatpush.bf16.msra.mxu0 %v781
      %1490 = vmatmul.bf16.gmra.mxu0 %v1045
      %v1491 = vpop.f32.mrf.mxu0
      %v1492 = vadd.f32 %v321, %v1491
      %v1493 = vpop.f32.mrf.mxu0
      %1494 = vdwg.mxu0
      %1495 = vmatpush.bf16.msra.mxu0 0
      %1496 = vmatpush.bf16.msra.mxu0 0
      %1497 = vmatpush.bf16.msra.mxu0 0
      %1498 = vmatpush.bf16.msra.mxu0 %v1130
      %1499 = vmatpush.bf16.msra.mxu0 %v878
      %1500 = vmatpush.bf16.msra.mxu0 %v846
      %1501 = vmatpush.bf16.msra.mxu0 %v814
      %1502 = vmatpush.bf16.msra.mxu0 %v782
      %1503 = vmatmul.bf16.gmra.mxu0 %v1045
      %v1504 = vpop.f32.mrf.mxu0
      %v1505 = vadd.f32 %v321, %v1504
      %v1506 = vpop.f32.mrf.mxu0
      %1507 = vdwg.mxu0
      %1508 = vmatpush.bf16.msra.mxu0 0
      %1509 = vmatpush.bf16.msra.mxu0 0
      %1510 = vmatpush.bf16.msra.mxu0 0
      %1511 = vmatpush.bf16.msra.mxu0 %v1133
      %1512 = vmatpush.bf16.msra.mxu0 %v879
      %1513 = vmatpush.bf16.msra.mxu0 %v847
      %1514 = vmatpush.bf16.msra.mxu0 %v815
      %1515 = vmatpush.bf16.msra.mxu0 %v783
      %1516 = vmatmul.bf16.gmra.mxu0 %v1045
      %v1517 = vpop.f32.mrf.mxu0
      %v1518 = vadd.f32 %v321, %v1517
      %v1519 = vpop.f32.mrf.mxu0
      %1520 = vdwg.mxu0
      %1521 = vmatpush.bf16.msra.mxu0 0
      %1522 = vmatpush.bf16.msra.mxu0 0
      %1523 = vmatpush.bf16.msra.mxu0 0
      %1524 = vmatpush.bf16.msra.mxu0 %v1136
      %1525 = vmatpush.bf16.msra.mxu0 %v880
      %1526 = vmatpush.bf16.msra.mxu0 %v848
      %1527 = vmatpush.bf16.msra.mxu0 %v816
      %1528 = vmatpush.bf16.msra.mxu0 %v784
      %1529 = vmatmul.bf16.gmra.mxu0 %v1045
      %v1530 = vpop.f32.mrf.mxu0
      %v1531 = vadd.f32 %v321, %v1530
      %v1532 = vpop.f32.mrf.mxu0
      %1533 = vdwg.mxu0
      %1534 = vmatpush.bf16.msra.mxu0 0
      %1535 = vmatpush.bf16.msra.mxu0 0
      %1536 = vmatpush.bf16.msra.mxu0 0
      %1537 = vmatpush.bf16.msra.mxu0 %v1139
      %1538 = vmatpush.bf16.msra.mxu0 %v881
      %1539 = vmatpush.bf16.msra.mxu0 %v849
      %1540 = vmatpush.bf16.msra.mxu0 %v817
      %1541 = vmatpush.bf16.msra.mxu0 %v785
      %1542 = vmatmul.bf16.gmra.mxu0 %v1045
      %v1543 = vpop.f32.mrf.mxu0
      %v1544 = vadd.f32 %v321, %v1543
      %v1545 = vpop.f32.mrf.mxu0
      %1546 = vdwg.mxu0
      %1547 = vmatpush.bf16.msra.mxu0 0
      %1548 = vmatpush.bf16.msra.mxu0 0
      %1549 = vmatpush.bf16.msra.mxu0 0
      %1550 = vmatpush.bf16.msra.mxu0 %v1142
      %1551 = vmatpush.bf16.msra.mxu0 %v882
      %1552 = vmatpush.bf16.msra.mxu0 %v850
      %1553 = vmatpush.bf16.msra.mxu0 %v818
      %1554 = vmatpush.bf16.msra.mxu0 %v786
      %1555 = vmatmul.bf16.gmra.mxu0 %v1045
      %v1556 = vpop.f32.mrf.mxu0
      %v1557 = vadd.f32 %v321, %v1556
      %v1558 = vpop.f32.mrf.mxu0
      %1559 = vdwg.mxu0
      %v1560 = vmax.f32 %v1154, 0.0
      %v1561 = vmax.f32 %v1167, 0.0
      %v1562 = vmax.f32 %v1180, 0.0
      %v1563 = vmax.f32 %v1193, 0.0
      %v1564 = vmax.f32 %v1206, 0.0
      %v1565 = vmax.f32 %v1219, 0.0
      %v1566 = vmax.f32 %v1232, 0.0
      %v1567 = vmax.f32 %v1245, 0.0
      %v1568 = vmax.f32 %v1258, 0.0
      %v1569 = vmax.f32 %v1271, 0.0
      %v1570 = vmax.f32 %v1284, 0.0
      %v1571 = vmax.f32 %v1297, 0.0
      %v1572 = vmax.f32 %v1310, 0.0
      %v1573 = vmax.f32 %v1323, 0.0
      %v1574 = vmax.f32 %v1336, 0.0
      %v1575 = vmax.f32 %v1349, 0.0
      %v1576 = vmax.f32 %v1362, 0.0
      %v1577 = vmax.f32 %v1375, 0.0
      %v1578 = vmax.f32 %v1388, 0.0
      %v1579 = vmax.f32 %v1401, 0.0
      %v1580 = vmax.f32 %v1414, 0.0
      %v1581 = vmax.f32 %v1427, 0.0
      %v1582 = vmax.f32 %v1440, 0.0
      %v1583 = vmax.f32 %v1453, 0.0
      %v1584 = vmax.f32 %v1466, 0.0
      %v1585 = vmax.f32 %v1479, 0.0
      %v1586 = vmax.f32 %v1492, 0.0
      %v1587 = vmax.f32 %v1505, 0.0
      %v1588 = vmax.f32 %v1518, 0.0
      %v1589 = vmax.f32 %v1531, 0.0
      %v1590 = vmax.f32 %v1544, 0.0
      %v1591 = vmax.f32 %v1557, 0.0
      %v1592 = vmax.f32 %v1560, %v1568
      %v1593 = vmax.f32 %v1561, %v1569
      %v1594 = vmax.f32 %v1562, %v1570
      %v1595 = vmax.f32 %v1563, %v1571
      %v1596 = vmax.f32 %v1564, %v1572
      %v1597 = vmax.f32 %v1565, %v1573
      %v1598 = vmax.f32 %v1566, %v1574
      %v1599 = vmax.f32 %v1567, %v1575
      %v1600 = vmax.f32 %v1576, %v1584
      %v1601 = vmax.f32 %v1577, %v1585
      %v1602 = vmax.f32 %v1578, %v1586
      %v1603 = vmax.f32 %v1579, %v1587
      %v1604 = vmax.f32 %v1580, %v1588
      %v1605 = vmax.f32 %v1581, %v1589
      %v1606 = vmax.f32 %v1582, %v1590
      %v1607 = vmax.f32 %v1583, %v1591
      %v1608 = vmax.f32 %v1592, %v1600
      %v1609 = vmax.f32 %v1593, %v1601
      %v1610 = vmax.f32 %v1594, %v1602
      %v1611 = vmax.f32 %v1595, %v1603
      %v1612 = vmax.f32 %v1596, %v1604
      %v1613 = vmax.f32 %v1597, %v1605
      %v1614 = vmax.f32 %v1598, %v1606
      %v1615 = vmax.f32 %v1599, %v1607
      %v1616 = vpack.c.bf16 %v1609, %v1608
      %v1617 = vpack.c.bf16 %v1611, %v1610
      %v1618 = vpack.c.bf16 %v1613, %v1612
      %v1619 = vpack.c.bf16 %v1615, %v1614
      %1620 = vst [vmem:[%s170] sm:$0xff] %v1616
      %1621 = vst [vmem:[%s170 + $0x8] sm:$0xff] %v1617
      %1622 = vst [vmem:[%s170 + $0x10] sm:$0xff] %v1618
      %1623 = vst [vmem:[%s170 + $0x18] sm:$0xff] %v1619
      %p1624 = scmp.lt.s32.totalorder %s14, 1
      %s1625 = scalar_select %p1624, %s14, 1
      %s1626 = smul.addr %s1625, 8
      %s1627 = smul.addr %s1626, 4
      %s1628 = scalar_lea.vmem %s3, %s1627
      // Predicated region
      $region33: #{tiny_vgg_forward.6} parent=31 // pred_check
        %p1629 = pneg %p100
      $region34: #{tiny_vgg_forward.6} parent=31 // pred_check_branch
        %1631 = sbr.rel (%p1629) target = $region36
      $region35: #{tiny_vgg_forward.6} parent=31 // pred_region
        _
      $region36: #{tiny_vgg_forward.6} parent=31 // pred_fallthru
        _
    $region32: #{tiny_vgg_forward.6} parent=5 // pred_fallthru
      _
    %p1632 = scmp.le.s32.totalorder 2, %s9
    // Predicated region
    $region37: #{tiny_vgg_forward.6} parent=5 // pred_check
      %p1633 = pneg %p1632
    $region38: #{tiny_vgg_forward.6} parent=5 // pred_check_branch
      %1635 = sbr.rel (%p1633) target = $region40
    $region39: #{tiny_vgg_forward.6} parent=5 // pred_region
      %s1636 = ssub.s32 %s9, 2
      // Predicated region
      $region41: #{tiny_vgg_forward.6} parent=39 // pred_check
        %p1637 = pneg %p106
      $region42: #{tiny_vgg_forward.6} parent=39 // pred_check_branch
        %1639 = sbr.rel (%p1637) target = $region44
      $region43: #{tiny_vgg_forward.6} parent=39 // pred_region
        %p1640 = scmp.lt.s32.totalorder %s15, 1
        %s1641 = scalar_select %p1640, %s15, 1
        %s1642 = smul.addr %s1641, 8
        %s1643 = smul.addr %s1642, 4
        %s1644 = scalar_lea.vmem %s3, %s1643
      $region44: #{tiny_vgg_forward.6} parent=39 // pred_fallthru
        _
    $region40: #{tiny_vgg_forward.6} parent=5 // pred_fallthru
      _
  $region6: #{tiny_vgg_forward.6} parent=0 // loop_footer
    %s13 = sadd.s32 1, %s9
  $region7: #{tiny_vgg_forward.6} parent=0 // loop_footer_branch
    %8 = sbr.rel target = $region3
  $region8: #{tiny_vgg_forward.6} parent=0 // loop_exit
    _

// kernel: tiny_vgg_forward.7
$region0: #{tiny_vgg_forward.7}
  #allocation0 [shape = 'u32[]', space=smem, size = 0x4, offset = 0x4, fixed_abs, tag = 'smem constant byte address 0x4 - core index']
  #allocation1 [shape = 'u32[72,128]{1,0:T(1,128)}', space=vmem, size = 0x9000, scoped, tag = 'internal scratch']
  %s0 = inlined_call_operand.vmem [shape: bf16[2,72,1024], index: 0, kind: input, shape index: {}]
  %s1 = inlined_call_operand.vmem [shape: bf16[8,72], index: 1, kind: input, shape index: {}]
  %s2 = inlined_call_operand.vmem [shape: f32[8,1], index: 2, kind: input, shape index: {}]
  %s3 = inlined_call_operand.vmem [shape: bf16[2,8,1024], index: 3, kind: output, shape index: {}]
  %s4 = sld [smem:[#allocation0]]
  $region45: #{tiny_vgg_forward.7} parent=0
    _
  %s6 = ssub.s32 1, %s4
  %s7 = scalar_select 0, %s6, %s4
  loop: start=0, step=1, limit=4
  $region2: #{tiny_vgg_forward.7} parent=0 // loop_pre_header
    _
  $region3: #{tiny_vgg_forward.7} parent=0 // loop_header
    %s9 = sphi 0, %s13
    %p10 = scmp.ge.s32.totalorder %s9, 4
    %s19 = sphi 0, %s21
    %s22 = sphi 0, %s19
    %s23 = sphi 0, %s22
    %s39 = sphi 0, %s23
    %s43 = sphi 0, %s43
    %s45 = sphi 0, %s43
    %s46 = sphi 0, %s45
    %s60 = sphi 0, %s46
    %s64 = sphi 0, %s64
    %s66 = sphi 0, %s64
    %s67 = sphi 0, %s66
    %s81 = sphi 0, %s67
    %s87 = sphi 0, %s89
    %s90 = sphi 0, %s87
    %s91 = sphi 0, %s90
    %s107 = sphi 0, %s91
  $region4: #{tiny_vgg_forward.7} parent=0 // loop_header_branch
    %12 = sbr.rel (%p10) target = $region8
  $region5: #{tiny_vgg_forward.7} parent=0 // loop_body
    %s14 = ssub.s32 %s9, 1
    %s15 = ssub.s32 %s9, 2
    %s16 = sadd.s32 %s9, 1
    %s17 = ssub.s32 %s9, %s16
    %p18 = scmp.eq.s32.totalorder %s17, 0
    %s20 = sadd.s32 %s19, 1
    %s21 = scalar_select %p18, %s19, %s20
    %p24 = pneg %p18
    %p25 = scmp.eq.s32.totalorder %s9, 1
    %p26 = por %p24, %p25
    %p27 = scmp.ne.s32.totalorder %s19, %s22
    %p28 = scmp.eq.s32.totalorder %s9, 0
    %p29 = por %p27, %p28
    %p30 = scmp.ne.s32.totalorder %s19, %s22
    %p31 = scmp.eq.s32.totalorder %s14, 1
    %p32 = por %p30, %p31
    %p33 = scmp.ne.s32.totalorder %s22, %s23
    %p34 = scmp.eq.s32.totalorder %s14, 0
    %p35 = por %p33, %p34
    %p36 = scmp.ne.s32.totalorder %s22, %s23
    %p37 = scmp.eq.s32.totalorder %s15, 1
    %p38 = por %p36, %p37
    %p40 = scmp.ne.s32.totalorder %s23, %s39
    %p41 = scmp.eq.s32.totalorder %s15, 0
    %p42 = por %p40, %p41
    %s44 = sadd.s32 %s43, 1
    %p47 = scmp.eq.s32.totalorder %s9, 1
    %p48 = scmp.ne.s32.totalorder %s43, %s45
    %p49 = scmp.eq.s32.totalorder %s9, 0
    %p50 = por %p48, %p49
    %p51 = scmp.ne.s32.totalorder %s43, %s45
    %p52 = scmp.eq.s32.totalorder %s14, 1
    %p53 = por %p51, %p52
    %p54 = scmp.ne.s32.totalorder %s45, %s46
    %p55 = scmp.eq.s32.totalorder %s14, 0
    %p56 = por %p54, %p55
    %p57 = scmp.ne.s32.totalorder %s45, %s46
    %p58 = scmp.eq.s32.totalorder %s15, 1
    %p59 = por %p57, %p58
    %p61 = scmp.ne.s32.totalorder %s46, %s60
    %p62 = scmp.eq.s32.totalorder %s15, 0
    %p63 = por %p61, %p62
    %s65 = sadd.s32 %s64, 1
    %p68 = scmp.eq.s32.totalorder %s9, 1
    %p69 = scmp.ne.s32.totalorder %s64, %s66
    %p70 = scmp.eq.s32.totalorder %s9, 0
    %p71 = por %p69, %p70
    %p72 = scmp.ne.s32.totalorder %s64, %s66
    %p73 = scmp.eq.s32.totalorder %s14, 1
    %p74 = por %p72, %p73
    %p75 = scmp.ne.s32.totalorder %s66, %s67
    %p76 = scmp.eq.s32.totalorder %s14, 0
    %p77 = por %p75, %p76
    %p78 = scmp.ne.s32.totalorder %s66, %s67
    %p79 = scmp.eq.s32.totalorder %s15, 1
    %p80 = por %p78, %p79
    %p82 = scmp.ne.s32.totalorder %s67, %s81
    %p83 = scmp.eq.s32.totalorder %s15, 0
    %p84 = por %p82, %p83
    %s85 = ssub.s32 %s9, %s16
    %p86 = scmp.eq.s32.totalorder %s85, 0
    %s88 = sadd.s32 %s87, 1
    %s89 = scalar_select %p86, %s87, %s88
    %p92 = pneg %p86
    %p93 = scmp.eq.s32.totalorder %s9, 1
    %p94 = por %p92, %p93
    %p95 = scmp.ne.s32.totalorder %s87, %s90
    %p96 = scmp.eq.s32.totalorder %s9, 0
    %p97 = por %p95, %p96
    %p98 = scmp.ne.s32.totalorder %s87, %s90
    %p99 = scmp.eq.s32.totalorder %s14, 1
    %p100 = por %p98, %p99
    %p101 = scmp.ne.s32.totalorder %s90, %s91
    %p102 = scmp.eq.s32.totalorder %s14, 0
    %p103 = por %p101, %p102
    %p104 = scmp.ne.s32.totalorder %s90, %s91
    %p105 = scmp.eq.s32.totalorder %s15, 1
    %p106 = por %p104, %p105
    %p108 = scmp.ne.s32.totalorder %s91, %s107
    %p109 = scmp.eq.s32.totalorder %s15, 0
    %p110 = por %p108, %p109
    %p111 = scmp.le.s32.totalorder 1, %s9
    %p112 = scmp.lt.s32.totalorder %s9, 3
    %p113 = pnand %p111, %p112
    %p114 = pneg %p113
    // Predicated region
    $region9: #{tiny_vgg_forward.7} parent=5 // pred_check
      _
    $region10: #{tiny_vgg_forward.7} parent=5 // pred_check_branch
      %116 = sbr.rel (%p113) target = $region12
    $region11: #{tiny_vgg_forward.7} parent=5 // pred_region
      %s117 = ssub.s32 %s9, 1
      // Predicated region
      $region13: #{tiny_vgg_forward.7} parent=11 // pred_check
        %p118 = pneg %p56
      $region14: #{tiny_vgg_forward.7} parent=11 // pred_check_branch
        %120 = sbr.rel (%p118) target = $region16
      $region15: #{tiny_vgg_forward.7} parent=11 // pred_region
        _
      $region16: #{tiny_vgg_forward.7} parent=11 // pred_fallthru
        _
      // Predicated region
      $region17: #{tiny_vgg_forward.7} parent=11 // pred_check
        %p121 = pneg %p77
      $region18: #{tiny_vgg_forward.7} parent=11 // pred_check_branch
        %123 = sbr.rel (%p121) target = $region20
      $region19: #{tiny_vgg_forward.7} parent=11 // pred_region
        _
      $region20: #{tiny_vgg_forward.7} parent=11 // pred_fallthru
        _
    $region12: #{tiny_vgg_forward.7} parent=5 // pred_fallthru
      _
    %p124 = scmp.lt.s32.totalorder %s9, 2
    // Predicated region
    $region21: #{tiny_vgg_forward.7} parent=5 // pred_check
      %p125 = pneg %p124
    $region22: #{tiny_vgg_forward.7} parent=5 // pred_check_branch
      %127 = sbr.rel (%p125) target = $region24
    $region23: #{tiny_vgg_forward.7} parent=5 // pred_region
      // Predicated region
      $region25: #{tiny_vgg_forward.7} parent=23 // pred_check
        %p128 = pneg %p29
      $region26: #{tiny_vgg_forward.7} parent=23 // pred_check_branch
        %130 = sbr.rel (%p128) target = $region28
      $region27: #{tiny_vgg_forward.7} parent=23 // pred_region
        %p131 = scmp.lt.s32.totalorder %s9, 1
        %s132 = scalar_select %p131, %s9, 1
        %s133 = smul.addr %s132, 72
        %s134 = smul.addr %s133, 4
        %s135 = scalar_lea.vmem %s0, %s134
      $region28: #{tiny_vgg_forward.7} parent=23 // pred_fallthru
        _
    $region24: #{tiny_vgg_forward.7} parent=5 // pred_fallthru
      _
    %p136 = scmp.le.s32.totalorder 1, %s9
    %p137 = scmp.lt.s32.totalorder %s9, 3
    %p138 = pnand %p136, %p137
    %p139 = pneg %p138
    // Predicated region
    $region29: #{tiny_vgg_forward.7} parent=5 // pred_check
      _
    $region30: #{tiny_vgg_forward.7} parent=5 // pred_check_branch
      %141 = sbr.rel (%p138) target = $region32
    $region31: #{tiny_vgg_forward.7} parent=5 // pred_region
      %s142 = ssub.s32 %s9, 1
      %p143 = scmp.lt.s32.totalorder %s14, 1
      %s144 = scalar_select %p143, %s14, 1
      %s145 = smul.addr %s144, 72
      %s146 = smul.addr %s145, 4
      %s147 = scalar_lea.vmem %s0, %s146
      %p148 = pneg %p35
      %p149 = pneg %p32
      %p150 = pneg %p56
      %p151 = pneg %p53
      %p152 = pneg %p77
      %p153 = pneg %p74
      %p154 = pneg %p103
      %p155 = pneg %p100
      %p156 = scmp.lt.s32.totalorder %s14, 1
      %s157 = scalar_select %p156, %s14, 1
      %s158 = smul.addr %s157, 8
      %s159 = smul.addr %s158, 4
      %s160 = scalar_lea.vmem %s3, %s159
      %p161 = scmp.lt.s32.totalorder %s14, 1
      %s162 = scalar_select %p161, %s14, 1
      %s163 = smul.addr %s162, 72
      %s164 = smul.addr %s163, 4
      %s165 = scalar_lea.vmem %s0, %s164
      %p166 = scmp.lt.s32.totalorder %s14, 1
      %s167 = scalar_select %p166, %s14, 1
      %s168 = smul.addr %s167, 8
      %s169 = smul.addr %s168, 4
      %s170 = scalar_lea.vmem %s3, %s169
      %v172 = vld [vmem:[%s1] sm:$0xf]
      %v173 = vld [vmem:[%s165] sm:$0xff]
      %v174 = vld [vmem:[%s165 + $0x8] sm:$0xff]
      %v175 = vld [vmem:[%s165 + $0x10] sm:$0xff]
      %v176 = vld [vmem:[%s165 + $0x18] sm:$0xff]
      %v177 = vld [vmem:[%s165 + $0x20] sm:$0xff]
      %v178 = vld [vmem:[%s165 + $0x28] sm:$0xff]
      %v179 = vld [vmem:[%s165 + $0x30] sm:$0xff]
      %v180 = vld [vmem:[%s165 + $0x38] sm:$0xff]
      %v181 = vld [vmem:[%s165 + $0x40] sm:$0xff]
      %v182 = vld [vmem:[%s165 + $0x48] sm:$0xff]
      %v183 = vld [vmem:[%s165 + $0x50] sm:$0xff]
      %v184 = vld [vmem:[%s165 + $0x58] sm:$0xff]
      %v185 = vld [vmem:[%s165 + $0x60] sm:$0xff]
      %v186 = vld [vmem:[%s165 + $0x68] sm:$0xff]
      %v187 = vld [vmem:[%s165 + $0x70] sm:$0xff]
      %v188 = vld [vmem:[%s165 + $0x78] sm:$0xff]
      %v189 = vld [vmem:[%s165 + $0x80] sm:$0xff]
      %v190 = vld [vmem:[%s165 + $0x88] sm:$0xff]
      %v191 = vld [vmem:[%s165 + $0x90] sm:$0xff]
      %v192 = vld [vmem:[%s165 + $0x98] sm:$0xff]
      %v193 = vld [vmem:[%s165 + $0xa0] sm:$0xff]
      %v194 = vld [vmem:[%s165 + $0xa8] sm:$0xff]
      %v195 = vld [vmem:[%s165 + $0xb0] sm:$0xff]
      %v196 = vld [vmem:[%s165 + $0xb8] sm:$0xff]
      %v197 = vld [vmem:[%s165 + $0xc0] sm:$0xff]
      %v198 = vld [vmem:[%s165 + $0xc8] sm:$0xff]
      %v199 = vld [vmem:[%s165 + $0xd0] sm:$0xff]
      %v200 = vld [vmem:[%s165 + $0xd8] sm:$0xff]
      %v201 = vld [vmem:[%s165 + $0xe0] sm:$0xff]
      %v202 = vld [vmem:[%s165 + $0xe8] sm:$0xff]
      %v203 = vld [vmem:[%s165 + $0xf0] sm:$0xff]
      %v204 = vld [vmem:[%s165 + $0xf8] sm:$0xff]
      %v205 = vld [vmem:[%s165 + $0x100] sm:$0xff]
      %v206 = vld [vmem:[%s165 + $0x108] sm:$0xff]
      %v207 = vld [vmem:[%s165 + $0x110] sm:$0xff]
      %v208 = vld [vmem:[%s165 + $0x118] sm:$0xff]
      %v209 = vld [vmem:[%s2] sm:$0xff]
      %211 = vset.pattern.permute.xlu0 0
      %212 = vperm.xlu0 %211, %v209
      %v213 = vpop.permute.xlu0 %212
      %v251 = vunpack.c.l.b16 %v173
      %v252 = vunpack.c.h.b16 %v173
      %v253 = vunpack.c.l.b16 %v174
      %v254 = vunpack.c.h.b16 %v174
      %v255 = vunpack.c.l.b16 %v175
      %v256 = vunpack.c.h.b16 %v175
      %v257 = vunpack.c.l.b16 %v176
      %v258 = vunpack.c.h.b16 %v176
      %v259 = vunpack.c.l.b16 %v177
      %v260 = vunpack.c.h.b16 %v177
      %v261 = vunpack.c.l.b16 %v178
      %v262 = vunpack.c.h.b16 %v178
      %v263 = vunpack.c.l.b16 %v179
      %v264 = vunpack.c.h.b16 %v179
      %v265 = vunpack.c.l.b16 %v180
      %v266 = vunpack.c.h.b16 %v180
      %v267 = vunpack.c.l.b16 %v181
      %v268 = vunpack.c.h.b16 %v181
      %v269 = vunpack.c.l.b16 %v182
      %v270 = vunpack.c.h.b16 %v182
      %v271 = vunpack.c.l.b16 %v183
      %v272 = vunpack.c.h.b16 %v183
      %v273 = vunpack.c.l.b16 %v184
      %v274 = vunpack.c.h.b16 %v184
      %v275 = vunpack.c.l.b16 %v185
      %v276 = vunpack.c.h.b16 %v185
      %v277 = vunpack.c.l.b16 %v186
      %v278 = vunpack.c.h.b16 %v186
      %v279 = vunpack.c.l.b16 %v187
      %v280 = vunpack.c.h.b16 %v187
      %v281 = vunpack.c.l.b16 %v188
      %v282 = vunpack.c.h.b16 %v188
      %v283 = vunpack.c.l.b16 %v189
      %v284 = vunpack.c.h.b16 %v189
      %v285 = vunpack.c.l.b16 %v190
      %v286 = vunpack.c.h.b16 %v190
      %v287 = vunpack.c.l.b16 %v191
      %v288 = vunpack.c.h.b16 %v191
      %v289 = vunpack.c.l.b16 %v192
      %v290 = vunpack.c.h.b16 %v192
      %v291 = vunpack.c.l.b16 %v193
      %v292 = vunpack.c.h.b16 %v193
      %v293 = vunpack.c.l.b16 %v194
      %v294 = vunpack.c.h.b16 %v194
      %v295 = vunpack.c.l.b16 %v195
      %v296 = vunpack.c.h.b16 %v195
      %v297 = vunpack.c.l.b16 %v196
      %v298 = vunpack.c.h.b16 %v196
      %v299 = vunpack.c.l.b16 %v197
      %v300 = vunpack.c.h.b16 %v197
      %v301 = vunpack.c.l.b16 %v198
      %v302 = vunpack.c.h.b16 %v198
      %v303 = vunpack.c.l.b16 %v199
      %v304 = vunpack.c.h.b16 %v199
      %v305 = vunpack.c.l.b16 %v200
      %v306 = vunpack.c.h.b16 %v200
      %v307 = vunpack.c.l.b16 %v201
      %v308 = vunpack.c.h.b16 %v201
      %v309 = vunpack.c.l.b16 %v202
      %v310 = vunpack.c.h.b16 %v202
      %v311 = vunpack.c.l.b16 %v203
      %v312 = vunpack.c.h.b16 %v203
      %v313 = vunpack.c.l.b16 %v204
      %v314 = vunpack.c.h.b16 %v204
      %v315 = vunpack.c.l.b16 %v205
      %v316 = vunpack.c.h.b16 %v205
      %v317 = vunpack.c.l.b16 %v206
      %v318 = vunpack.c.h.b16 %v206
      %v319 = vunpack.c.l.b16 %v207
      %v320 = vunpack.c.h.b16 %v207
      %v321 = vunpack.c.l.b16 %v208
      %v322 = vunpack.c.h.b16 %v208
      %v323 = vpack.c.b16 %v259, %v251
      %v324 = vpack.c.b16 %v260, %v252
      %v325 = vpack.c.b16 %v261, %v253
      %v326 = vpack.c.b16 %v262, %v254
      %v327 = vpack.c.b16 %v263, %v255
      %v328 = vpack.c.b16 %v264, %v256
      %v329 = vpack.c.b16 %v265, %v257
      %v330 = vpack.c.b16 %v266, %v258
      %v331 = vpack.c.b16 %v275, %v267
      %v332 = vpack.c.b16 %v276, %v268
      %v333 = vpack.c.b16 %v277, %v269
      %v334 = vpack.c.b16 %v278, %v270
      %v335 = vpack.c.b16 %v279, %v271
      %v336 = vpack.c.b16 %v280, %v272
      %v337 = vpack.c.b16 %v281, %v273
      %v338 = vpack.c.b16 %v282, %v274
      %v339 = vpack.c.b16 %v291, %v283
      %v340 = vpack.c.b16 %v292, %v284
      %v341 = vpack.c.b16 %v293, %v285
      %v342 = vpack.c.b16 %v294, %v286
      %v343 = vpack.c.b16 %v295, %v287
      %v344 = vpack.c.b16 %v296, %v288
      %v345 = vpack.c.b16 %v297, %v289
      %v346 = vpack.c.b16 %v298, %v290
      %v347 = vpack.c.b16 %v307, %v299
      %v348 = vpack.c.b16 %v308, %v300
      %v349 = vpack.c.b16 %v309, %v301
      %v350 = vpack.c.b16 %v310, %v302
      %v351 = vpack.c.b16 %v311, %v303
      %v352 = vpack.c.b16 %v312, %v304
      %v353 = vpack.c.b16 %v313, %v305
      %v354 = vpack.c.b16 %v314, %v306
      %v355 = vpack.c.b16 %v315, %v315
      %v356 = vpack.c.b16 %v316, %v316
      %v357 = vpack.c.b16 %v317, %v317
      %v358 = vpack.c.b16 %v318, %v318
      %v359 = vpack.c.b16 %v319, %v319
      %v360 = vpack.c.b16 %v320, %v320
      %v361 = vpack.c.b16 %v321, %v321
      %v362 = vpack.c.b16 %v322, %v322
      %vm395 = vcmask 588800
      %v397 = vsel %vm395, %v172, 0
      %vm399 = vcmask 1043456
      %v401 = vsel %vm399, %v355, 0
      %v404 = vsel %vm399, %v356, 0
      %v407 = vsel %vm399, %v357, 0
      %v410 = vsel %vm399, %v358, 0
      %v413 = vsel %vm399, %v359, 0
      %v416 = vsel %vm399, %v360, 0
      %v419 = vsel %vm399, %v361, 0
      %v422 = vsel %vm399, %v362, 0
      %424 = vmatpush.bf16.msra.mxu0 0
      %425 = vmatpush.bf16.msra.mxu0 0
      %426 = vmatpush.bf16.msra.mxu0 0
      %427 = vmatpush.bf16.msra.mxu0 %v401
      %428 = vmatpush.bf16.msra.mxu0 %v347
      %429 = vmatpush.bf16.msra.mxu0 %v339
      %430 = vmatpush.bf16.msra.mxu0 %v331
      %431 = vmatpush.bf16.msra.mxu0 %v323
      %432 = vmatmul.bf16.gmra.mxu0 %v397
      %v433 = vpop.f32.mrf.mxu0
      %v434 = vadd.f32 %v213, %v433
      %v435 = vpop.f32.mrf.mxu0
      %436 = vdwg.mxu0
      %437 = vmatpush.bf16.msra.mxu0 0
      %438 = vmatpush.bf16.msra.mxu0 0
      %439 = vmatpush.bf16.msra.mxu0 0
      %440 = vmatpush.bf16.msra.mxu0 %v404
      %441 = vmatpush.bf16.msra.mxu0 %v348
      %442 = vmatpush.bf16.msra.mxu0 %v340
      %443 = vmatpush.bf16.msra.mxu0 %v332
      %444 = vmatpush.bf16.msra.mxu0 %v324
      %445 = vmatmul.bf16.gmra.mxu0 %v397
      %v446 = vpop.f32.mrf.mxu0
      %v447 = vadd.f32 %v213, %v446
      %v448 = vpop.f32.mrf.mxu0
      %449 = vdwg.mxu0
      %450 = vmatpush.bf16.msra.mxu0 0
      %451 = vmatpush.bf16.msra.mxu0 0
      %452 = vmatpush.bf16.msra.mxu0 0
      %453 = vmatpush.bf16.msra.mxu0 %v407
      %454 = vmatpush.bf16.msra.mxu0 %v349
      %455 = vmatpush.bf16.msra.mxu0 %v341
      %456 = vmatpush.bf16.msra.mxu0 %v333
      %457 = vmatpush.bf16.msra.mxu0 %v325
      %458 = vmatmul.bf16.gmra.mxu0 %v397
      %v459 = vpop.f32.mrf.mxu0
      %v460 = vadd.f32 %v213, %v459
      %v461 = vpop.f32.mrf.mxu0
      %462 = vdwg.mxu0
      %463 = vmatpush.bf16.msra.mxu0 0
      %464 = vmatpush.bf16.msra.mxu0 0
      %465 = vmatpush.bf16.msra.mxu0 0
      %466 = vmatpush.bf16.msra.mxu0 %v410
      %467 = vmatpush.bf16.msra.mxu0 %v350
      %468 = vmatpush.bf16.msra.mxu0 %v342
      %469 = vmatpush.bf16.msra.mxu0 %v334
      %470 = vmatpush.bf16.msra.mxu0 %v326
      %471 = vmatmul.bf16.gmra.mxu0 %v397
      %v472 = vpop.f32.mrf.mxu0
      %v473 = vadd.f32 %v213, %v472
      %v474 = vpop.f32.mrf.mxu0
      %475 = vdwg.mxu0
      %476 = vmatpush.bf16.msra.mxu0 0
      %477 = vmatpush.bf16.msra.mxu0 0
      %478 = vmatpush.bf16.msra.mxu0 0
      %479 = vmatpush.bf16.msra.mxu0 %v413
      %480 = vmatpush.bf16.msra.mxu0 %v351
      %481 = vmatpush.bf16.msra.mxu0 %v343
      %482 = vmatpush.bf16.msra.mxu0 %v335
      %483 = vmatpush.bf16.msra.mxu0 %v327
      %484 = vmatmul.bf16.gmra.mxu0 %v397
      %v485 = vpop.f32.mrf.mxu0
      %v486 = vadd.f32 %v213, %v485
      %v487 = vpop.f32.mrf.mxu0
      %488 = vdwg.mxu0
      %489 = vmatpush.bf16.msra.mxu0 0
      %490 = vmatpush.bf16.msra.mxu0 0
      %491 = vmatpush.bf16.msra.mxu0 0
      %492 = vmatpush.bf16.msra.mxu0 %v416
      %493 = vmatpush.bf16.msra.mxu0 %v352
      %494 = vmatpush.bf16.msra.mxu0 %v344
      %495 = vmatpush.bf16.msra.mxu0 %v336
      %496 = vmatpush.bf16.msra.mxu0 %v328
      %497 = vmatmul.bf16.gmra.mxu0 %v397
      %v498 = vpop.f32.mrf.mxu0
      %v499 = vadd.f32 %v213, %v498
      %v500 = vpop.f32.mrf.mxu0
      %501 = vdwg.mxu0
      %502 = vmatpush.bf16.msra.mxu0 0
      %503 = vmatpush.bf16.msra.mxu0 0
      %504 = vmatpush.bf16.msra.mxu0 0
      %505 = vmatpush.bf16.msra.mxu0 %v419
      %506 = vmatpush.bf16.msra.mxu0 %v353
      %507 = vmatpush.bf16.msra.mxu0 %v345
      %508 = vmatpush.bf16.msra.mxu0 %v337
      %509 = vmatpush.bf16.msra.mxu0 %v329
      %510 = vmatmul.bf16.gmra.mxu0 %v397
      %v511 = vpop.f32.mrf.mxu0
      %v512 = vadd.f32 %v213, %v511
      %v513 = vpop.f32.mrf.mxu0
      %514 = vdwg.mxu0
      %515 = vmatpush.bf16.msra.mxu0 0
      %516 = vmatpush.bf16.msra.mxu0 0
      %517 = vmatpush.bf16.msra.mxu0 0
      %518 = vmatpush.bf16.msra.mxu0 %v422
      %519 = vmatpush.bf16.msra.mxu0 %v354
      %520 = vmatpush.bf16.msra.mxu0 %v346
      %521 = vmatpush.bf16.msra.mxu0 %v338
      %522 = vmatpush.bf16.msra.mxu0 %v330
      %523 = vmatmul.bf16.gmra.mxu0 %v397
      %v524 = vpop.f32.mrf.mxu0
      %v525 = vadd.f32 %v213, %v524
      %v526 = vpop.f32.mrf.mxu0
      %527 = vdwg.mxu0
      %v528 = vmax.f32 %v434, 0.0
      %v529 = vmax.f32 %v447, 0.0
      %v530 = vmax.f32 %v460, 0.0
      %v531 = vmax.f32 %v473, 0.0
      %v532 = vmax.f32 %v486, 0.0
      %v533 = vmax.f32 %v499, 0.0
      %v534 = vmax.f32 %v512, 0.0
      %v535 = vmax.f32 %v525, 0.0
      %v536 = vpack.c.bf16 %v529, %v528
      %v537 = vpack.c.bf16 %v531, %v530
      %v538 = vpack.c.bf16 %v533, %v532
      %v539 = vpack.c.bf16 %v535, %v534
      %540 = vst [vmem:[%s170] sm:$0xff] %v536
      %541 = vst [vmem:[%s170 + $0x8] sm:$0xff] %v537
      %542 = vst [vmem:[%s170 + $0x10] sm:$0xff] %v538
      %543 = vst [vmem:[%s170 + $0x18] sm:$0xff] %v539
      %p544 = scmp.lt.s32.totalorder %s14, 1
      %s545 = scalar_select %p544, %s14, 1
      %s546 = smul.addr %s545, 8
      %s547 = smul.addr %s546, 4
      %s548 = scalar_lea.vmem %s3, %s547
      // Predicated region
      $region33: #{tiny_vgg_forward.7} parent=31 // pred_check
        %p549 = pneg %p100
      $region34: #{tiny_vgg_forward.7} parent=31 // pred_check_branch
        %551 = sbr.rel (%p549) target = $region36
      $region35: #{tiny_vgg_forward.7} parent=31 // pred_region
        _
      $region36: #{tiny_vgg_forward.7} parent=31 // pred_fallthru
        _
    $region32: #{tiny_vgg_forward.7} parent=5 // pred_fallthru
      _
    %p552 = scmp.le.s32.totalorder 2, %s9
    // Predicated region
    $region37: #{tiny_vgg_forward.7} parent=5 // pred_check
      %p553 = pneg %p552
    $region38: #{tiny_vgg_forward.7} parent=5 // pred_check_branch
      %555 = sbr.rel (%p553) target = $region40
    $region39: #{tiny_vgg_forward.7} parent=5 // pred_region
      %s556 = ssub.s32 %s9, 2
      // Predicated region
      $region41: #{tiny_vgg_forward.7} parent=39 // pred_check
        %p557 = pneg %p106
      $region42: #{tiny_vgg_forward.7} parent=39 // pred_check_branch
        %559 = sbr.rel (%p557) target = $region44
      $region43: #{tiny_vgg_forward.7} parent=39 // pred_region
        %p560 = scmp.lt.s32.totalorder %s15, 1
        %s561 = scalar_select %p560, %s15, 1
        %s562 = smul.addr %s561, 8
        %s563 = smul.addr %s562, 4
        %s564 = scalar_lea.vmem %s3, %s563
      $region44: #{tiny_vgg_forward.7} parent=39 // pred_fallthru
        _
    $region40: #{tiny_vgg_forward.7} parent=5 // pred_fallthru
      _
  $region6: #{tiny_vgg_forward.7} parent=0 // loop_footer
    %s13 = sadd.s32 1, %s9
  $region7: #{tiny_vgg_forward.7} parent=0 // loop_footer_branch
    %8 = sbr.rel target = $region3
  $region8: #{tiny_vgg_forward.7} parent=0 // loop_exit
    _

// kernel: tiny_vgg_forward.8
$region0: #{tiny_vgg_forward.8}
  #allocation0 [shape = 'u32[]', space=smem, size = 0x4, offset = 0x4, fixed_abs, tag = 'smem constant byte address 0x4 - core index']
  #allocation1 [shape = 'u32[72,128]{1,0:T(1,128)}', space=vmem, size = 0x9000, scoped, tag = 'internal scratch']
  %s0 = inlined_call_operand.vmem [shape: bf16[2,72,1024], index: 0, kind: input, shape index: {}]
  %s1 = inlined_call_operand.vmem [shape: bf16[8,72], index: 1, kind: input, shape index: {}]
  %s2 = inlined_call_operand.vmem [shape: f32[8,1], index: 2, kind: input, shape index: {}]
  %s3 = inlined_call_operand.vmem [shape: bf16[2,8,256], index: 3, kind: output, shape index: {}]
  %s4 = sld [smem:[#allocation0]]
  $region45: #{tiny_vgg_forward.8} parent=0
    _
  %s6 = ssub.s32 1, %s4
  %s7 = scalar_select 0, %s6, %s4
  loop: start=0, step=1, limit=4
  $region2: #{tiny_vgg_forward.8} parent=0 // loop_pre_header
    _
  $region3: #{tiny_vgg_forward.8} parent=0 // loop_header
    %s9 = sphi 0, %s13
    %p10 = scmp.ge.s32.totalorder %s9, 4
    %s19 = sphi 0, %s21
    %s22 = sphi 0, %s19
    %s23 = sphi 0, %s22
    %s39 = sphi 0, %s23
    %s43 = sphi 0, %s43
    %s45 = sphi 0, %s43
    %s46 = sphi 0, %s45
    %s60 = sphi 0, %s46
    %s64 = sphi 0, %s64
    %s66 = sphi 0, %s64
    %s67 = sphi 0, %s66
    %s81 = sphi 0, %s67
    %s87 = sphi 0, %s89
    %s90 = sphi 0, %s87
    %s91 = sphi 0, %s90
    %s107 = sphi 0, %s91
  $region4: #{tiny_vgg_forward.8} parent=0 // loop_header_branch
    %12 = sbr.rel (%p10) target = $region8
  $region5: #{tiny_vgg_forward.8} parent=0 // loop_body
    %s14 = ssub.s32 %s9, 1
    %s15 = ssub.s32 %s9, 2
    %s16 = sadd.s32 %s9, 1
    %s17 = ssub.s32 %s9, %s16
    %p18 = scmp.eq.s32.totalorder %s17, 0
    %s20 = sadd.s32 %s19, 1
    %s21 = scalar_select %p18, %s19, %s20
    %p24 = pneg %p18
    %p25 = scmp.eq.s32.totalorder %s9, 1
    %p26 = por %p24, %p25
    %p27 = scmp.ne.s32.totalorder %s19, %s22
    %p28 = scmp.eq.s32.totalorder %s9, 0
    %p29 = por %p27, %p28
    %p30 = scmp.ne.s32.totalorder %s19, %s22
    %p31 = scmp.eq.s32.totalorder %s14, 1
    %p32 = por %p30, %p31
    %p33 = scmp.ne.s32.totalorder %s22, %s23
    %p34 = scmp.eq.s32.totalorder %s14, 0
    %p35 = por %p33, %p34
    %p36 = scmp.ne.s32.totalorder %s22, %s23
    %p37 = scmp.eq.s32.totalorder %s15, 1
    %p38 = por %p36, %p37
    %p40 = scmp.ne.s32.totalorder %s23, %s39
    %p41 = scmp.eq.s32.totalorder %s15, 0
    %p42 = por %p40, %p41
    %s44 = sadd.s32 %s43, 1
    %p47 = scmp.eq.s32.totalorder %s9, 1
    %p48 = scmp.ne.s32.totalorder %s43, %s45
    %p49 = scmp.eq.s32.totalorder %s9, 0
    %p50 = por %p48, %p49
    %p51 = scmp.ne.s32.totalorder %s43, %s45
    %p52 = scmp.eq.s32.totalorder %s14, 1
    %p53 = por %p51, %p52
    %p54 = scmp.ne.s32.totalorder %s45, %s46
    %p55 = scmp.eq.s32.totalorder %s14, 0
    %p56 = por %p54, %p55
    %p57 = scmp.ne.s32.totalorder %s45, %s46
    %p58 = scmp.eq.s32.totalorder %s15, 1
    %p59 = por %p57, %p58
    %p61 = scmp.ne.s32.totalorder %s46, %s60
    %p62 = scmp.eq.s32.totalorder %s15, 0
    %p63 = por %p61, %p62
    %s65 = sadd.s32 %s64, 1
    %p68 = scmp.eq.s32.totalorder %s9, 1
    %p69 = scmp.ne.s32.totalorder %s64, %s66
    %p70 = scmp.eq.s32.totalorder %s9, 0
    %p71 = por %p69, %p70
    %p72 = scmp.ne.s32.totalorder %s64, %s66
    %p73 = scmp.eq.s32.totalorder %s14, 1
    %p74 = por %p72, %p73
    %p75 = scmp.ne.s32.totalorder %s66, %s67
    %p76 = scmp.eq.s32.totalorder %s14, 0
    %p77 = por %p75, %p76
    %p78 = scmp.ne.s32.totalorder %s66, %s67
    %p79 = scmp.eq.s32.totalorder %s15, 1
    %p80 = por %p78, %p79
    %p82 = scmp.ne.s32.totalorder %s67, %s81
    %p83 = scmp.eq.s32.totalorder %s15, 0
    %p84 = por %p82, %p83
    %s85 = ssub.s32 %s9, %s16
    %p86 = scmp.eq.s32.totalorder %s85, 0
    %s88 = sadd.s32 %s87, 1
    %s89 = scalar_select %p86, %s87, %s88
    %p92 = pneg %p86
    %p93 = scmp.eq.s32.totalorder %s9, 1
    %p94 = por %p92, %p93
    %p95 = scmp.ne.s32.totalorder %s87, %s90
    %p96 = scmp.eq.s32.totalorder %s9, 0
    %p97 = por %p95, %p96
    %p98 = scmp.ne.s32.totalorder %s87, %s90
    %p99 = scmp.eq.s32.totalorder %s14, 1
    %p100 = por %p98, %p99
    %p101 = scmp.ne.s32.totalorder %s90, %s91
    %p102 = scmp.eq.s32.totalorder %s14, 0
    %p103 = por %p101, %p102
    %p104 = scmp.ne.s32.totalorder %s90, %s91
    %p105 = scmp.eq.s32.totalorder %s15, 1
    %p106 = por %p104, %p105
    %p108 = scmp.ne.s32.totalorder %s91, %s107
    %p109 = scmp.eq.s32.totalorder %s15, 0
    %p110 = por %p108, %p109
    %p111 = scmp.le.s32.totalorder 1, %s9
    %p112 = scmp.lt.s32.totalorder %s9, 3
    %p113 = pnand %p111, %p112
    %p114 = pneg %p113
    // Predicated region
    $region9: #{tiny_vgg_forward.8} parent=5 // pred_check
      _
    $region10: #{tiny_vgg_forward.8} parent=5 // pred_check_branch
      %116 = sbr.rel (%p113) target = $region12
    $region11: #{tiny_vgg_forward.8} parent=5 // pred_region
      %s117 = ssub.s32 %s9, 1
      // Predicated region
      $region13: #{tiny_vgg_forward.8} parent=11 // pred_check
        %p118 = pneg %p56
      $region14: #{tiny_vgg_forward.8} parent=11 // pred_check_branch
        %120 = sbr.rel (%p118) target = $region16
      $region15: #{tiny_vgg_forward.8} parent=11 // pred_region
        _
      $region16: #{tiny_vgg_forward.8} parent=11 // pred_fallthru
        _
      // Predicated region
      $region17: #{tiny_vgg_forward.8} parent=11 // pred_check
        %p121 = pneg %p77
      $region18: #{tiny_vgg_forward.8} parent=11 // pred_check_branch
        %123 = sbr.rel (%p121) target = $region20
      $region19: #{tiny_vgg_forward.8} parent=11 // pred_region
        _
      $region20: #{tiny_vgg_forward.8} parent=11 // pred_fallthru
        _
    $region12: #{tiny_vgg_forward.8} parent=5 // pred_fallthru
      _
    %p124 = scmp.lt.s32.totalorder %s9, 2
    // Predicated region
    $region21: #{tiny_vgg_forward.8} parent=5 // pred_check
      %p125 = pneg %p124
    $region22: #{tiny_vgg_forward.8} parent=5 // pred_check_branch
      %127 = sbr.rel (%p125) target = $region24
    $region23: #{tiny_vgg_forward.8} parent=5 // pred_region
      // Predicated region
      $region25: #{tiny_vgg_forward.8} parent=23 // pred_check
        %p128 = pneg %p29
      $region26: #{tiny_vgg_forward.8} parent=23 // pred_check_branch
        %130 = sbr.rel (%p128) target = $region28
      $region27: #{tiny_vgg_forward.8} parent=23 // pred_region
        %p131 = scmp.lt.s32.totalorder %s9, 1
        %s132 = scalar_select %p131, %s9, 1
        %s133 = smul.addr %s132, 72
        %s134 = smul.addr %s133, 4
        %s135 = scalar_lea.vmem %s0, %s134
      $region28: #{tiny_vgg_forward.8} parent=23 // pred_fallthru
        _
    $region24: #{tiny_vgg_forward.8} parent=5 // pred_fallthru
      _
    %p136 = scmp.le.s32.totalorder 1, %s9
    %p137 = scmp.lt.s32.totalorder %s9, 3
    %p138 = pnand %p136, %p137
    %p139 = pneg %p138
    // Predicated region
    $region29: #{tiny_vgg_forward.8} parent=5 // pred_check
      _
    $region30: #{tiny_vgg_forward.8} parent=5 // pred_check_branch
      %141 = sbr.rel (%p138) target = $region32
    $region31: #{tiny_vgg_forward.8} parent=5 // pred_region
      %s142 = ssub.s32 %s9, 1
      %p143 = scmp.lt.s32.totalorder %s14, 1
      %s144 = scalar_select %p143, %s14, 1
      %s145 = smul.addr %s144, 72
      %s146 = smul.addr %s145, 4
      %s147 = scalar_lea.vmem %s0, %s146
      %p148 = pneg %p35
      %p149 = pneg %p32
      %p150 = pneg %p56
      %p151 = pneg %p53
      %p152 = pneg %p77
      %p153 = pneg %p74
      %p154 = pneg %p103
      %p155 = pneg %p100
      %p156 = scmp.lt.s32.totalorder %s14, 1
      %s157 = scalar_select %p156, %s14, 1
      %s158 = smul.addr %s157, 2
      %s159 = smul.addr %s158, 4
      %s160 = scalar_lea.vmem %s3, %s159
      %p161 = scmp.lt.s32.totalorder %s14, 1
      %s162 = scalar_select %p161, %s14, 1
      %s163 = smul.addr %s162, 72
      %s164 = smul.addr %s163, 4
      %s165 = scalar_lea.vmem %s0, %s164
      %p166 = scmp.lt.s32.totalorder %s14, 1
      %s167 = scalar_select %p166, %s14, 1
      %s168 = smul.addr %s167, 2
      %s169 = smul.addr %s168, 4
      %s170 = scalar_lea.vmem %s3, %s169
      %v172 = vld [vmem:[%s1] sm:$0xf]
      %v173 = vld [vmem:[%s165] sm:$0xff]
      %v174 = vld [vmem:[%s165 + $0x8] sm:$0xff]
      %v175 = vld [vmem:[%s165 + $0x10] sm:$0xff]
      %v176 = vld [vmem:[%s165 + $0x18] sm:$0xff]
      %v177 = vld [vmem:[%s165 + $0x20] sm:$0xff]
      %v178 = vld [vmem:[%s165 + $0x28] sm:$0xff]
      %v179 = vld [vmem:[%s165 + $0x30] sm:$0xff]
      %v180 = vld [vmem:[%s165 + $0x38] sm:$0xff]
      %v181 = vld [vmem:[%s165 + $0x40] sm:$0xff]
      %v182 = vld [vmem:[%s165 + $0x48] sm:$0xff]
      %v183 = vld [vmem:[%s165 + $0x50] sm:$0xff]
      %v184 = vld [vmem:[%s165 + $0x58] sm:$0xff]
      %v185 = vld [vmem:[%s165 + $0x60] sm:$0xff]
      %v186 = vld [vmem:[%s165 + $0x68] sm:$0xff]
      %v187 = vld [vmem:[%s165 + $0x70] sm:$0xff]
      %v188 = vld [vmem:[%s165 + $0x78] sm:$0xff]
      %v189 = vld [vmem:[%s165 + $0x80] sm:$0xff]
      %v190 = vld [vmem:[%s165 + $0x88] sm:$0xff]
      %v191 = vld [vmem:[%s165 + $0x90] sm:$0xff]
      %v192 = vld [vmem:[%s165 + $0x98] sm:$0xff]
      %v193 = vld [vmem:[%s165 + $0xa0] sm:$0xff]
      %v194 = vld [vmem:[%s165 + $0xa8] sm:$0xff]
      %v195 = vld [vmem:[%s165 + $0xb0] sm:$0xff]
      %v196 = vld [vmem:[%s165 + $0xb8] sm:$0xff]
      %v197 = vld [vmem:[%s165 + $0xc0] sm:$0xff]
      %v198 = vld [vmem:[%s165 + $0xc8] sm:$0xff]
      %v199 = vld [vmem:[%s165 + $0xd0] sm:$0xff]
      %v200 = vld [vmem:[%s165 + $0xd8] sm:$0xff]
      %v201 = vld [vmem:[%s165 + $0xe0] sm:$0xff]
      %v202 = vld [vmem:[%s165 + $0xe8] sm:$0xff]
      %v203 = vld [vmem:[%s165 + $0xf0] sm:$0xff]
      %v204 = vld [vmem:[%s165 + $0xf8] sm:$0xff]
      %v205 = vld [vmem:[%s165 + $0x100] sm:$0xff]
      %v206 = vld [vmem:[%s165 + $0x108] sm:$0xff]
      %v207 = vld [vmem:[%s165 + $0x110] sm:$0xff]
      %v208 = vld [vmem:[%s165 + $0x118] sm:$0xff]
      %v209 = vld [vmem:[%s2] sm:$0xff]
      %211 = vset.pattern.permute.xlu0 0
      %212 = vperm.xlu0 %211, %v209
      %v213 = vpop.permute.xlu0 %212
      %v251 = vunpack.c.l.b16 %v173
      %v252 = vunpack.c.h.b16 %v173
      %v253 = vunpack.c.l.b16 %v174
      %v254 = vunpack.c.h.b16 %v174
      %v255 = vunpack.c.l.b16 %v175
      %v256 = vunpack.c.h.b16 %v175
      %v257 = vunpack.c.l.b16 %v176
      %v258 = vunpack.c.h.b16 %v176
      %v259 = vunpack.c.l.b16 %v177
      %v260 = vunpack.c.h.b16 %v177
      %v261 = vunpack.c.l.b16 %v178
      %v262 = vunpack.c.h.b16 %v178
      %v263 = vunpack.c.l.b16 %v179
      %v264 = vunpack.c.h.b16 %v179
      %v265 = vunpack.c.l.b16 %v180
      %v266 = vunpack.c.h.b16 %v180
      %v267 = vunpack.c.l.b16 %v181
      %v268 = vunpack.c.h.b16 %v181
      %v269 = vunpack.c.l.b16 %v182
      %v270 = vunpack.c.h.b16 %v182
      %v271 = vunpack.c.l.b16 %v183
      %v272 = vunpack.c.h.b16 %v183
      %v273 = vunpack.c.l.b16 %v184
      %v274 = vunpack.c.h.b16 %v184
      %v275 = vunpack.c.l.b16 %v185
      %v276 = vunpack.c.h.b16 %v185
      %v277 = vunpack.c.l.b16 %v186
      %v278 = vunpack.c.h.b16 %v186
      %v279 = vunpack.c.l.b16 %v187
      %v280 = vunpack.c.h.b16 %v187
      %v281 = vunpack.c.l.b16 %v188
      %v282 = vunpack.c.h.b16 %v188
      %v283 = vunpack.c.l.b16 %v189
      %v284 = vunpack.c.h.b16 %v189
      %v285 = vunpack.c.l.b16 %v190
      %v286 = vunpack.c.h.b16 %v190
      %v287 = vunpack.c.l.b16 %v191
      %v288 = vunpack.c.h.b16 %v191
      %v289 = vunpack.c.l.b16 %v192
      %v290 = vunpack.c.h.b16 %v192
      %v291 = vunpack.c.l.b16 %v193
      %v292 = vunpack.c.h.b16 %v193
      %v293 = vunpack.c.l.b16 %v194
      %v294 = vunpack.c.h.b16 %v194
      %v295 = vunpack.c.l.b16 %v195
      %v296 = vunpack.c.h.b16 %v195
      %v297 = vunpack.c.l.b16 %v196
      %v298 = vunpack.c.h.b16 %v196
      %v299 = vunpack.c.l.b16 %v197
      %v300 = vunpack.c.h.b16 %v197
      %v301 = vunpack.c.l.b16 %v198
      %v302 = vunpack.c.h.b16 %v198
      %v303 = vunpack.c.l.b16 %v199
      %v304 = vunpack.c.h.b16 %v199
      %v305 = vunpack.c.l.b16 %v200
      %v306 = vunpack.c.h.b16 %v200
      %v307 = vunpack.c.l.b16 %v201
      %v308 = vunpack.c.h.b16 %v201
      %v309 = vunpack.c.l.b16 %v202
      %v310 = vunpack.c.h.b16 %v202
      %v311 = vunpack.c.l.b16 %v203
      %v312 = vunpack.c.h.b16 %v203
      %v313 = vunpack.c.l.b16 %v204
      %v314 = vunpack.c.h.b16 %v204
      %v315 = vunpack.c.l.b16 %v205
      %v316 = vunpack.c.h.b16 %v205
      %v317 = vunpack.c.l.b16 %v206
      %v318 = vunpack.c.h.b16 %v206
      %v319 = vunpack.c.l.b16 %v207
      %v320 = vunpack.c.h.b16 %v207
      %v321 = vunpack.c.l.b16 %v208
      %v322 = vunpack.c.h.b16 %v208
      %v323 = vpack.c.b16 %v259, %v251
      %v324 = vpack.c.b16 %v260, %v252
      %v325 = vpack.c.b16 %v261, %v253
      %v326 = vpack.c.b16 %v262, %v254
      %v327 = vpack.c.b16 %v263, %v255
      %v328 = vpack.c.b16 %v264, %v256
      %v329 = vpack.c.b16 %v265, %v257
      %v330 = vpack.c.b16 %v266, %v258
      %v331 = vpack.c.b16 %v275, %v267
      %v332 = vpack.c.b16 %v276, %v268
      %v333 = vpack.c.b16 %v277, %v269
      %v334 = vpack.c.b16 %v278, %v270
      %v335 = vpack.c.b16 %v279, %v271
      %v336 = vpack.c.b16 %v280, %v272
      %v337 = vpack.c.b16 %v281, %v273
      %v338 = vpack.c.b16 %v282, %v274
      %v339 = vpack.c.b16 %v291, %v283
      %v340 = vpack.c.b16 %v292, %v284
      %v341 = vpack.c.b16 %v293, %v285
      %v342 = vpack.c.b16 %v294, %v286
      %v343 = vpack.c.b16 %v295, %v287
      %v344 = vpack.c.b16 %v296, %v288
      %v345 = vpack.c.b16 %v297, %v289
      %v346 = vpack.c.b16 %v298, %v290
      %v347 = vpack.c.b16 %v307, %v299
      %v348 = vpack.c.b16 %v308, %v300
      %v349 = vpack.c.b16 %v309, %v301
      %v350 = vpack.c.b16 %v310, %v302
      %v351 = vpack.c.b16 %v311, %v303
      %v352 = vpack.c.b16 %v312, %v304
      %v353 = vpack.c.b16 %v313, %v305
      %v354 = vpack.c.b16 %v314, %v306
      %v355 = vpack.c.b16 %v315, %v315
      %v356 = vpack.c.b16 %v316, %v316
      %v357 = vpack.c.b16 %v317, %v317
      %v358 = vpack.c.b16 %v318, %v318
      %v359 = vpack.c.b16 %v319, %v319
      %v360 = vpack.c.b16 %v320, %v320
      %v361 = vpack.c.b16 %v321, %v321
      %v362 = vpack.c.b16 %v322, %v322
      %vm395 = vcmask 588800
      %v397 = vsel %vm395, %v172, 0
      %vm399 = vcmask 1043456
      %v401 = vsel %vm399, %v355, 0
      %v404 = vsel %vm399, %v356, 0
      %v407 = vsel %vm399, %v357, 0
      %v410 = vsel %vm399, %v358, 0
      %v413 = vsel %vm399, %v359, 0
      %v416 = vsel %vm399, %v360, 0
      %v419 = vsel %vm399, %v361, 0
      %v422 = vsel %vm399, %v362, 0
      %424 = vmatpush.bf16.msra.mxu0 0
      %425 = vmatpush.bf16.msra.mxu0 0
      %426 = vmatpush.bf16.msra.mxu0 0
      %427 = vmatpush.bf16.msra.mxu0 %v401
      %428 = vmatpush.bf16.msra.mxu0 %v347
      %429 = vmatpush.bf16.msra.mxu0 %v339
      %430 = vmatpush.bf16.msra.mxu0 %v331
      %431 = vmatpush.bf16.msra.mxu0 %v323
      %432 = vmatmul.bf16.gmra.mxu0 %v397
      %v433 = vpop.f32.mrf.mxu0
      %v434 = vadd.f32 %v213, %v433
      %v435 = vpop.f32.mrf.mxu0
      %436 = vdwg.mxu0
      %437 = vmatpush.bf16.msra.mxu0 0
      %438 = vmatpush.bf16.msra.mxu0 0
      %439 = vmatpush.bf16.msra.mxu0 0
      %440 = vmatpush.bf16.msra.mxu0 %v404
      %441 = vmatpush.bf16.msra.mxu0 %v348
      %442 = vmatpush.bf16.msra.mxu0 %v340
      %443 = vmatpush.bf16.msra.mxu0 %v332
      %444 = vmatpush.bf16.msra.mxu0 %v324
      %445 = vmatmul.bf16.gmra.mxu0 %v397
      %v446 = vpop.f32.mrf.mxu0
      %v447 = vadd.f32 %v213, %v446
      %v448 = vpop.f32.mrf.mxu0
      %449 = vdwg.mxu0
      %450 = vmatpush.bf16.msra.mxu0 0
      %451 = vmatpush.bf16.msra.mxu0 0
      %452 = vmatpush.bf16.msra.mxu0 0
      %453 = vmatpush.bf16.msra.mxu0 %v407
      %454 = vmatpush.bf16.msra.mxu0 %v349
      %455 = vmatpush.bf16.msra.mxu0 %v341
      %456 = vmatpush.bf16.msra.mxu0 %v333
      %457 = vmatpush.bf16.msra.mxu0 %v325
      %458 = vmatmul.bf16.gmra.mxu0 %v397
      %v459 = vpop.f32.mrf.mxu0
      %v460 = vadd.f32 %v213, %v459
      %v461 = vpop.f32.mrf.mxu0
      %462 = vdwg.mxu0
      %463 = vmatpush.bf16.msra.mxu0 0
      %464 = vmatpush.bf16.msra.mxu0 0
      %465 = vmatpush.bf16.msra.mxu0 0
      %466 = vmatpush.bf16.msra.mxu0 %v410
      %467 = vmatpush.bf16.msra.mxu0 %v350
      %468 = vmatpush.bf16.msra.mxu0 %v342
      %469 = vmatpush.bf16.msra.mxu0 %v334
      %470 = vmatpush.bf16.msra.mxu0 %v326
      %471 = vmatmul.bf16.gmra.mxu0 %v397
      %v472 = vpop.f32.mrf.mxu0
      %v473 = vadd.f32 %v213, %v472
      %v474 = vpop.f32.mrf.mxu0
      %475 = vdwg.mxu0
      %476 = vmatpush.bf16.msra.mxu0 0
      %477 = vmatpush.bf16.msra.mxu0 0
      %478 = vmatpush.bf16.msra.mxu0 0
      %479 = vmatpush.bf16.msra.mxu0 %v413
      %480 = vmatpush.bf16.msra.mxu0 %v351
      %481 = vmatpush.bf16.msra.mxu0 %v343
      %482 = vmatpush.bf16.msra.mxu0 %v335
      %483 = vmatpush.bf16.msra.mxu0 %v327
      %484 = vmatmul.bf16.gmra.mxu0 %v397
      %v485 = vpop.f32.mrf.mxu0
      %v486 = vadd.f32 %v213, %v485
      %v487 = vpop.f32.mrf.mxu0
      %488 = vdwg.mxu0
      %489 = vmatpush.bf16.msra.mxu0 0
      %490 = vmatpush.bf16.msra.mxu0 0
      %491 = vmatpush.bf16.msra.mxu0 0
      %492 = vmatpush.bf16.msra.mxu0 %v416
      %493 = vmatpush.bf16.msra.mxu0 %v352
      %494 = vmatpush.bf16.msra.mxu0 %v344
      %495 = vmatpush.bf16.msra.mxu0 %v336
      %496 = vmatpush.bf16.msra.mxu0 %v328
      %497 = vmatmul.bf16.gmra.mxu0 %v397
      %v498 = vpop.f32.mrf.mxu0
      %v499 = vadd.f32 %v213, %v498
      %v500 = vpop.f32.mrf.mxu0
      %501 = vdwg.mxu0
      %502 = vmatpush.bf16.msra.mxu0 0
      %503 = vmatpush.bf16.msra.mxu0 0
      %504 = vmatpush.bf16.msra.mxu0 0
      %505 = vmatpush.bf16.msra.mxu0 %v419
      %506 = vmatpush.bf16.msra.mxu0 %v353
      %507 = vmatpush.bf16.msra.mxu0 %v345
      %508 = vmatpush.bf16.msra.mxu0 %v337
      %509 = vmatpush.bf16.msra.mxu0 %v329
      %510 = vmatmul.bf16.gmra.mxu0 %v397
      %v511 = vpop.f32.mrf.mxu0
      %v512 = vadd.f32 %v213, %v511
      %v513 = vpop.f32.mrf.mxu0
      %514 = vdwg.mxu0
      %515 = vmatpush.bf16.msra.mxu0 0
      %516 = vmatpush.bf16.msra.mxu0 0
      %517 = vmatpush.bf16.msra.mxu0 0
      %518 = vmatpush.bf16.msra.mxu0 %v422
      %519 = vmatpush.bf16.msra.mxu0 %v354
      %520 = vmatpush.bf16.msra.mxu0 %v346
      %521 = vmatpush.bf16.msra.mxu0 %v338
      %522 = vmatpush.bf16.msra.mxu0 %v330
      %523 = vmatmul.bf16.gmra.mxu0 %v397
      %v524 = vpop.f32.mrf.mxu0
      %v525 = vadd.f32 %v213, %v524
      %v526 = vpop.f32.mrf.mxu0
      %527 = vdwg.mxu0
      %v528 = vmax.f32 %v434, 0.0
      %v529 = vmax.f32 %v447, 0.0
      %v530 = vmax.f32 %v460, 0.0
      %v531 = vmax.f32 %v473, 0.0
      %v532 = vmax.f32 %v486, 0.0
      %v533 = vmax.f32 %v499, 0.0
      %v534 = vmax.f32 %v512, 0.0
      %v535 = vmax.f32 %v525, 0.0
      %v536 = vmax.f32 %v528, %v530
      %v537 = vmax.f32 %v529, %v531
      %v538 = vmax.f32 %v532, %v534
      %v539 = vmax.f32 %v533, %v535
      %v540 = vmax.f32 %v536, %v538
      %v541 = vmax.f32 %v537, %v539
      %v542 = vpack.c.bf16 %v541, %v540
      %543 = vst [vmem:[%s170] sm:$0xff] %v542
      %p544 = scmp.lt.s32.totalorder %s14, 1
      %s545 = scalar_select %p544, %s14, 1
      %s546 = smul.addr %s545, 2
      %s547 = smul.addr %s546, 4
      %s548 = scalar_lea.vmem %s3, %s547
      // Predicated region
      $region33: #{tiny_vgg_forward.8} parent=31 // pred_check
        %p549 = pneg %p100
      $region34: #{tiny_vgg_forward.8} parent=31 // pred_check_branch
        %551 = sbr.rel (%p549) target = $region36
      $region35: #{tiny_vgg_forward.8} parent=31 // pred_region
        _
      $region36: #{tiny_vgg_forward.8} parent=31 // pred_fallthru
        _
    $region32: #{tiny_vgg_forward.8} parent=5 // pred_fallthru
      _
    %p552 = scmp.le.s32.totalorder 2, %s9
    // Predicated region
    $region37: #{tiny_vgg_forward.8} parent=5 // pred_check
      %p553 = pneg %p552
    $region38: #{tiny_vgg_forward.8} parent=5 // pred_check_branch
      %555 = sbr.rel (%p553) target = $region40
    $region39: #{tiny_vgg_forward.8} parent=5 // pred_region
      %s556 = ssub.s32 %s9, 2
      // Predicated region
      $region41: #{tiny_vgg_forward.8} parent=39 // pred_check
        %p557 = pneg %p106
      $region42: #{tiny_vgg_forward.8} parent=39 // pred_check_branch
        %559 = sbr.rel (%p557) target = $region44
      $region43: #{tiny_vgg_forward.8} parent=39 // pred_region
        %p560 = scmp.lt.s32.totalorder %s15, 1
        %s561 = scalar_select %p560, %s15, 1
        %s562 = smul.addr %s561, 2
        %s563 = smul.addr %s562, 4
        %s564 = scalar_lea.vmem %s3, %s563
      $region44: #{tiny_vgg_forward.8} parent=39 // pred_fallthru
        _
    $region40: #{tiny_vgg_forward.8} parent=5 // pred_fallthru
      _
  $region6: #{tiny_vgg_forward.8} parent=0 // loop_footer
    %s13 = sadd.s32 1, %s9
  $region7: #{tiny_vgg_forward.8} parent=0 // loop_footer_branch
    %8 = sbr.rel target = $region3
  $region8: #{tiny_vgg_forward.8} parent=0 // loop_exit
    _

// kernel: tiny_vgg_forward.9
$region0: #{tiny_vgg_forward.9}
  #allocation0 [shape = 'u32[]', space=smem, size = 0x4, offset = 0x4, fixed_abs, tag = 'smem constant byte address 0x4 - core index']
  #allocation1 [shape = 'u32[72,128]{1,0:T(1,128)}', space=vmem, size = 0x9000, scoped, tag = 'internal scratch']
  %s0 = inlined_call_operand.vmem [shape: bf16[2,2048], index: 0, kind: input, shape index: {}]
  %s1 = inlined_call_operand.vmem [shape: bf16[2048,128], index: 1, kind: input, shape index: {}]
  %s2 = inlined_call_operand.vmem [shape: f32[1,128], index: 2, kind: input, shape index: {}]
  %s3 = inlined_call_operand.hbm [shape: f32[2,128], index: 3, kind: output, shape index: {}]
  %s4 = sld [smem:[#allocation0]]
  $region22: #{tiny_vgg_forward.9} parent=0
    _
  %s6 = ssub.s32 1, %s4
  %s7 = scalar_select 0, %s6, %s4
  $region1: #{tiny_vgg_forward.9} parent=0
    #allocation2 [shape = 'u8[1024]{0}', space=vmem, size = 0x400, scoped, tag = 'output window, operand 0, single buffered']
    #allocation3 [shape = 's32[1]{0}', space=sflag, size = 0x4, scoped, tag = 'scoped memory for tiny_vgg_forward.9']
    %8 = vsyncpa [#allocation3], 0
    // Predicated region
    $region2: #{tiny_vgg_forward.9} parent=1 // pred_check
      _
    $region3: #{tiny_vgg_forward.9} parent=1 // pred_check_branch
      %10 = sbr.rel (0) target = $region5
    $region4: #{tiny_vgg_forward.9} parent=1 // pred_region
      _
    $region5: #{tiny_vgg_forward.9} parent=1 // pred_fallthru
      _
    // Predicated region
    $region6: #{tiny_vgg_forward.9} parent=1 // pred_check
      _
    $region7: #{tiny_vgg_forward.9} parent=1 // pred_check_branch
      %12 = sbr.rel (0) target = $region9
    $region8: #{tiny_vgg_forward.9} parent=1 // pred_region
      _
    $region9: #{tiny_vgg_forward.9} parent=1 // pred_fallthru
      _
    // Predicated region
    $region10: #{tiny_vgg_forward.9} parent=1 // pred_check
      _
    $region11: #{tiny_vgg_forward.9} parent=1 // pred_check_branch
      %14 = sbr.rel (0) target = $region13
    $region12: #{tiny_vgg_forward.9} parent=1 // pred_region
      _
    $region13: #{tiny_vgg_forward.9} parent=1 // pred_fallthru
      _
    %v15 = vld [vmem:[%s0] sm:$0xff]
    %v16 = vld [vmem:[%s0 + $0x8] sm:$0xff]
    %v17 = vld [vmem:[%s1] sm:$0xf]
    %v18 = vld [vmem:[%s1 + $0x4] sm:$0xf]
    %v19 = vld [vmem:[%s1 + $0x8] sm:$0xf]
    %v20 = vld [vmem:[%s1 + $0xc] sm:$0xf]
    %v21 = vld [vmem:[%s1 + $0x10] sm:$0xf]
    %v22 = vld [vmem:[%s1 + $0x14] sm:$0xf]
    %v23 = vld [vmem:[%s1 + $0x18] sm:$0xf]
    %v24 = vld [vmem:[%s1 + $0x1c] sm:$0xf]
    %v25 = vld [vmem:[%s1 + $0x20] sm:$0xf]
    %v26 = vld [vmem:[%s1 + $0x24] sm:$0xf]
    %v27 = vld [vmem:[%s1 + $0x28] sm:$0xf]
    %v28 = vld [vmem:[%s1 + $0x2c] sm:$0xf]
    %v29 = vld [vmem:[%s1 + $0x30] sm:$0xf]
    %v30 = vld [vmem:[%s1 + $0x34] sm:$0xf]
    %v31 = vld [vmem:[%s1 + $0x38] sm:$0xf]
    %v32 = vld [vmem:[%s1 + $0x3c] sm:$0xf]
    %v33 = vld [vmem:[%s1 + $0x40] sm:$0xf]
    %v34 = vld [vmem:[%s1 + $0x44] sm:$0xf]
    %v35 = vld [vmem:[%s1 + $0x48] sm:$0xf]
    %v36 = vld [vmem:[%s1 + $0x4c] sm:$0xf]
    %v37 = vld [vmem:[%s1 + $0x50] sm:$0xf]
    %v38 = vld [vmem:[%s1 + $0x54] sm:$0xf]
    %v39 = vld [vmem:[%s1 + $0x58] sm:$0xf]
    %v40 = vld [vmem:[%s1 + $0x5c] sm:$0xf]
    %v41 = vld [vmem:[%s1 + $0x60] sm:$0xf]
    %v42 = vld [vmem:[%s1 + $0x64] sm:$0xf]
    %v43 = vld [vmem:[%s1 + $0x68] sm:$0xf]
    %v44 = vld [vmem:[%s1 + $0x6c] sm:$0xf]
    %v45 = vld [vmem:[%s1 + $0x70] sm:$0xf]
    %v46 = vld [vmem:[%s1 + $0x74] sm:$0xf]
    %v47 = vld [vmem:[%s1 + $0x78] sm:$0xf]
    %v48 = vld [vmem:[%s1 + $0x7c] sm:$0xf]
    %v49 = vld [vmem:[%s1 + $0x80] sm:$0xf]
    %v50 = vld [vmem:[%s1 + $0x84] sm:$0xf]
    %v51 = vld [vmem:[%s1 + $0x88] sm:$0xf]
    %v52 = vld [vmem:[%s1 + $0x8c] sm:$0xf]
    %v53 = vld [vmem:[%s1 + $0x90] sm:$0xf]
    %v54 = vld [vmem:[%s1 + $0x94] sm:$0xf]
    %v55 = vld [vmem:[%s1 + $0x98] sm:$0xf]
    %v56 = vld [vmem:[%s1 + $0x9c] sm:$0xf]
    %v57 = vld [vmem:[%s1 + $0xa0] sm:$0xf]
    %v58 = vld [vmem:[%s1 + $0xa4] sm:$0xf]
    %v59 = vld [vmem:[%s1 + $0xa8] sm:$0xf]
    %v60 = vld [vmem:[%s1 + $0xac] sm:$0xf]
    %v61 = vld [vmem:[%s1 + $0xb0] sm:$0xf]
    %v62 = vld [vmem:[%s1 + $0xb4] sm:$0xf]
    %v63 = vld [vmem:[%s1 + $0xb8] sm:$0xf]
    %v64 = vld [vmem:[%s1 + $0xbc] sm:$0xf]
    %v65 = vld [vmem:[%s1 + $0xc0] sm:$0xf]
    %v66 = vld [vmem:[%s1 + $0xc4] sm:$0xf]
    %v67 = vld [vmem:[%s1 + $0xc8] sm:$0xf]
    %v68 = vld [vmem:[%s1 + $0xcc] sm:$0xf]
    %v69 = vld [vmem:[%s1 + $0xd0] sm:$0xf]
    %v70 = vld [vmem:[%s1 + $0xd4] sm:$0xf]
    %v71 = vld [vmem:[%s1 + $0xd8] sm:$0xf]
    %v72 = vld [vmem:[%s1 + $0xdc] sm:$0xf]
    %v73 = vld [vmem:[%s1 + $0xe0] sm:$0xf]
    %v74 = vld [vmem:[%s1 + $0xe4] sm:$0xf]
    %v75 = vld [vmem:[%s1 + $0xe8] sm:$0xf]
    %v76 = vld [vmem:[%s1 + $0xec] sm:$0xf]
    %v77 = vld [vmem:[%s1 + $0xf0] sm:$0xf]
    %v78 = vld [vmem:[%s1 + $0xf4] sm:$0xf]
    %v79 = vld [vmem:[%s1 + $0xf8] sm:$0xf]
    %v80 = vld [vmem:[%s1 + $0xfc] sm:$0xf]
    %v81 = vld [vmem:[%s1 + $0x100] sm:$0xf]
    %v82 = vld [vmem:[%s1 + $0x104] sm:$0xf]
    %v83 = vld [vmem:[%s1 + $0x108] sm:$0xf]
    %v84 = vld [vmem:[%s1 + $0x10c] sm:$0xf]
    %v85 = vld [vmem:[%s1 + $0x110] sm:$0xf]
    %v86 = vld [vmem:[%s1 + $0x114] sm:$0xf]
    %v87 = vld [vmem:[%s1 + $0x118] sm:$0xf]
    %v88 = vld [vmem:[%s1 + $0x11c] sm:$0xf]
    %v89 = vld [vmem:[%s1 + $0x120] sm:$0xf]
    %v90 = vld [vmem:[%s1 + $0x124] sm:$0xf]
    %v91 = vld [vmem:[%s1 + $0x128] sm:$0xf]
    %v92 = vld [vmem:[%s1 + $0x12c] sm:$0xf]
    %v93 = vld [vmem:[%s1 + $0x130] sm:$0xf]
    %v94 = vld [vmem:[%s1 + $0x134] sm:$0xf]
    %v95 = vld [vmem:[%s1 + $0x138] sm:$0xf]
    %v96 = vld [vmem:[%s1 + $0x13c] sm:$0xf]
    %v97 = vld [vmem:[%s1 + $0x140] sm:$0xf]
    %v98 = vld [vmem:[%s1 + $0x144] sm:$0xf]
    %v99 = vld [vmem:[%s1 + $0x148] sm:$0xf]
    %v100 = vld [vmem:[%s1 + $0x14c] sm:$0xf]
    %v101 = vld [vmem:[%s1 + $0x150] sm:$0xf]
    %v102 = vld [vmem:[%s1 + $0x154] sm:$0xf]
    %v103 = vld [vmem:[%s1 + $0x158] sm:$0xf]
    %v104 = vld [vmem:[%s1 + $0x15c] sm:$0xf]
    %v105 = vld [vmem:[%s1 + $0x160] sm:$0xf]
    %v106 = vld [vmem:[%s1 + $0x164] sm:$0xf]
    %v107 = vld [vmem:[%s1 + $0x168] sm:$0xf]
    %v108 = vld [vmem:[%s1 + $0x16c] sm:$0xf]
    %v109 = vld [vmem:[%s1 + $0x170] sm:$0xf]
    %v110 = vld [vmem:[%s1 + $0x174] sm:$0xf]
    %v111 = vld [vmem:[%s1 + $0x178] sm:$0xf]
    %v112 = vld [vmem:[%s1 + $0x17c] sm:$0xf]
    %v113 = vld [vmem:[%s1 + $0x180] sm:$0xf]
    %v114 = vld [vmem:[%s1 + $0x184] sm:$0xf]
    %v115 = vld [vmem:[%s1 + $0x188] sm:$0xf]
    %v116 = vld [vmem:[%s1 + $0x18c] sm:$0xf]
    %v117 = vld [vmem:[%s1 + $0x190] sm:$0xf]
    %v118 = vld [vmem:[%s1 + $0x194] sm:$0xf]
    %v119 = vld [vmem:[%s1 + $0x198] sm:$0xf]
    %v120 = vld [vmem:[%s1 + $0x19c] sm:$0xf]
    %v121 = vld [vmem:[%s1 + $0x1a0] sm:$0xf]
    %v122 = vld [vmem:[%s1 + $0x1a4] sm:$0xf]
    %v123 = vld [vmem:[%s1 + $0x1a8] sm:$0xf]
    %v124 = vld [vmem:[%s1 + $0x1ac] sm:$0xf]
    %v125 = vld [vmem:[%s1 + $0x1b0] sm:$0xf]
    %v126 = vld [vmem:[%s1 + $0x1b4] sm:$0xf]
    %v127 = vld [vmem:[%s1 + $0x1b8] sm:$0xf]
    %v128 = vld [vmem:[%s1 + $0x1bc] sm:$0xf]
    %v129 = vld [vmem:[%s1 + $0x1c0] sm:$0xf]
    %v130 = vld [vmem:[%s1 + $0x1c4] sm:$0xf]
    %v131 = vld [vmem:[%s1 + $0x1c8] sm:$0xf]
    %v132 = vld [vmem:[%s1 + $0x1cc] sm:$0xf]
    %v133 = vld [vmem:[%s1 + $0x1d0] sm:$0xf]
    %v134 = vld [vmem:[%s1 + $0x1d4] sm:$0xf]
    %v135 = vld [vmem:[%s1 + $0x1d8] sm:$0xf]
    %v136 = vld [vmem:[%s1 + $0x1dc] sm:$0xf]
    %v137 = vld [vmem:[%s1 + $0x1e0] sm:$0xf]
    %v138 = vld [vmem:[%s1 + $0x1e4] sm:$0xf]
    %v139 = vld [vmem:[%s1 + $0x1e8] sm:$0xf]
    %v140 = vld [vmem:[%s1 + $0x1ec] sm:$0xf]
    %v141 = vld [vmem:[%s1 + $0x1f0] sm:$0xf]
    %v142 = vld [vmem:[%s1 + $0x1f4] sm:$0xf]
    %v143 = vld [vmem:[%s1 + $0x1f8] sm:$0xf]
    %v144 = vld [vmem:[%s1 + $0x1fc] sm:$0xf]
    %v145 = vld [vmem:[%s1 + $0x200] sm:$0xf]
    %v146 = vld [vmem:[%s1 + $0x204] sm:$0xf]
    %v147 = vld [vmem:[%s1 + $0x208] sm:$0xf]
    %v148 = vld [vmem:[%s1 + $0x20c] sm:$0xf]
    %v149 = vld [vmem:[%s1 + $0x210] sm:$0xf]
    %v150 = vld [vmem:[%s1 + $0x214] sm:$0xf]
    %v151 = vld [vmem:[%s1 + $0x218] sm:$0xf]
    %v152 = vld [vmem:[%s1 + $0x21c] sm:$0xf]
    %v153 = vld [vmem:[%s1 + $0x220] sm:$0xf]
    %v154 = vld [vmem:[%s1 + $0x224] sm:$0xf]
    %v155 = vld [vmem:[%s1 + $0x228] sm:$0xf]
    %v156 = vld [vmem:[%s1 + $0x22c] sm:$0xf]
    %v157 = vld [vmem:[%s1 + $0x230] sm:$0xf]
    %v158 = vld [vmem:[%s1 + $0x234] sm:$0xf]
    %v159 = vld [vmem:[%s1 + $0x238] sm:$0xf]
    %v160 = vld [vmem:[%s1 + $0x23c] sm:$0xf]
    %v161 = vld [vmem:[%s1 + $0x240] sm:$0xf]
    %v162 = vld [vmem:[%s1 + $0x244] sm:$0xf]
    %v163 = vld [vmem:[%s1 + $0x248] sm:$0xf]
    %v164 = vld [vmem:[%s1 + $0x24c] sm:$0xf]
    %v165 = vld [vmem:[%s1 + $0x250] sm:$0xf]
    %v166 = vld [vmem:[%s1 + $0x254] sm:$0xf]
    %v167 = vld [vmem:[%s1 + $0x258] sm:$0xf]
    %v168 = vld [vmem:[%s1 + $0x25c] sm:$0xf]
    %v169 = vld [vmem:[%s1 + $0x260] sm:$0xf]
    %v170 = vld [vmem:[%s1 + $0x264] sm:$0xf]
    %v171 = vld [vmem:[%s1 + $0x268] sm:$0xf]
    %v172 = vld [vmem:[%s1 + $0x26c] sm:$0xf]
    %v173 = vld [vmem:[%s1 + $0x270] sm:$0xf]
    %v174 = vld [vmem:[%s1 + $0x274] sm:$0xf]
    %v175 = vld [vmem:[%s1 + $0x278] sm:$0xf]
    %v176 = vld [vmem:[%s1 + $0x27c] sm:$0xf]
    %v177 = vld [vmem:[%s1 + $0x280] sm:$0xf]
    %v178 = vld [vmem:[%s1 + $0x284] sm:$0xf]
    %v179 = vld [vmem:[%s1 + $0x288] sm:$0xf]
    %v180 = vld [vmem:[%s1 + $0x28c] sm:$0xf]
    %v181 = vld [vmem:[%s1 + $0x290] sm:$0xf]
    %v182 = vld [vmem:[%s1 + $0x294] sm:$0xf]
    %v183 = vld [vmem:[%s1 + $0x298] sm:$0xf]
    %v184 = vld [vmem:[%s1 + $0x29c] sm:$0xf]
    %v185 = vld [vmem:[%s1 + $0x2a0] sm:$0xf]
    %v186 = vld [vmem:[%s1 + $0x2a4] sm:$0xf]
    %v187 = vld [vmem:[%s1 + $0x2a8] sm:$0xf]
    %v188 = vld [vmem:[%s1 + $0x2ac] sm:$0xf]
    %v189 = vld [vmem:[%s1 + $0x2b0] sm:$0xf]
    %v190 = vld [vmem:[%s1 + $0x2b4] sm:$0xf]
    %v191 = vld [vmem:[%s1 + $0x2b8] sm:$0xf]
    %v192 = vld [vmem:[%s1 + $0x2bc] sm:$0xf]
    %v193 = vld [vmem:[%s1 + $0x2c0] sm:$0xf]
    %v194 = vld [vmem:[%s1 + $0x2c4] sm:$0xf]
    %v195 = vld [vmem:[%s1 + $0x2c8] sm:$0xf]
    %v196 = vld [vmem:[%s1 + $0x2cc] sm:$0xf]
    %v197 = vld [vmem:[%s1 + $0x2d0] sm:$0xf]
    %v198 = vld [vmem:[%s1 + $0x2d4] sm:$0xf]
    %v199 = vld [vmem:[%s1 + $0x2d8] sm:$0xf]
    %v200 = vld [vmem:[%s1 + $0x2dc] sm:$0xf]
    %v201 = vld [vmem:[%s1 + $0x2e0] sm:$0xf]
    %v202 = vld [vmem:[%s1 + $0x2e4] sm:$0xf]
    %v203 = vld [vmem:[%s1 + $0x2e8] sm:$0xf]
    %v204 = vld [vmem:[%s1 + $0x2ec] sm:$0xf]
    %v205 = vld [vmem:[%s1 + $0x2f0] sm:$0xf]
    %v206 = vld [vmem:[%s1 + $0x2f4] sm:$0xf]
    %v207 = vld [vmem:[%s1 + $0x2f8] sm:$0xf]
    %v208 = vld [vmem:[%s1 + $0x2fc] sm:$0xf]
    %v209 = vld [vmem:[%s1 + $0x300] sm:$0xf]
    %v210 = vld [vmem:[%s1 + $0x304] sm:$0xf]
    %v211 = vld [vmem:[%s1 + $0x308] sm:$0xf]
    %v212 = vld [vmem:[%s1 + $0x30c] sm:$0xf]
    %v213 = vld [vmem:[%s1 + $0x310] sm:$0xf]
    %v214 = vld [vmem:[%s1 + $0x314] sm:$0xf]
    %v215 = vld [vmem:[%s1 + $0x318] sm:$0xf]
    %v216 = vld [vmem:[%s1 + $0x31c] sm:$0xf]
    %v217 = vld [vmem:[%s1 + $0x320] sm:$0xf]
    %v218 = vld [vmem:[%s1 + $0x324] sm:$0xf]
    %v219 = vld [vmem:[%s1 + $0x328] sm:$0xf]
    %v220 = vld [vmem:[%s1 + $0x32c] sm:$0xf]
    %v221 = vld [vmem:[%s1 + $0x330] sm:$0xf]
    %v222 = vld [vmem:[%s1 + $0x334] sm:$0xf]
    %v223 = vld [vmem:[%s1 + $0x338] sm:$0xf]
    %v224 = vld [vmem:[%s1 + $0x33c] sm:$0xf]
    %v225 = vld [vmem:[%s1 + $0x340] sm:$0xf]
    %v226 = vld [vmem:[%s1 + $0x344] sm:$0xf]
    %v227 = vld [vmem:[%s1 + $0x348] sm:$0xf]
    %v228 = vld [vmem:[%s1 + $0x34c] sm:$0xf]
    %v229 = vld [vmem:[%s1 + $0x350] sm:$0xf]
    %v230 = vld [vmem:[%s1 + $0x354] sm:$0xf]
    %v231 = vld [vmem:[%s1 + $0x358] sm:$0xf]
    %v232 = vld [vmem:[%s1 + $0x35c] sm:$0xf]
    %v233 = vld [vmem:[%s1 + $0x360] sm:$0xf]
    %v234 = vld [vmem:[%s1 + $0x364] sm:$0xf]
    %v235 = vld [vmem:[%s1 + $0x368] sm:$0xf]
    %v236 = vld [vmem:[%s1 + $0x36c] sm:$0xf]
    %v237 = vld [vmem:[%s1 + $0x370] sm:$0xf]
    %v238 = vld [vmem:[%s1 + $0x374] sm:$0xf]
    %v239 = vld [vmem:[%s1 + $0x378] sm:$0xf]
    %v240 = vld [vmem:[%s1 + $0x37c] sm:$0xf]
    %v241 = vld [vmem:[%s1 + $0x380] sm:$0xf]
    %v242 = vld [vmem:[%s1 + $0x384] sm:$0xf]
    %v243 = vld [vmem:[%s1 + $0x388] sm:$0xf]
    %v244 = vld [vmem:[%s1 + $0x38c] sm:$0xf]
    %v245 = vld [vmem:[%s1 + $0x390] sm:$0xf]
    %v246 = vld [vmem:[%s1 + $0x394] sm:$0xf]
    %v247 = vld [vmem:[%s1 + $0x398] sm:$0xf]
    %v248 = vld [vmem:[%s1 + $0x39c] sm:$0xf]
    %v249 = vld [vmem:[%s1 + $0x3a0] sm:$0xf]
    %v250 = vld [vmem:[%s1 + $0x3a4] sm:$0xf]
    %v251 = vld [vmem:[%s1 + $0x3a8] sm:$0xf]
    %v252 = vld [vmem:[%s1 + $0x3ac] sm:$0xf]
    %v253 = vld [vmem:[%s1 + $0x3b0] sm:$0xf]
    %v254 = vld [vmem:[%s1 + $0x3b4] sm:$0xf]
    %v255 = vld [vmem:[%s1 + $0x3b8] sm:$0xf]
    %v256 = vld [vmem:[%s1 + $0x3bc] sm:$0xf]
    %v257 = vld [vmem:[%s1 + $0x3c0] sm:$0xf]
    %v258 = vld [vmem:[%s1 + $0x3c4] sm:$0xf]
    %v259 = vld [vmem:[%s1 + $0x3c8] sm:$0xf]
    %v260 = vld [vmem:[%s1 + $0x3cc] sm:$0xf]
    %v261 = vld [vmem:[%s1 + $0x3d0] sm:$0xf]
    %v262 = vld [vmem:[%s1 + $0x3d4] sm:$0xf]
    %v263 = vld [vmem:[%s1 + $0x3d8] sm:$0xf]
    %v264 = vld [vmem:[%s1 + $0x3dc] sm:$0xf]
    %v265 = vld [vmem:[%s1 + $0x3e0] sm:$0xf]
    %v266 = vld [vmem:[%s1 + $0x3e4] sm:$0xf]
    %v267 = vld [vmem:[%s1 + $0x3e8] sm:$0xf]
    %v268 = vld [vmem:[%s1 + $0x3ec] sm:$0xf]
    %v269 = vld [vmem:[%s1 + $0x3f0] sm:$0xf]
    %v270 = vld [vmem:[%s1 + $0x3f4] sm:$0xf]
    %v271 = vld [vmem:[%s1 + $0x3f8] sm:$0xf]
    %v272 = vld [vmem:[%s1 + $0x3fc] sm:$0xf]
    %v273 = vld [vmem:[%s2] sm:$0x1]
    %v275 = vperm.slane %v273, 0
    %278 = vst [vmem:[#allocation1] ss:$9 sm:$0xff] %v15
    %v279 = vld [vmem:[#allocation1] sm:$0xff]
    %v280 = vld [vmem:[#allocation1 + $0x9] sm:$0xff]
    %v281 = vld [vmem:[#allocation1 + $0x12] sm:$0xff]
    %v282 = vld [vmem:[#allocation1 + $0x1b] sm:$0xff]
    %v283 = vld [vmem:[#allocation1 + $0x24] sm:$0xff]
    %v284 = vld [vmem:[#allocation1 + $0x2d] sm:$0xff]
    %v285 = vld [vmem:[#allocation1 + $0x36] sm:$0xff]
    %v286 = vld [vmem:[#allocation1 + $0x3f] sm:$0xff]
    %288 = vst [vmem:[#allocation1] ss:$9 sm:$0xff] %v16
    %v289 = vld [vmem:[#allocation1] sm:$0xff]
    %v290 = vld [vmem:[#allocation1 + $0x9] sm:$0xff]
    %v291 = vld [vmem:[#allocation1 + $0x12] sm:$0xff]
    %v292 = vld [vmem:[#allocation1 + $0x1b] sm:$0xff]
    %v293 = vld [vmem:[#allocation1 + $0x24] sm:$0xff]
    %v294 = vld [vmem:[#allocation1 + $0x2d] sm:$0xff]
    %v295 = vld [vmem:[#allocation1 + $0x36] sm:$0xff]
    %v296 = vld [vmem:[#allocation1 + $0x3f] sm:$0xff]
    %v569 = vunpack.c.l.b16 %v17
    %v570 = vunpack.c.l.b16 %v18
    %v571 = vunpack.c.l.b16 %v19
    %v572 = vunpack.c.l.b16 %v20
    %v573 = vunpack.c.l.b16 %v21
    %v574 = vunpack.c.l.b16 %v22
    %v575 = vunpack.c.l.b16 %v23
    %v576 = vunpack.c.l.b16 %v24
    %v577 = vunpack.c.l.b16 %v25
    %v578 = vunpack.c.l.b16 %v26
    %v579 = vunpack.c.l.b16 %v27
    %v580 = vunpack.c.l.b16 %v28
    %v581 = vunpack.c.l.b16 %v29
    %v582 = vunpack.c.l.b16 %v30
    %v583 = vunpack.c.l.b16 %v31
    %v584 = vunpack.c.l.b16 %v32
    %v585 = vunpack.c.l.b16 %v33
    %v586 = vunpack.c.l.b16 %v34
    %v587 = vunpack.c.l.b16 %v35
    %v588 = vunpack.c.l.b16 %v36
    %v589 = vunpack.c.l.b16 %v37
    %v590 = vunpack.c.l.b16 %v38
    %v591 = vunpack.c.l.b16 %v39
    %v592 = vunpack.c.l.b16 %v40
    %v593 = vunpack.c.l.b16 %v41
    %v594 = vunpack.c.l.b16 %v42
    %v595 = vunpack.c.l.b16 %v43
    %v596 = vunpack.c.l.b16 %v44
    %v597 = vunpack.c.l.b16 %v45
    %v598 = vunpack.c.l.b16 %v46
    %v599 = vunpack.c.l.b16 %v47
    %v600 = vunpack.c.l.b16 %v48
    %v601 = vunpack.c.l.b16 %v49
    %v602 = vunpack.c.l.b16 %v50
    %v603 = vunpack.c.l.b16 %v51
    %v604 = vunpack.c.l.b16 %v52
    %v605 = vunpack.c.l.b16 %v53
    %v606 = vunpack.c.l.b16 %v54
    %v607 = vunpack.c.l.b16 %v55
    %v608 = vunpack.c.l.b16 %v56
    %v609 = vunpack.c.l.b16 %v57
    %v610 = vunpack.c.l.b16 %v58
    %v611 = vunpack.c.l.b16 %v59
    %v612 = vunpack.c.l.b16 %v60
    %v613 = vunpack.c.l.b16 %v61
    %v614 = vunpack.c.l.b16 %v62
    %v615 = vunpack.c.l.b16 %v63
    %v616 = vunpack.c.l.b16 %v64
    %v617 = vunpack.c.l.b16 %v65
    %v618 = vunpack.c.l.b16 %v66
    %v619 = vunpack.c.l.b16 %v67
    %v620 = vunpack.c.l.b16 %v68
    %v621 = vunpack.c.l.b16 %v69
    %v622 = vunpack.c.l.b16 %v70
    %v623 = vunpack.c.l.b16 %v71
    %v624 = vunpack.c.l.b16 %v72
    %v625 = vunpack.c.l.b16 %v73
    %v626 = vunpack.c.l.b16 %v74
    %v627 = vunpack.c.l.b16 %v75
    %v628 = vunpack.c.l.b16 %v76
    %v629 = vunpack.c.l.b16 %v77
    %v630 = vunpack.c.l.b16 %v78
    %v631 = vunpack.c.l.b16 %v79
    %v632 = vunpack.c.l.b16 %v80
    %v633 = vunpack.c.l.b16 %v81
    %v634 = vunpack.c.l.b16 %v82
    %v635 = vunpack.c.l.b16 %v83
    %v636 = vunpack.c.l.b16 %v84
    %v637 = vunpack.c.l.b16 %v85
    %v638 = vunpack.c.l.b16 %v86
    %v639 = vunpack.c.l.b16 %v87
    %v640 = vunpack.c.l.b16 %v88
    %v641 = vunpack.c.l.b16 %v89
    %v642 = vunpack.c.l.b16 %v90
    %v643 = vunpack.c.l.b16 %v91
    %v644 = vunpack.c.l.b16 %v92
    %v645 = vunpack.c.l.b16 %v93
    %v646 = vunpack.c.l.b16 %v94
    %v647 = vunpack.c.l.b16 %v95
    %v648 = vunpack.c.l.b16 %v96
    %v649 = vunpack.c.l.b16 %v97
    %v650 = vunpack.c.l.b16 %v98
    %v651 = vunpack.c.l.b16 %v99
    %v652 = vunpack.c.l.b16 %v100
    %v653 = vunpack.c.l.b16 %v101
    %v654 = vunpack.c.l.b16 %v102
    %v655 = vunpack.c.l.b16 %v103
    %v656 = vunpack.c.l.b16 %v104
    %v657 = vunpack.c.l.b16 %v105
    %v658 = vunpack.c.l.b16 %v106
    %v659 = vunpack.c.l.b16 %v107
    %v660 = vunpack.c.l.b16 %v108
    %v661 = vunpack.c.l.b16 %v109
    %v662 = vunpack.c.l.b16 %v110
    %v663 = vunpack.c.l.b16 %v111
    %v664 = vunpack.c.l.b16 %v112
    %v665 = vunpack.c.l.b16 %v113
    %v666 = vunpack.c.l.b16 %v114
    %v667 = vunpack.c.l.b16 %v115
    %v668 = vunpack.c.l.b16 %v116
    %v669 = vunpack.c.l.b16 %v117
    %v670 = vunpack.c.l.b16 %v118
    %v671 = vunpack.c.l.b16 %v119
    %v672 = vunpack.c.l.b16 %v120
    %v673 = vunpack.c.l.b16 %v121
    %v674 = vunpack.c.l.b16 %v122
    %v675 = vunpack.c.l.b16 %v123
    %v676 = vunpack.c.l.b16 %v124
    %v677 = vunpack.c.l.b16 %v125
    %v678 = vunpack.c.l.b16 %v126
    %v679 = vunpack.c.l.b16 %v127
    %v680 = vunpack.c.l.b16 %v128
    %v681 = vunpack.c.l.b16 %v129
    %v682 = vunpack.c.l.b16 %v130
    %v683 = vunpack.c.l.b16 %v131
    %v684 = vunpack.c.l.b16 %v132
    %v685 = vunpack.c.l.b16 %v133
    %v686 = vunpack.c.l.b16 %v134
    %v687 = vunpack.c.l.b16 %v135
    %v688 = vunpack.c.l.b16 %v136
    %v689 = vunpack.c.l.b16 %v137
    %v690 = vunpack.c.l.b16 %v138
    %v691 = vunpack.c.l.b16 %v139
    %v692 = vunpack.c.l.b16 %v140
    %v693 = vunpack.c.l.b16 %v141
    %v694 = vunpack.c.l.b16 %v142
    %v695 = vunpack.c.l.b16 %v143
    %v696 = vunpack.c.l.b16 %v144
    %v697 = vunpack.c.l.b16 %v145
    %v698 = vunpack.c.l.b16 %v146
    %v699 = vunpack.c.l.b16 %v147
    %v700 = vunpack.c.l.b16 %v148
    %v701 = vunpack.c.l.b16 %v149
    %v702 = vunpack.c.l.b16 %v150
    %v703 = vunpack.c.l.b16 %v151
    %v704 = vunpack.c.l.b16 %v152
    %v705 = vunpack.c.l.b16 %v153
    %v706 = vunpack.c.l.b16 %v154
    %v707 = vunpack.c.l.b16 %v155
    %v708 = vunpack.c.l.b16 %v156
    %v709 = vunpack.c.l.b16 %v157
    %v710 = vunpack.c.l.b16 %v158
    %v711 = vunpack.c.l.b16 %v159
    %v712 = vunpack.c.l.b16 %v160
    %v713 = vunpack.c.l.b16 %v161
    %v714 = vunpack.c.l.b16 %v162
    %v715 = vunpack.c.l.b16 %v163
    %v716 = vunpack.c.l.b16 %v164
    %v717 = vunpack.c.l.b16 %v165
    %v718 = vunpack.c.l.b16 %v166
    %v719 = vunpack.c.l.b16 %v167
    %v720 = vunpack.c.l.b16 %v168
    %v721 = vunpack.c.l.b16 %v169
    %v722 = vunpack.c.l.b16 %v170
    %v723 = vunpack.c.l.b16 %v171
    %v724 = vunpack.c.l.b16 %v172
    %v725 = vunpack.c.l.b16 %v173
    %v726 = vunpack.c.l.b16 %v174
    %v727 = vunpack.c.l.b16 %v175
    %v728 = vunpack.c.l.b16 %v176
    %v729 = vunpack.c.l.b16 %v177
    %v730 = vunpack.c.l.b16 %v178
    %v731 = vunpack.c.l.b16 %v179
    %v732 = vunpack.c.l.b16 %v180
    %v733 = vunpack.c.l.b16 %v181
    %v734 = vunpack.c.l.b16 %v182
    %v735 = vunpack.c.l.b16 %v183
    %v736 = vunpack.c.l.b16 %v184
    %v737 = vunpack.c.l.b16 %v185
    %v738 = vunpack.c.l.b16 %v186
    %v739 = vunpack.c.l.b16 %v187
    %v740 = vunpack.c.l.b16 %v188
    %v741 = vunpack.c.l.b16 %v189
    %v742 = vunpack.c.l.b16 %v190
    %v743 = vunpack.c.l.b16 %v191
    %v744 = vunpack.c.l.b16 %v192
    %v745 = vunpack.c.l.b16 %v193
    %v746 = vunpack.c.l.b16 %v194
    %v747 = vunpack.c.l.b16 %v195
    %v748 = vunpack.c.l.b16 %v196
    %v749 = vunpack.c.l.b16 %v197
    %v750 = vunpack.c.l.b16 %v198
    %v751 = vunpack.c.l.b16 %v199
    %v752 = vunpack.c.l.b16 %v200
    %v753 = vunpack.c.l.b16 %v201
    %v754 = vunpack.c.l.b16 %v202
    %v755 = vunpack.c.l.b16 %v203
    %v756 = vunpack.c.l.b16 %v204
    %v757 = vunpack.c.l.b16 %v205
    %v758 = vunpack.c.l.b16 %v206
    %v759 = vunpack.c.l.b16 %v207
    %v760 = vunpack.c.l.b16 %v208
    %v761 = vunpack.c.l.b16 %v209
    %v762 = vunpack.c.l.b16 %v210
    %v763 = vunpack.c.l.b16 %v211
    %v764 = vunpack.c.l.b16 %v212
    %v765 = vunpack.c.l.b16 %v213
    %v766 = vunpack.c.l.b16 %v214
    %v767 = vunpack.c.l.b16 %v215
    %v768 = vunpack.c.l.b16 %v216
    %v769 = vunpack.c.l.b16 %v217
    %v770 = vunpack.c.l.b16 %v218
    %v771 = vunpack.c.l.b16 %v219
    %v772 = vunpack.c.l.b16 %v220
    %v773 = vunpack.c.l.b16 %v221
    %v774 = vunpack.c.l.b16 %v222
    %v775 = vunpack.c.l.b16 %v223
    %v776 = vunpack.c.l.b16 %v224
    %v777 = vunpack.c.l.b16 %v225
    %v778 = vunpack.c.l.b16 %v226
    %v779 = vunpack.c.l.b16 %v227
    %v780 = vunpack.c.l.b16 %v228
    %v781 = vunpack.c.l.b16 %v229
    %v782 = vunpack.c.l.b16 %v230
    %v783 = vunpack.c.l.b16 %v231
    %v784 = vunpack.c.l.b16 %v232
    %v785 = vunpack.c.l.b16 %v233
    %v786 = vunpack.c.l.b16 %v234
    %v787 = vunpack.c.l.b16 %v235
    %v788 = vunpack.c.l.b16 %v236
    %v789 = vunpack.c.l.b16 %v237
    %v790 = vunpack.c.l.b16 %v238
    %v791 = vunpack.c.l.b16 %v239
    %v792 = vunpack.c.l.b16 %v240
    %v793 = vunpack.c.l.b16 %v241
    %v794 = vunpack.c.l.b16 %v242
    %v795 = vunpack.c.l.b16 %v243
    %v796 = vunpack.c.l.b16 %v244
    %v797 = vunpack.c.l.b16 %v245
    %v798 = vunpack.c.l.b16 %v246
    %v799 = vunpack.c.l.b16 %v247
    %v800 = vunpack.c.l.b16 %v248
    %v801 = vunpack.c.l.b16 %v249
    %v802 = vunpack.c.l.b16 %v250
    %v803 = vunpack.c.l.b16 %v251
    %v804 = vunpack.c.l.b16 %v252
    %v805 = vunpack.c.l.b16 %v253
    %v806 = vunpack.c.l.b16 %v254
    %v807 = vunpack.c.l.b16 %v255
    %v808 = vunpack.c.l.b16 %v256
    %v809 = vunpack.c.l.b16 %v257
    %v810 = vunpack.c.l.b16 %v258
    %v811 = vunpack.c.l.b16 %v259
    %v812 = vunpack.c.l.b16 %v260
    %v813 = vunpack.c.l.b16 %v261
    %v814 = vunpack.c.l.b16 %v262
    %v815 = vunpack.c.l.b16 %v263
    %v816 = vunpack.c.l.b16 %v264
    %v817 = vunpack.c.l.b16 %v265
    %v818 = vunpack.c.l.b16 %v266
    %v819 = vunpack.c.l.b16 %v267
    %v820 = vunpack.c.l.b16 %v268
    %v821 = vunpack.c.l.b16 %v269
    %v822 = vunpack.c.l.b16 %v270
    %v823 = vunpack.c.l.b16 %v271
    %v824 = vunpack.c.l.b16 %v272
    %v825 = vpack.c.b16 %v570, %v569
    %v826 = vpack.c.b16 %v572, %v571
    %v827 = vpack.c.b16 %v574, %v573
    %v828 = vpack.c.b16 %v576, %v575
    %v829 = vpack.c.b16 %v578, %v577
    %v830 = vpack.c.b16 %v580, %v579
    %v831 = vpack.c.b16 %v582, %v581
    %v832 = vpack.c.b16 %v584, %v583
    %v833 = vpack.c.b16 %v586, %v585
    %v834 = vpack.c.b16 %v588, %v587
    %v835 = vpack.c.b16 %v590, %v589
    %v836 = vpack.c.b16 %v592, %v591
    %v837 = vpack.c.b16 %v594, %v593
    %v838 = vpack.c.b16 %v596, %v595
    %v839 = vpack.c.b16 %v598, %v597
    %v840 = vpack.c.b16 %v600, %v599
    %v841 = vpack.c.b16 %v602, %v601
    %v842 = vpack.c.b16 %v604, %v603
    %v843 = vpack.c.b16 %v606, %v605
    %v844 = vpack.c.b16 %v608, %v607
    %v845 = vpack.c.b16 %v610, %v609
    %v846 = vpack.c.b16 %v612, %v611
    %v847 = vpack.c.b16 %v614, %v613
    %v848 = vpack.c.b16 %v616, %v615
    %v849 = vpack.c.b16 %v618, %v617
    %v850 = vpack.c.b16 %v620, %v619
    %v851 = vpack.c.b16 %v622, %v621
    %v852 = vpack.c.b16 %v624, %v623
    %v853 = vpack.c.b16 %v626, %v625
    %v854 = vpack.c.b16 %v628, %v627
    %v855 = vpack.c.b16 %v630, %v629
    %v856 = vpack.c.b16 %v632, %v631
    %v857 = vpack.c.b16 %v634, %v633
    %v858 = vpack.c.b16 %v636, %v635
    %v859 = vpack.c.b16 %v638, %v637
    %v860 = vpack.c.b16 %v640, %v639
    %v861 = vpack.c.b16 %v642, %v641
    %v862 = vpack.c.b16 %v644, %v643
    %v863 = vpack.c.b16 %v646, %v645
    %v864 = vpack.c.b16 %v648, %v647
    %v865 = vpack.c.b16 %v650, %v649
    %v866 = vpack.c.b16 %v652, %v651
    %v867 = vpack.c.b16 %v654, %v653
    %v868 = vpack.c.b16 %v656, %v655
    %v869 = vpack.c.b16 %v658, %v657
    %v870 = vpack.c.b16 %v660, %v659
    %v871 = vpack.c.b16 %v662, %v661
    %v872 = vpack.c.b16 %v664, %v663
    %v873 = vpack.c.b16 %v666, %v665
    %v874 = vpack.c.b16 %v668, %v667
    %v875 = vpack.c.b16 %v670, %v669
    %v876 = vpack.c.b16 %v672, %v671
    %v877 = vpack.c.b16 %v674, %v673
    %v878 = vpack.c.b16 %v676, %v675
    %v879 = vpack.c.b16 %v678, %v677
    %v880 = vpack.c.b16 %v680, %v679
    %v881 = vpack.c.b16 %v682, %v681
    %v882 = vpack.c.b16 %v684, %v683
    %v883 = vpack.c.b16 %v686, %v685
    %v884 = vpack.c.b16 %v688, %v687
    %v885 = vpack.c.b16 %v690, %v689
    %v886 = vpack.c.b16 %v692, %v691
    %v887 = vpack.c.b16 %v694, %v693
    %v888 = vpack.c.b16 %v696, %v695
    %v889 = vpack.c.b16 %v698, %v697
    %v890 = vpack.c.b16 %v700, %v699
    %v891 = vpack.c.b16 %v702, %v701
    %v892 = vpack.c.b16 %v704, %v703
    %v893 = vpack.c.b16 %v706, %v705
    %v894 = vpack.c.b16 %v708, %v707
    %v895 = vpack.c.b16 %v710, %v709
    %v896 = vpack.c.b16 %v712, %v711
    %v897 = vpack.c.b16 %v714, %v713
    %v898 = vpack.c.b16 %v716, %v715
    %v899 = vpack.c.b16 %v718, %v717
    %v900 = vpack.c.b16 %v720, %v719
    %v901 = vpack.c.b16 %v722, %v721
    %v902 = vpack.c.b16 %v724, %v723
    %v903 = vpack.c.b16 %v726, %v725
    %v904 = vpack.c.b16 %v728, %v727
    %v905 = vpack.c.b16 %v730, %v729
    %v906 = vpack.c.b16 %v732, %v731
    %v907 = vpack.c.b16 %v734, %v733
    %v908 = vpack.c.b16 %v736, %v735
    %v909 = vpack.c.b16 %v738, %v737
    %v910 = vpack.c.b16 %v740, %v739
    %v911 = vpack.c.b16 %v742, %v741
    %v912 = vpack.c.b16 %v744, %v743
    %v913 = vpack.c.b16 %v746, %v745
    %v914 = vpack.c.b16 %v748, %v747
    %v915 = vpack.c.b16 %v750, %v749
    %v916 = vpack.c.b16 %v752, %v751
    %v917 = vpack.c.b16 %v754, %v753
    %v918 = vpack.c.b16 %v756, %v755
    %v919 = vpack.c.b16 %v758, %v757
    %v920 = vpack.c.b16 %v760, %v759
    %v921 = vpack.c.b16 %v762, %v761
    %v922 = vpack.c.b16 %v764, %v763
    %v923 = vpack.c.b16 %v766, %v765
    %v924 = vpack.c.b16 %v768, %v767
    %v925 = vpack.c.b16 %v770, %v769
    %v926 = vpack.c.b16 %v772, %v771
    %v927 = vpack.c.b16 %v774, %v773
    %v928 = vpack.c.b16 %v776, %v775
    %v929 = vpack.c.b16 %v778, %v777
    %v930 = vpack.c.b16 %v780, %v779
    %v931 = vpack.c.b16 %v782, %v781
    %v932 = vpack.c.b16 %v784, %v783
    %v933 = vpack.c.b16 %v786, %v785
    %v934 = vpack.c.b16 %v788, %v787
    %v935 = vpack.c.b16 %v790, %v789
    %v936 = vpack.c.b16 %v792, %v791
    %v937 = vpack.c.b16 %v794, %v793
    %v938 = vpack.c.b16 %v796, %v795
    %v939 = vpack.c.b16 %v798, %v797
    %v940 = vpack.c.b16 %v800, %v799
    %v941 = vpack.c.b16 %v802, %v801
    %v942 = vpack.c.b16 %v804, %v803
    %v943 = vpack.c.b16 %v806, %v805
    %v944 = vpack.c.b16 %v808, %v807
    %v945 = vpack.c.b16 %v810, %v809
    %v946 = vpack.c.b16 %v812, %v811
    %v947 = vpack.c.b16 %v814, %v813
    %v948 = vpack.c.b16 %v816, %v815
    %v949 = vpack.c.b16 %v818, %v817
    %v950 = vpack.c.b16 %v820, %v819
    %v951 = vpack.c.b16 %v822, %v821
    %v952 = vpack.c.b16 %v824, %v823
    %1081 = vmatpush.bf16.msra.mxu0 %v832
    %1082 = vmatpush.bf16.msra.mxu0 %v831
    %1083 = vmatpush.bf16.msra.mxu0 %v830
    %1084 = vmatpush.bf16.msra.mxu0 %v829
    %1085 = vmatpush.bf16.msra.mxu0 %v828
    %1086 = vmatpush.bf16.msra.mxu0 %v827
    %1087 = vmatpush.bf16.msra.mxu0 %v826
    %1088 = vmatpush.bf16.msra.mxu0 %v825
    %1089 = vmatmul.bf16.gmra.mxu0 %v279
    %v1090 = vpop.f32.mrf.mxu0
    %v1091 = vadd.f32 %v275, %v1090
    %v1092 = vpop.f32.mrf.mxu0
    %1093 = vdwg.mxu0
    %1094 = vmatpush.bf16.msra.mxu0 %v840
    %1095 = vmatpush.bf16.msra.mxu0 %v839
    %1096 = vmatpush.bf16.msra.mxu0 %v838
    %1097 = vmatpush.bf16.msra.mxu0 %v837
    %1098 = vmatpush.bf16.msra.mxu0 %v836
    %1099 = vmatpush.bf16.msra.mxu0 %v835
    %1100 = vmatpush.bf16.msra.mxu0 %v834
    %1101 = vmatpush.bf16.msra.mxu0 %v833
    %1102 = vmatmul.bf16.gmra.mxu0 %v280
    %v1103 = vpop.f32.mrf.mxu0
    %v1104 = vadd.f32 %v1091, %v1103
    %v1105 = vpop.f32.mrf.mxu0
    %1106 = vdwg.mxu0
    %1107 = vmatpush.bf16.msra.mxu0 %v848
    %1108 = vmatpush.bf16.msra.mxu0 %v847
    %1109 = vmatpush.bf16.msra.mxu0 %v846
    %1110 = vmatpush.bf16.msra.mxu0 %v845
    %1111 = vmatpush.bf16.msra.mxu0 %v844
    %1112 = vmatpush.bf16.msra.mxu0 %v843
    %1113 = vmatpush.bf16.msra.mxu0 %v842
    %1114 = vmatpush.bf16.msra.mxu0 %v841
    %1115 = vmatmul.bf16.gmra.mxu0 %v281
    %v1116 = vpop.f32.mrf.mxu0
    %v1117 = vadd.f32 %v1104, %v1116
    %v1118 = vpop.f32.mrf.mxu0
    %1119 = vdwg.mxu0
    %1120 = vmatpush.bf16.msra.mxu0 %v856
    %1121 = vmatpush.bf16.msra.mxu0 %v855
    %1122 = vmatpush.bf16.msra.mxu0 %v854
    %1123 = vmatpush.bf16.msra.mxu0 %v853
    %1124 = vmatpush.bf16.msra.mxu0 %v852
    %1125 = vmatpush.bf16.msra.mxu0 %v851
    %1126 = vmatpush.bf16.msra.mxu0 %v850
    %1127 = vmatpush.bf16.msra.mxu0 %v849
    %1128 = vmatmul.bf16.gmra.mxu0 %v282
    %v1129 = vpop.f32.mrf.mxu0
    %v1130 = vadd.f32 %v1117, %v1129
    %v1131 = vpop.f32.mrf.mxu0
    %1132 = vdwg.mxu0
    %1133 = vmatpush.bf16.msra.mxu0 %v864
    %1134 = vmatpush.bf16.msra.mxu0 %v863
    %1135 = vmatpush.bf16.msra.mxu0 %v862
    %1136 = vmatpush.bf16.msra.mxu0 %v861
    %1137 = vmatpush.bf16.msra.mxu0 %v860
    %1138 = vmatpush.bf16.msra.mxu0 %v859
    %1139 = vmatpush.bf16.msra.mxu0 %v858
    %1140 = vmatpush.bf16.msra.mxu0 %v857
    %1141 = vmatmul.bf16.gmra.mxu0 %v283
    %v1142 = vpop.f32.mrf.mxu0
    %v1143 = vadd.f32 %v1130, %v1142
    %v1144 = vpop.f32.mrf.mxu0
    %1145 = vdwg.mxu0
    %1146 = vmatpush.bf16.msra.mxu0 %v872
    %1147 = vmatpush.bf16.msra.mxu0 %v871
    %1148 = vmatpush.bf16.msra.mxu0 %v870
    %1149 = vmatpush.bf16.msra.mxu0 %v869
    %1150 = vmatpush.bf16.msra.mxu0 %v868
    %1151 = vmatpush.bf16.msra.mxu0 %v867
    %1152 = vmatpush.bf16.msra.mxu0 %v866
    %1153 = vmatpush.bf16.msra.mxu0 %v865
    %1154 = vmatmul.bf16.gmra.mxu0 %v284
    %v1155 = vpop.f32.mrf.mxu0
    %v1156 = vadd.f32 %v1143, %v1155
    %v1157 = vpop.f32.mrf.mxu0
    %1158 = vdwg.mxu0
    %1159 = vmatpush.bf16.msra.mxu0 %v880
    %1160 = vmatpush.bf16.msra.mxu0 %v879
    %1161 = vmatpush.bf16.msra.mxu0 %v878
    %1162 = vmatpush.bf16.msra.mxu0 %v877
    %1163 = vmatpush.bf16.msra.mxu0 %v876
    %1164 = vmatpush.bf16.msra.mxu0 %v875
    %1165 = vmatpush.bf16.msra.mxu0 %v874
    %1166 = vmatpush.bf16.msra.mxu0 %v873
    %1167 = vmatmul.bf16.gmra.mxu0 %v285
    %v1168 = vpop.f32.mrf.mxu0
    %v1169 = vadd.f32 %v1156, %v1168
    %v1170 = vpop.f32.mrf.mxu0
    %1171 = vdwg.mxu0
    %1172 = vmatpush.bf16.msra.mxu0 %v888
    %1173 = vmatpush.bf16.msra.mxu0 %v887
    %1174 = vmatpush.bf16.msra.mxu0 %v886
    %1175 = vmatpush.bf16.msra.mxu0 %v885
    %1176 = vmatpush.bf16.msra.mxu0 %v884
    %1177 = vmatpush.bf16.msra.mxu0 %v883
    %1178 = vmatpush.bf16.msra.mxu0 %v882
    %1179 = vmatpush.bf16.msra.mxu0 %v881
    %1180 = vmatmul.bf16.gmra.mxu0 %v286
    %v1181 = vpop.f32.mrf.mxu0
    %v1182 = vadd.f32 %v1169, %v1181
    %v1183 = vpop.f32.mrf.mxu0
    %1184 = vdwg.mxu0
    %1185 = vmatpush.bf16.msra.mxu0 %v896
    %1186 = vmatpush.bf16.msra.mxu0 %v895
    %1187 = vmatpush.bf16.msra.mxu0 %v894
    %1188 = vmatpush.bf16.msra.mxu0 %v893
    %1189 = vmatpush.bf16.msra.mxu0 %v892
    %1190 = vmatpush.bf16.msra.mxu0 %v891
    %1191 = vmatpush.bf16.msra.mxu0 %v890
    %1192 = vmatpush.bf16.msra.mxu0 %v889
    %1193 = vmatmul.bf16.gmra.mxu0 %v289
    %v1194 = vpop.f32.mrf.mxu0
    %v1195 = vadd.f32 %v1182, %v1194
    %v1196 = vpop.f32.mrf.mxu0
    %1197 = vdwg.mxu0
    %1198 = vmatpush.bf16.msra.mxu0 %v904
    %1199 = vmatpush.bf16.msra.mxu0 %v903
    %1200 = vmatpush.bf16.msra.mxu0 %v902
    %1201 = vmatpush.bf16.msra.mxu0 %v901
    %1202 = vmatpush.bf16.msra.mxu0 %v900
    %1203 = vmatpush.bf16.msra.mxu0 %v899
    %1204 = vmatpush.bf16.msra.mxu0 %v898
    %1205 = vmatpush.bf16.msra.mxu0 %v897
    %1206 = vmatmul.bf16.gmra.mxu0 %v290
    %v1207 = vpop.f32.mrf.mxu0
    %v1208 = vadd.f32 %v1195, %v1207
    %v1209 = vpop.f32.mrf.mxu0
    %1210 = vdwg.mxu0
    %1211 = vmatpush.bf16.msra.mxu0 %v912
    %1212 = vmatpush.bf16.msra.mxu0 %v911
    %1213 = vmatpush.bf16.msra.mxu0 %v910
    %1214 = vmatpush.bf16.msra.mxu0 %v909
    %1215 = vmatpush.bf16.msra.mxu0 %v908
    %1216 = vmatpush.bf16.msra.mxu0 %v907
    %1217 = vmatpush.bf16.msra.mxu0 %v906
    %1218 = vmatpush.bf16.msra.mxu0 %v905
    %1219 = vmatmul.bf16.gmra.mxu0 %v291
    %v1220 = vpop.f32.mrf.mxu0
    %v1221 = vadd.f32 %v1208, %v1220
    %v1222 = vpop.f32.mrf.mxu0
    %1223 = vdwg.mxu0
    %1224 = vmatpush.bf16.msra.mxu0 %v920
    %1225 = vmatpush.bf16.msra.mxu0 %v919
    %1226 = vmatpush.bf16.msra.mxu0 %v918
    %1227 = vmatpush.bf16.msra.mxu0 %v917
    %1228 = vmatpush.bf16.msra.mxu0 %v916
    %1229 = vmatpush.bf16.msra.mxu0 %v915
    %1230 = vmatpush.bf16.msra.mxu0 %v914
    %1231 = vmatpush.bf16.msra.mxu0 %v913
    %1232 = vmatmul.bf16.gmra.mxu0 %v292
    %v1233 = vpop.f32.mrf.mxu0
    %v1234 = vadd.f32 %v1221, %v1233
    %v1235 = vpop.f32.mrf.mxu0
    %1236 = vdwg.mxu0
    %1237 = vmatpush.bf16.msra.mxu0 %v928
    %1238 = vmatpush.bf16.msra.mxu0 %v927
    %1239 = vmatpush.bf16.msra.mxu0 %v926
    %1240 = vmatpush.bf16.msra.mxu0 %v925
    %1241 = vmatpush.bf16.msra.mxu0 %v924
    %1242 = vmatpush.bf16.msra.mxu0 %v923
    %1243 = vmatpush.bf16.msra.mxu0 %v922
    %1244 = vmatpush.bf16.msra.mxu0 %v921
    %1245 = vmatmul.bf16.gmra.mxu0 %v293
    %v1246 = vpop.f32.mrf.mxu0
    %v1247 = vadd.f32 %v1234, %v1246
    %v1248 = vpop.f32.mrf.mxu0
    %1249 = vdwg.mxu0
    %1250 = vmatpush.bf16.msra.mxu0 %v936
    %1251 = vmatpush.bf16.msra.mxu0 %v935
    %1252 = vmatpush.bf16.msra.mxu0 %v934
    %1253 = vmatpush.bf16.msra.mxu0 %v933
    %1254 = vmatpush.bf16.msra.mxu0 %v932
    %1255 = vmatpush.bf16.msra.mxu0 %v931
    %1256 = vmatpush.bf16.msra.mxu0 %v930
    %1257 = vmatpush.bf16.msra.mxu0 %v929
    %1258 = vmatmul.bf16.gmra.mxu0 %v294
    %v1259 = vpop.f32.mrf.mxu0
    %v1260 = vadd.f32 %v1247, %v1259
    %v1261 = vpop.f32.mrf.mxu0
    %1262 = vdwg.mxu0
    %1263 = vmatpush.bf16.msra.mxu0 %v944
    %1264 = vmatpush.bf16.msra.mxu0 %v943
    %1265 = vmatpush.bf16.msra.mxu0 %v942
    %1266 = vmatpush.bf16.msra.mxu0 %v941
    %1267 = vmatpush.bf16.msra.mxu0 %v940
    %1268 = vmatpush.bf16.msra.mxu0 %v939
    %1269 = vmatpush.bf16.msra.mxu0 %v938
    %1270 = vmatpush.bf16.msra.mxu0 %v937
    %1271 = vmatmul.bf16.gmra.mxu0 %v295
    %v1272 = vpop.f32.mrf.mxu0
    %v1273 = vadd.f32 %v1260, %v1272
    %v1274 = vpop.f32.mrf.mxu0
    %1275 = vdwg.mxu0
    %1276 = vmatpush.bf16.msra.mxu0 %v952
    %1277 = vmatpush.bf16.msra.mxu0 %v951
    %1278 = vmatpush.bf16.msra.mxu0 %v950
    %1279 = vmatpush.bf16.msra.mxu0 %v949
    %1280 = vmatpush.bf16.msra.mxu0 %v948
    %1281 = vmatpush.bf16.msra.mxu0 %v947
    %1282 = vmatpush.bf16.msra.mxu0 %v946
    %1283 = vmatpush.bf16.msra.mxu0 %v945
    %1284 = vmatmul.bf16.gmra.mxu0 %v296
    %v1285 = vpop.f32.mrf.mxu0
    %v1286 = vadd.f32 %v1273, %v1285
    %v1287 = vpop.f32.mrf.mxu0
    %1288 = vdwg.mxu0
    %1289 = vst [vmem:[#allocation2] sm:$0x3] %v1286
    // Predicated region
    $region14: #{tiny_vgg_forward.9} parent=1 // pred_check
      _
    $region15: #{tiny_vgg_forward.9} parent=1 // pred_check_branch
      %1291 = sbr.rel (0) target = $region17
    $region16: #{tiny_vgg_forward.9} parent=1 // pred_region
      %1293 = vsyncadd [#allocation3], 0
      %s1295 = sshll.u32 [#allocation2], 4
      %s1296 = int_to_ptr.vmem [resolvable:$true] %s1295
      %s1297 = sshll.u32 %s3, 4
      %s1298 = int_to_ptr.hbm [resolvable:$true] %s1297
      %1300 = dma.vmem_to_hbm [thread:$0]  %s1296, 32, %s1298, [#allocation3]
    $region17: #{tiny_vgg_forward.9} parent=1 // pred_fallthru
      _
    // Predicated region
    $region18: #{tiny_vgg_forward.9} parent=1 // pred_check
      _
    $region19: #{tiny_vgg_forward.9} parent=1 // pred_check_branch
      %1302 = sbr.rel (0) target = $region21
    $region20: #{tiny_vgg_forward.9} parent=1 // pred_region
      %1304 = dma.done [#allocation3], 32
    $region21: #{tiny_vgg_forward.9} parent=1 // pred_fallthru
      _
    %1305 = vsyncpa [#allocation3], 1

</llo_original>
